<compile_context>
chip_gen: v7x
topology: tpu7x:2x2x1
jax: 0.10.0
libtpu: 0.0.40
codegen_flags: <defaults>
</compile_context>

<pallas_src>
import functools

import numpy as np
import jax
import jax.numpy as jnp
from jax.experimental import pallas as pl
from jax.experimental.pallas import tpu as pltpu

GRID_SIZE = 5
SPLINE_ORDER = 3
GRID_RANGE = (-1.0, 1.0)
N_COEF = GRID_SIZE + SPLINE_ORDER  # 8 spline coefficients per (in, out) edge

# Uniform knot vector (efficient-kan default) -- kept as PYTHON FLOATS so the
# kernel only ever sees scalar literals (no captured array constants).
_H_STEP = (GRID_RANGE[1] - GRID_RANGE[0]) / GRID_SIZE
KNOTS = [float(GRID_RANGE[0] + (j - SPLINE_ORDER) * _H_STEP)
         for j in range(GRID_SIZE + 2 * SPLINE_ORDER + 1)]          # 12 floats


# ----------------------------------------------------------------------------
# Pallas kernel factory: full forward (2-layer LSTM over time + 2 KANLinear)
# ----------------------------------------------------------------------------
def make_lstm_kan_kernel(T, Bp, H, I):
    f32 = jnp.float32
    bf16 = jnp.bfloat16

    def kernel(xf_ref,            # (T*Bp, I)  time-major, batch-padded, flat
               wih0_ref,          # (I, 4H)    f32 (VPU path)
               b0_ref,            # (1, 4H)    f32
               whh0_ref,          # (H, 4H)    bf16
               wih1_ref,          # (H, 4H)    bf16
               whh1_ref,          # (H, 4H)    bf16
               b1_ref,            # (1, 4H)    f32
               kbw1_ref,          # (H, K1)
               ksw1_ref,          # (N_COEF*H, K1)
               kbw2_ref,          # (K1, Opad)
               ksw2_ref,          # (N_COEF*K1, Opad)
               out_ref):          # (Bp, Opad)
        whh0 = whh0_ref[...]
        wih1 = wih1_ref[...]
        whh1 = whh1_ref[...]
        # bias broadcast hoisted out of the recurrence (traced once)
        b1 = jnp.broadcast_to(b1_ref[...], (Bp, 4 * H))

        # Hoisted layer-0 input projection for ALL timesteps, bias folded in.
        # For I == 1 this is a pure VPU broadcast multiply-add (no MXU pass).
        if I == 1:
            xw0 = xf_ref[...] * wih0_ref[...] + b0_ref[...]        # (T*Bp, 4H)
        else:
            xw0 = (jnp.dot(xf_ref[...], wih0_ref[...],
                           preferred_element_type=f32) + b0_ref[...])

        def gate_math(gates, c):
            # Permuted gate layout [i | f | o | g]: one sigmoid + one tanh.
            act = jax.nn.sigmoid(gates[:, 0:3 * H])
            g = jnp.tanh(gates[:, 3 * H:4 * H])
            i = act[:, 0:H]
            f = act[:, H:2 * H]
            o = act[:, 2 * H:3 * H]
            c_new = f * c + i * g
            return o * jnp.tanh(c_new), c_new

        zeros = jnp.zeros((Bp, H), f32)
        h0, c0, h1, c1 = zeros, zeros, zeros, zeros
        # Fully unrolled time loop (T static, small): bf16 MXU operands,
        # f32 accumulation, f32 state.
        for t in range(T):
            gates0 = (xw0[t * Bp:(t + 1) * Bp, :]
                      + jnp.dot(h0.astype(bf16), whh0,
                                preferred_element_type=f32))
            h0, c0 = gate_math(gates0, c0)
            gates1 = (jnp.dot(h0.astype(bf16), wih1,
                              preferred_element_type=f32)
                      + jnp.dot(h1.astype(bf16), whh1,
                                preferred_element_type=f32)
                      + b1)
            h1, c1 = gate_math(gates1, c1)
        # h1 == out[:, -1, :] of the PyTorch LSTM (last step, top layer)

        def spline_bases(x):
            # Cubic B-spline basis by Cox-de Boor on a UNIFORM knot grid.
            # All knots / denominators are Python-float literals, so nothing
            # here becomes a captured array constant.
            bases = [
                jnp.logical_and(x >= KNOTS[j], x < KNOTS[j + 1]).astype(f32)
                for j in range(len(KNOTS) - 1)
            ]
            for k in range(1, SPLINE_ORDER + 1):
                new = []
                for j in range(len(KNOTS) - k - 1):
                    inv_dl = 1.0 / (KNOTS[j + k] - KNOTS[j])
                    inv_dr = 1.0 / (KNOTS[j + k + 1] - KNOTS[j + 1])
                    left = (x - KNOTS[j]) * inv_dl * bases[j]
                    right = (KNOTS[j + k + 1] - x) * inv_dr * bases[j + 1]
                    new.append(left + right)
                bases = new
            return bases  # list of N_COEF arrays, each (B, in)

        def kan_linear(x, base_w, spline_w_flat):
            # base branch: SiLU(x) @ W_base
            base_out = jnp.dot(jax.nn.silu(x), base_w,
                               preferred_element_type=f32)
            # spline branch: 8 per-coefficient dots collapsed into ONE wide
            # matmul (B, N_COEF*in) @ (N_COEF*in, out); column order k*in + i
            # matches the pre-flattened spline-weight row order.
            spline_in = jnp.concatenate(spline_bases(x), axis=-1)
            spline_out = jnp.dot(spline_in, spline_w_flat,
                                 preferred_element_type=f32)
            return base_out + spline_out

        hidden = kan_linear(h1, kbw1_ref[...], ksw1_ref[...])
        out = kan_linear(hidden, kbw2_ref[...], ksw2_ref[...])
        out_ref[...] = out.astype(out_ref.dtype)

    return kernel


# ----------------------------------------------------------------------------
# Wrapper
# ----------------------------------------------------------------------------
def _round_up(n, m):
    return -(-n // m) * m


def prepare_params(p):
    """Once-per-model weight preprocessing (do NOT run this per call)."""
    H = p["whh0"].shape[0]
    K1 = p["kbw1"].shape[1]
    O = p["kbw2"].shape[1]
    Op = _round_up(max(O, 128), 128)

    # Gate-column permutation: PyTorch [i|f|g|o] -> [i|f|o|g] so the kernel
    # runs ONE sigmoid over the first 3H columns and ONE tanh over the last H.
    perm = np.concatenate([np.arange(0, 2 * H),
                           np.arange(3 * H, 4 * H),
                           np.arange(2 * H, 3 * H)])

    f32, bf16 = jnp.float32, jnp.bfloat16
    return dict(
        wih0=p["wih0"][:, perm].astype(f32),       # VPU path stays f32
        b0=p["b0"][:, perm].astype(f32),
        whh0=p["whh0"][:, perm].astype(bf16),      # recurrent MXU operands bf16
        wih1=p["wih1"][:, perm].astype(bf16),
        whh1=p["whh1"][:, perm].astype(bf16),
        b1=p["b1"][:, perm].astype(f32),
        kbw1=p["kbw1"].astype(f32),
        ksw1=p["ksw1"].reshape(N_COEF * H, K1).astype(f32),
        kbw2=jnp.pad(p["kbw2"], ((0, 0), (0, Op - O))).astype(f32),
        ksw2=jnp.pad(p["ksw2"], ((0, 0), (0, 0), (0, Op - O)))
              .reshape(N_COEF * K1, Op).astype(f32),
    )


@functools.partial(jax.jit, static_argnames=("o_size",))
def lstm_kan_forward(x, w, o_size):
    """x: (B, T, I) float32 (PyTorch batch_first). w: prepare_params output."""
    B, T, I = x.shape
    H = w["whh0"].shape[0]
    Op = w["kbw2"].shape[1]

    Bp = _round_up(max(B, 8), 8)       # pad batch to the sublane tile
    # Input: time-major, batch-padded, flattened over (T, Bp) so the layer-0
    # input projection is a single op inside the kernel.
    x_tm = jnp.transpose(x, (1, 0, 2))                         # (T, B, I)
    x_tm = jnp.pad(x_tm, ((0, 0), (0, Bp - B), (0, 0)))        # (T, Bp, I)
    x_flat = x_tm.reshape(T * Bp, I)

    args = (x_flat, w["wih0"], w["b0"], w["whh0"], w["wih1"], w["whh1"],
            w["b1"], w["kbw1"], w["ksw1"], w["kbw2"], w["ksw2"])

    vmem = pl.BlockSpec(memory_space=pltpu.MemorySpace.VMEM)
    out = pl.pallas_call(
        make_lstm_kan_kernel(T, Bp, H, I),
        out_shape=jax.ShapeDtypeStruct((Bp, Op), jnp.float32),
        in_specs=[vmem] * len(args),
        out_specs=vmem,
    )(*args)
    # TODO(synk): once the real batch is >= a couple of 128-row tiles, add a
    # batch grid axis with dimension_semantics=("parallel",) (v7x 2nd TC) and,
    # for large H on v7x (64 MiB VMEM), tile the 4H output dim via BlockSpec.
    return out[:B, :o_size]


# ----------------------------------------------------------------------------
# Deterministic parameter construction (synthetic, matches module shapes)
# ----------------------------------------------------------------------------
def make_params(key, input_size, hidden_size, kan_hidden, output_size):
    ks = jax.random.split(key, 12)
    H, I, K1, O = hidden_size, input_size, kan_hidden, output_size

    def uni(k, shape, scale):
        return jax.random.uniform(k, shape, jnp.float32, -scale, scale)

    s = 1.0 / np.sqrt(H)
    # LSTM weights already transposed to (in, 4H); biases combined (ih + hh).
    wih0 = uni(ks[0], (I, 4 * H), s)
    whh0 = uni(ks[1], (H, 4 * H), s)
    b0 = uni(ks[2], (1, 4 * H), s) + uni(ks[3], (1, 4 * H), s)
    wih1 = uni(ks[4], (H, 4 * H), s)
    whh1 = uni(ks[5], (H, 4 * H), s)
    b1 = uni(ks[6], (1, 4 * H), s) + uni(ks[7], (1, 4 * H), s)

    # KAN layer 1: H -> K1 ; KAN layer 2: K1 -> O
    kbw1 = uni(ks[8], (H, K1), 1.0 / np.sqrt(H))
    ksw1 = uni(ks[9], (N_COEF, H, K1), 0.1 / np.sqrt(H))
    kbw2 = uni(ks[10], (K1, O), 1.0 / np.sqrt(K1))
    ksw2 = uni(ks[11], (N_COEF, K1, O), 0.1 / np.sqrt(K1))

    return dict(wih0=wih0, whh0=whh0, b0=b0, wih1=wih1, whh1=whh1, b1=b1,
                kbw1=kbw1, ksw1=ksw1, kbw2=kbw2, ksw2=ksw2)


# ----------------------------------------------------------------------------
# Pure-JAX reference (f32 end-to-end, original gate layout) for sanity check
# ----------------------------------------------------------------------------
def reference_forward(x, p):
    B, T, I = x.shape
    H = p["whh0"].shape[0]
    grid = jnp.asarray(np.asarray(KNOTS, np.float32).reshape(-1, 1, 1))

    def cell(xt, h, c, wih, whh, b):
        g = xt @ wih + h @ whh + b
        i = jax.nn.sigmoid(g[:, :H])
        f = jax.nn.sigmoid(g[:, H:2 * H])
        gg = jnp.tanh(g[:, 2 * H:3 * H])
        o = jax.nn.sigmoid(g[:, 3 * H:])
        c = f * c + i * gg
        return o * jnp.tanh(c), c

    h0 = c0 = h1 = c1 = jnp.zeros((B, H), jnp.float32)
    for t in range(T):
        h0, c0 = cell(x[:, t, :], h0, c0, p["wih0"], p["whh0"], p["b0"])
        h1, c1 = cell(h0, h1, c1, p["wih1"], p["whh1"], p["b1"])

    def kan(xv, bw, sw):
        base = jax.nn.silu(xv) @ bw
        xb = xv[None]
        bases = ((xb >= grid[:-1]) & (xb < grid[1:])).astype(jnp.float32)
        for k in range(1, SPLINE_ORDER + 1):
            bases = ((xb - grid[:-(k + 1)]) / (grid[k:-1] - grid[:-(k + 1)]) * bases[:-1]
                     + (grid[k + 1:] - xb) / (grid[k + 1:] - grid[1:-k]) * bases[1:])
        return base + jnp.einsum('kbi,kio->bo', bases, sw)

    return kan(kan(h1, p["kbw1"], p["ksw1"]), p["kbw2"], p["ksw2"])


if __name__ == "__main__":
    # Small shapes consistent with the module's forward:
    # x: (batch, seq, input_size); hidden_size shrunk 50 -> 32 for TPU tiling.
    B, T, I = 2, 8, 1
    H, K1, O = 32, 64, 1

    key = jax.random.PRNGKey(0)
    kx, kp = jax.random.split(key)
    x = jax.random.normal(kx, (B, T, I), jnp.float32)
    params = make_params(kp, I, H, K1, O)

    prepped = prepare_params(params)            # once-per-model weight prep
    out = jax.block_until_ready(lstm_kan_forward(x, prepped, o_size=O))
    ref = jax.block_until_ready(reference_forward(x, params))

    assert out.shape == (B, O)
    # Tolerance loosened vs. the f32 kernel: the recurrent MXU operands are
    # bf16 (f32 accumulation / state), which introduces ~1e-3-level rounding
    # over the 8-step recurrence; the reference stays f32 end-to-end.
    np.testing.assert_allclose(np.asarray(out), np.asarray(ref),
                               rtol=2e-2, atol=2e-2)
    print("KERNEL_OK")
</pallas_src>

<mosaic_0001>
module attributes {stable_mosaic.version = 11 : i64} {
  func.func @kernel(%arg0: memref<64x1xf32, #tpu.memory_space<vmem>>, %arg1: memref<1x128xf32, #tpu.memory_space<vmem>>, %arg2: memref<1x128xf32, #tpu.memory_space<vmem>>, %arg3: memref<32x128xbf16, #tpu.memory_space<vmem>>, %arg4: memref<32x128xbf16, #tpu.memory_space<vmem>>, %arg5: memref<32x128xbf16, #tpu.memory_space<vmem>>, %arg6: memref<1x128xf32, #tpu.memory_space<vmem>>, %arg7: memref<32x64xf32, #tpu.memory_space<vmem>>, %arg8: memref<256x64xf32, #tpu.memory_space<vmem>>, %arg9: memref<64x128xf32, #tpu.memory_space<vmem>>, %arg10: memref<512x128xf32, #tpu.memory_space<vmem>>, %arg11: memref<8x128xf32, #tpu.memory_space<vmem>>) attributes {dimension_semantics = [], scalar_prefetch = 0 : i64, scratch_operands = 0 : i64, tpu.core_type = #tpu.core_type<tc>} {
    %c0 = arith.constant 0 : index
    %c0_0 = arith.constant 0 : index
    %0 = vector.load %arg3[%c0, %c0_0] : memref<32x128xbf16, #tpu.memory_space<vmem>>, vector<32x128xbf16>
    %c0_1 = arith.constant 0 : index
    %c0_2 = arith.constant 0 : index
    %1 = vector.load %arg4[%c0_1, %c0_2] : memref<32x128xbf16, #tpu.memory_space<vmem>>, vector<32x128xbf16>
    %c0_3 = arith.constant 0 : index
    %c0_4 = arith.constant 0 : index
    %2 = vector.load %arg5[%c0_3, %c0_4] : memref<32x128xbf16, #tpu.memory_space<vmem>>, vector<32x128xbf16>
    %c0_5 = arith.constant 0 : index
    %c0_6 = arith.constant 0 : index
    %3 = vector.load %arg6[%c0_5, %c0_6] : memref<1x128xf32, #tpu.memory_space<vmem>>, vector<1x128xf32>
    %4 = vector.shape_cast %3 : vector<1x128xf32> to vector<1x128xf32>
    %5 = vector.broadcast %4 : vector<1x128xf32> to vector<8x128xf32>
    %c0_7 = arith.constant 0 : index
    %c0_8 = arith.constant 0 : index
    %6 = vector.load %arg0[%c0_7, %c0_8] : memref<64x1xf32, #tpu.memory_space<vmem>>, vector<64x1xf32>
    %c0_9 = arith.constant 0 : index
    %c0_10 = arith.constant 0 : index
    %7 = vector.load %arg1[%c0_9, %c0_10] : memref<1x128xf32, #tpu.memory_space<vmem>>, vector<1x128xf32>
    %8 = vector.broadcast %6 : vector<64x1xf32> to vector<64x128xf32>
    %9 = vector.broadcast %7 : vector<1x128xf32> to vector<64x128xf32>
    %10 = arith.mulf %8, %9 : vector<64x128xf32>
    %c0_11 = arith.constant 0 : index
    %c0_12 = arith.constant 0 : index
    %11 = vector.load %arg2[%c0_11, %c0_12] : memref<1x128xf32, #tpu.memory_space<vmem>>, vector<1x128xf32>
    %12 = vector.broadcast %11 : vector<1x128xf32> to vector<64x128xf32>
    %13 = arith.addf %10, %12 : vector<64x128xf32>
    %cst = arith.constant 0.000000e+00 : f32
    %14 = vector.broadcast %cst : f32 to vector<8x32xf32>
    %15 = vector.extract_strided_slice %13 {offsets = [0, 0], sizes = [8, 128], strides = [1, 1]} : vector<64x128xf32> to vector<8x128xf32>
    %16 = arith.truncf %14 : vector<8x32xf32> to vector<8x32xbf16>
    %cst_13 = arith.constant dense<0.000000e+00> : vector<8x128xf32>
    %17 = tpu.matmul %16, %0, %cst_13 {dimension_numbers = #tpu.dot_dimension_numbers<[1], [0], [0], [1], [0, 0, 1, 1], [], []>} : vector<8x32xbf16>, vector<32x128xbf16>, vector<8x128xf32> -> vector<8x128xf32>
    %18 = arith.addf %15, %17 : vector<8x128xf32>
    %19 = vector.extract_strided_slice %18 {offsets = [0, 0], sizes = [8, 96], strides = [1, 1]} : vector<8x128xf32> to vector<8x96xf32>
    %20 = arith.negf %19 : vector<8x96xf32>
    %21 = math.exp %20 : vector<8x96xf32>
    %cst_14 = arith.constant 1.000000e+00 : f32
    %22 = vector.broadcast %cst_14 : f32 to vector<8x96xf32>
    %23 = arith.addf %22, %21 : vector<8x96xf32>
    %24 = arith.divf %22, %23 : vector<8x96xf32>
    %25 = vector.extract_strided_slice %18 {offsets = [0, 96], sizes = [8, 32], strides = [1, 1]} : vector<8x128xf32> to vector<8x32xf32>
    %26 = math.tanh %25 : vector<8x32xf32>
    %27 = vector.extract_strided_slice %24 {offsets = [0, 0], sizes = [8, 32], strides = [1, 1]} : vector<8x96xf32> to vector<8x32xf32>
    %28 = vector.extract_strided_slice %24 {offsets = [0, 32], sizes = [8, 32], strides = [1, 1]} : vector<8x96xf32> to vector<8x32xf32>
    %29 = vector.extract_strided_slice %24 {offsets = [0, 64], sizes = [8, 32], strides = [1, 1]} : vector<8x96xf32> to vector<8x32xf32>
    %30 = arith.mulf %28, %14 : vector<8x32xf32>
    %31 = arith.mulf %27, %26 : vector<8x32xf32>
    %32 = arith.addf %30, %31 : vector<8x32xf32>
    %33 = math.tanh %32 : vector<8x32xf32>
    %34 = arith.mulf %29, %33 : vector<8x32xf32>
    %35 = arith.truncf %34 : vector<8x32xf32> to vector<8x32xbf16>
    %cst_15 = arith.constant dense<0.000000e+00> : vector<8x128xf32>
    %36 = tpu.matmul %35, %1, %cst_15 {dimension_numbers = #tpu.dot_dimension_numbers<[1], [0], [0], [1], [0, 0, 1, 1], [], []>} : vector<8x32xbf16>, vector<32x128xbf16>, vector<8x128xf32> -> vector<8x128xf32>
    %37 = arith.truncf %14 : vector<8x32xf32> to vector<8x32xbf16>
    %cst_16 = arith.constant dense<0.000000e+00> : vector<8x128xf32>
    %38 = tpu.matmul %37, %2, %cst_16 {dimension_numbers = #tpu.dot_dimension_numbers<[1], [0], [0], [1], [0, 0, 1, 1], [], []>} : vector<8x32xbf16>, vector<32x128xbf16>, vector<8x128xf32> -> vector<8x128xf32>
    %39 = arith.addf %36, %38 : vector<8x128xf32>
    %40 = arith.addf %39, %5 : vector<8x128xf32>
    %41 = vector.extract_strided_slice %40 {offsets = [0, 0], sizes = [8, 96], strides = [1, 1]} : vector<8x128xf32> to vector<8x96xf32>
    %42 = arith.negf %41 : vector<8x96xf32>
    %43 = math.exp %42 : vector<8x96xf32>
    %cst_17 = arith.constant 1.000000e+00 : f32
    %44 = vector.broadcast %cst_17 : f32 to vector<8x96xf32>
    %45 = arith.addf %44, %43 : vector<8x96xf32>
    %46 = arith.divf %44, %45 : vector<8x96xf32>
    %47 = vector.extract_strided_slice %40 {offsets = [0, 96], sizes = [8, 32], strides = [1, 1]} : vector<8x128xf32> to vector<8x32xf32>
    %48 = math.tanh %47 : vector<8x32xf32>
    %49 = vector.extract_strided_slice %46 {offsets = [0, 0], sizes = [8, 32], strides = [1, 1]} : vector<8x96xf32> to vector<8x32xf32>
    %50 = vector.extract_strided_slice %46 {offsets = [0, 32], sizes = [8, 32], strides = [1, 1]} : vector<8x96xf32> to vector<8x32xf32>
    %51 = vector.extract_strided_slice %46 {offsets = [0, 64], sizes = [8, 32], strides = [1, 1]} : vector<8x96xf32> to vector<8x32xf32>
    %52 = arith.mulf %50, %14 : vector<8x32xf32>
    %53 = arith.mulf %49, %48 : vector<8x32xf32>
    %54 = arith.addf %52, %53 : vector<8x32xf32>
    %55 = math.tanh %54 : vector<8x32xf32>
    %56 = arith.mulf %51, %55 : vector<8x32xf32>
    %57 = vector.extract_strided_slice %13 {offsets = [8, 0], sizes = [8, 128], strides = [1, 1]} : vector<64x128xf32> to vector<8x128xf32>
    %58 = arith.truncf %34 : vector<8x32xf32> to vector<8x32xbf16>
    %cst_18 = arith.constant dense<0.000000e+00> : vector<8x128xf32>
    %59 = tpu.matmul %58, %0, %cst_18 {dimension_numbers = #tpu.dot_dimension_numbers<[1], [0], [0], [1], [0, 0, 1, 1], [], []>} : vector<8x32xbf16>, vector<32x128xbf16>, vector<8x128xf32> -> vector<8x128xf32>
    %60 = arith.addf %57, %59 : vector<8x128xf32>
    %61 = vector.extract_strided_slice %60 {offsets = [0, 0], sizes = [8, 96], strides = [1, 1]} : vector<8x128xf32> to vector<8x96xf32>
    %62 = arith.negf %61 : vector<8x96xf32>
    %63 = math.exp %62 : vector<8x96xf32>
    %cst_19 = arith.constant 1.000000e+00 : f32
    %64 = vector.broadcast %cst_19 : f32 to vector<8x96xf32>
    %65 = arith.addf %64, %63 : vector<8x96xf32>
    %66 = arith.divf %64, %65 : vector<8x96xf32>
    %67 = vector.extract_strided_slice %60 {offsets = [0, 96], sizes = [8, 32], strides = [1, 1]} : vector<8x128xf32> to vector<8x32xf32>
    %68 = math.tanh %67 : vector<8x32xf32>
    %69 = vector.extract_strided_slice %66 {offsets = [0, 0], sizes = [8, 32], strides = [1, 1]} : vector<8x96xf32> to vector<8x32xf32>
    %70 = vector.extract_strided_slice %66 {offsets = [0, 32], sizes = [8, 32], strides = [1, 1]} : vector<8x96xf32> to vector<8x32xf32>
    %71 = vector.extract_strided_slice %66 {offsets = [0, 64], sizes = [8, 32], strides = [1, 1]} : vector<8x96xf32> to vector<8x32xf32>
    %72 = arith.mulf %70, %32 : vector<8x32xf32>
    %73 = arith.mulf %69, %68 : vector<8x32xf32>
    %74 = arith.addf %72, %73 : vector<8x32xf32>
    %75 = math.tanh %74 : vector<8x32xf32>
    %76 = arith.mulf %71, %75 : vector<8x32xf32>
    %77 = arith.truncf %76 : vector<8x32xf32> to vector<8x32xbf16>
    %cst_20 = arith.constant dense<0.000000e+00> : vector<8x128xf32>
    %78 = tpu.matmul %77, %1, %cst_20 {dimension_numbers = #tpu.dot_dimension_numbers<[1], [0], [0], [1], [0, 0, 1, 1], [], []>} : vector<8x32xbf16>, vector<32x128xbf16>, vector<8x128xf32> -> vector<8x128xf32>
    %79 = arith.truncf %56 : vector<8x32xf32> to vector<8x32xbf16>
    %cst_21 = arith.constant dense<0.000000e+00> : vector<8x128xf32>
    %80 = tpu.matmul %79, %2, %cst_21 {dimension_numbers = #tpu.dot_dimension_numbers<[1], [0], [0], [1], [0, 0, 1, 1], [], []>} : vector<8x32xbf16>, vector<32x128xbf16>, vector<8x128xf32> -> vector<8x128xf32>
    %81 = arith.addf %78, %80 : vector<8x128xf32>
    %82 = arith.addf %81, %5 : vector<8x128xf32>
    %83 = vector.extract_strided_slice %82 {offsets = [0, 0], sizes = [8, 96], strides = [1, 1]} : vector<8x128xf32> to vector<8x96xf32>
    %84 = arith.negf %83 : vector<8x96xf32>
    %85 = math.exp %84 : vector<8x96xf32>
    %cst_22 = arith.constant 1.000000e+00 : f32
    %86 = vector.broadcast %cst_22 : f32 to vector<8x96xf32>
    %87 = arith.addf %86, %85 : vector<8x96xf32>
    %88 = arith.divf %86, %87 : vector<8x96xf32>
    %89 = vector.extract_strided_slice %82 {offsets = [0, 96], sizes = [8, 32], strides = [1, 1]} : vector<8x128xf32> to vector<8x32xf32>
    %90 = math.tanh %89 : vector<8x32xf32>
    %91 = vector.extract_strided_slice %88 {offsets = [0, 0], sizes = [8, 32], strides = [1, 1]} : vector<8x96xf32> to vector<8x32xf32>
    %92 = vector.extract_strided_slice %88 {offsets = [0, 32], sizes = [8, 32], strides = [1, 1]} : vector<8x96xf32> to vector<8x32xf32>
    %93 = vector.extract_strided_slice %88 {offsets = [0, 64], sizes = [8, 32], strides = [1, 1]} : vector<8x96xf32> to vector<8x32xf32>
    %94 = arith.mulf %92, %54 : vector<8x32xf32>
    %95 = arith.mulf %91, %90 : vector<8x32xf32>
    %96 = arith.addf %94, %95 : vector<8x32xf32>
    %97 = math.tanh %96 : vector<8x32xf32>
    %98 = arith.mulf %93, %97 : vector<8x32xf32>
    %99 = vector.extract_strided_slice %13 {offsets = [16, 0], sizes = [8, 128], strides = [1, 1]} : vector<64x128xf32> to vector<8x128xf32>
    %100 = arith.truncf %76 : vector<8x32xf32> to vector<8x32xbf16>
    %cst_23 = arith.constant dense<0.000000e+00> : vector<8x128xf32>
    %101 = tpu.matmul %100, %0, %cst_23 {dimension_numbers = #tpu.dot_dimension_numbers<[1], [0], [0], [1], [0, 0, 1, 1], [], []>} : vector<8x32xbf16>, vector<32x128xbf16>, vector<8x128xf32> -> vector<8x128xf32>
    %102 = arith.addf %99, %101 : vector<8x128xf32>
    %103 = vector.extract_strided_slice %102 {offsets = [0, 0], sizes = [8, 96], strides = [1, 1]} : vector<8x128xf32> to vector<8x96xf32>
    %104 = arith.negf %103 : vector<8x96xf32>
    %105 = math.exp %104 : vector<8x96xf32>
    %cst_24 = arith.constant 1.000000e+00 : f32
    %106 = vector.broadcast %cst_24 : f32 to vector<8x96xf32>
    %107 = arith.addf %106, %105 : vector<8x96xf32>
    %108 = arith.divf %106, %107 : vector<8x96xf32>
    %109 = vector.extract_strided_slice %102 {offsets = [0, 96], sizes = [8, 32], strides = [1, 1]} : vector<8x128xf32> to vector<8x32xf32>
    %110 = math.tanh %109 : vector<8x32xf32>
    %111 = vector.extract_strided_slice %108 {offsets = [0, 0], sizes = [8, 32], strides = [1, 1]} : vector<8x96xf32> to vector<8x32xf32>
    %112 = vector.extract_strided_slice %108 {offsets = [0, 32], sizes = [8, 32], strides = [1, 1]} : vector<8x96xf32> to vector<8x32xf32>
    %113 = vector.extract_strided_slice %108 {offsets = [0, 64], sizes = [8, 32], strides = [1, 1]} : vector<8x96xf32> to vector<8x32xf32>
    %114 = arith.mulf %112, %74 : vector<8x32xf32>
    %115 = arith.mulf %111, %110 : vector<8x32xf32>
    %116 = arith.addf %114, %115 : vector<8x32xf32>
    %117 = math.tanh %116 : vector<8x32xf32>
    %118 = arith.mulf %113, %117 : vector<8x32xf32>
    %119 = arith.truncf %118 : vector<8x32xf32> to vector<8x32xbf16>
    %cst_25 = arith.constant dense<0.000000e+00> : vector<8x128xf32>
    %120 = tpu.matmul %119, %1, %cst_25 {dimension_numbers = #tpu.dot_dimension_numbers<[1], [0], [0], [1], [0, 0, 1, 1], [], []>} : vector<8x32xbf16>, vector<32x128xbf16>, vector<8x128xf32> -> vector<8x128xf32>
    %121 = arith.truncf %98 : vector<8x32xf32> to vector<8x32xbf16>
    %cst_26 = arith.constant dense<0.000000e+00> : vector<8x128xf32>
    %122 = tpu.matmul %121, %2, %cst_26 {dimension_numbers = #tpu.dot_dimension_numbers<[1], [0], [0], [1], [0, 0, 1, 1], [], []>} : vector<8x32xbf16>, vector<32x128xbf16>, vector<8x128xf32> -> vector<8x128xf32>
    %123 = arith.addf %120, %122 : vector<8x128xf32>
    %124 = arith.addf %123, %5 : vector<8x128xf32>
    %125 = vector.extract_strided_slice %124 {offsets = [0, 0], sizes = [8, 96], strides = [1, 1]} : vector<8x128xf32> to vector<8x96xf32>
    %126 = arith.negf %125 : vector<8x96xf32>
    %127 = math.exp %126 : vector<8x96xf32>
    %cst_27 = arith.constant 1.000000e+00 : f32
    %128 = vector.broadcast %cst_27 : f32 to vector<8x96xf32>
    %129 = arith.addf %128, %127 : vector<8x96xf32>
    %130 = arith.divf %128, %129 : vector<8x96xf32>
    %131 = vector.extract_strided_slice %124 {offsets = [0, 96], sizes = [8, 32], strides = [1, 1]} : vector<8x128xf32> to vector<8x32xf32>
    %132 = math.tanh %131 : vector<8x32xf32>
    %133 = vector.extract_strided_slice %130 {offsets = [0, 0], sizes = [8, 32], strides = [1, 1]} : vector<8x96xf32> to vector<8x32xf32>
    %134 = vector.extract_strided_slice %130 {offsets = [0, 32], sizes = [8, 32], strides = [1, 1]} : vector<8x96xf32> to vector<8x32xf32>
    %135 = vector.extract_strided_slice %130 {offsets = [0, 64], sizes = [8, 32], strides = [1, 1]} : vector<8x96xf32> to vector<8x32xf32>
    %136 = arith.mulf %134, %96 : vector<8x32xf32>
    %137 = arith.mulf %133, %132 : vector<8x32xf32>
    %138 = arith.addf %136, %137 : vector<8x32xf32>
    %139 = math.tanh %138 : vector<8x32xf32>
    %140 = arith.mulf %135, %139 : vector<8x32xf32>
    %141 = vector.extract_strided_slice %13 {offsets = [24, 0], sizes = [8, 128], strides = [1, 1]} : vector<64x128xf32> to vector<8x128xf32>
    %142 = arith.truncf %118 : vector<8x32xf32> to vector<8x32xbf16>
    %cst_28 = arith.constant dense<0.000000e+00> : vector<8x128xf32>
    %143 = tpu.matmul %142, %0, %cst_28 {dimension_numbers = #tpu.dot_dimension_numbers<[1], [0], [0], [1], [0, 0, 1, 1], [], []>} : vector<8x32xbf16>, vector<32x128xbf16>, vector<8x128xf32> -> vector<8x128xf32>
    %144 = arith.addf %141, %143 : vector<8x128xf32>
    %145 = vector.extract_strided_slice %144 {offsets = [0, 0], sizes = [8, 96], strides = [1, 1]} : vector<8x128xf32> to vector<8x96xf32>
    %146 = arith.negf %145 : vector<8x96xf32>
    %147 = math.exp %146 : vector<8x96xf32>
    %cst_29 = arith.constant 1.000000e+00 : f32
    %148 = vector.broadcast %cst_29 : f32 to vector<8x96xf32>
    %149 = arith.addf %148, %147 : vector<8x96xf32>
    %150 = arith.divf %148, %149 : vector<8x96xf32>
    %151 = vector.extract_strided_slice %144 {offsets = [0, 96], sizes = [8, 32], strides = [1, 1]} : vector<8x128xf32> to vector<8x32xf32>
    %152 = math.tanh %151 : vector<8x32xf32>
    %153 = vector.extract_strided_slice %150 {offsets = [0, 0], sizes = [8, 32], strides = [1, 1]} : vector<8x96xf32> to vector<8x32xf32>
    %154 = vector.extract_strided_slice %150 {offsets = [0, 32], sizes = [8, 32], strides = [1, 1]} : vector<8x96xf32> to vector<8x32xf32>
    %155 = vector.extract_strided_slice %150 {offsets = [0, 64], sizes = [8, 32], strides = [1, 1]} : vector<8x96xf32> to vector<8x32xf32>
    %156 = arith.mulf %154, %116 : vector<8x32xf32>
    %157 = arith.mulf %153, %152 : vector<8x32xf32>
    %158 = arith.addf %156, %157 : vector<8x32xf32>
    %159 = math.tanh %158 : vector<8x32xf32>
    %160 = arith.mulf %155, %159 : vector<8x32xf32>
    %161 = arith.truncf %160 : vector<8x32xf32> to vector<8x32xbf16>
    %cst_30 = arith.constant dense<0.000000e+00> : vector<8x128xf32>
    %162 = tpu.matmul %161, %1, %cst_30 {dimension_numbers = #tpu.dot_dimension_numbers<[1], [0], [0], [1], [0, 0, 1, 1], [], []>} : vector<8x32xbf16>, vector<32x128xbf16>, vector<8x128xf32> -> vector<8x128xf32>
    %163 = arith.truncf %140 : vector<8x32xf32> to vector<8x32xbf16>
    %cst_31 = arith.constant dense<0.000000e+00> : vector<8x128xf32>
    %164 = tpu.matmul %163, %2, %cst_31 {dimension_numbers = #tpu.dot_dimension_numbers<[1], [0], [0], [1], [0, 0, 1, 1], [], []>} : vector<8x32xbf16>, vector<32x128xbf16>, vector<8x128xf32> -> vector<8x128xf32>
    %165 = arith.addf %162, %164 : vector<8x128xf32>
    %166 = arith.addf %165, %5 : vector<8x128xf32>
    %167 = vector.extract_strided_slice %166 {offsets = [0, 0], sizes = [8, 96], strides = [1, 1]} : vector<8x128xf32> to vector<8x96xf32>
    %168 = arith.negf %167 : vector<8x96xf32>
    %169 = math.exp %168 : vector<8x96xf32>
    %cst_32 = arith.constant 1.000000e+00 : f32
    %170 = vector.broadcast %cst_32 : f32 to vector<8x96xf32>
    %171 = arith.addf %170, %169 : vector<8x96xf32>
    %172 = arith.divf %170, %171 : vector<8x96xf32>
    %173 = vector.extract_strided_slice %166 {offsets = [0, 96], sizes = [8, 32], strides = [1, 1]} : vector<8x128xf32> to vector<8x32xf32>
    %174 = math.tanh %173 : vector<8x32xf32>
    %175 = vector.extract_strided_slice %172 {offsets = [0, 0], sizes = [8, 32], strides = [1, 1]} : vector<8x96xf32> to vector<8x32xf32>
    %176 = vector.extract_strided_slice %172 {offsets = [0, 32], sizes = [8, 32], strides = [1, 1]} : vector<8x96xf32> to vector<8x32xf32>
    %177 = vector.extract_strided_slice %172 {offsets = [0, 64], sizes = [8, 32], strides = [1, 1]} : vector<8x96xf32> to vector<8x32xf32>
    %178 = arith.mulf %176, %138 : vector<8x32xf32>
    %179 = arith.mulf %175, %174 : vector<8x32xf32>
    %180 = arith.addf %178, %179 : vector<8x32xf32>
    %181 = math.tanh %180 : vector<8x32xf32>
    %182 = arith.mulf %177, %181 : vector<8x32xf32>
    %183 = vector.extract_strided_slice %13 {offsets = [32, 0], sizes = [8, 128], strides = [1, 1]} : vector<64x128xf32> to vector<8x128xf32>
    %184 = arith.truncf %160 : vector<8x32xf32> to vector<8x32xbf16>
    %cst_33 = arith.constant dense<0.000000e+00> : vector<8x128xf32>
    %185 = tpu.matmul %184, %0, %cst_33 {dimension_numbers = #tpu.dot_dimension_numbers<[1], [0], [0], [1], [0, 0, 1, 1], [], []>} : vector<8x32xbf16>, vector<32x128xbf16>, vector<8x128xf32> -> vector<8x128xf32>
    %186 = arith.addf %183, %185 : vector<8x128xf32>
    %187 = vector.extract_strided_slice %186 {offsets = [0, 0], sizes = [8, 96], strides = [1, 1]} : vector<8x128xf32> to vector<8x96xf32>
    %188 = arith.negf %187 : vector<8x96xf32>
    %189 = math.exp %188 : vector<8x96xf32>
    %cst_34 = arith.constant 1.000000e+00 : f32
    %190 = vector.broadcast %cst_34 : f32 to vector<8x96xf32>
    %191 = arith.addf %190, %189 : vector<8x96xf32>
    %192 = arith.divf %190, %191 : vector<8x96xf32>
    %193 = vector.extract_strided_slice %186 {offsets = [0, 96], sizes = [8, 32], strides = [1, 1]} : vector<8x128xf32> to vector<8x32xf32>
    %194 = math.tanh %193 : vector<8x32xf32>
    %195 = vector.extract_strided_slice %192 {offsets = [0, 0], sizes = [8, 32], strides = [1, 1]} : vector<8x96xf32> to vector<8x32xf32>
    %196 = vector.extract_strided_slice %192 {offsets = [0, 32], sizes = [8, 32], strides = [1, 1]} : vector<8x96xf32> to vector<8x32xf32>
    %197 = vector.extract_strided_slice %192 {offsets = [0, 64], sizes = [8, 32], strides = [1, 1]} : vector<8x96xf32> to vector<8x32xf32>
    %198 = arith.mulf %196, %158 : vector<8x32xf32>
    %199 = arith.mulf %195, %194 : vector<8x32xf32>
    %200 = arith.addf %198, %199 : vector<8x32xf32>
    %201 = math.tanh %200 : vector<8x32xf32>
    %202 = arith.mulf %197, %201 : vector<8x32xf32>
    %203 = arith.truncf %202 : vector<8x32xf32> to vector<8x32xbf16>
    %cst_35 = arith.constant dense<0.000000e+00> : vector<8x128xf32>
    %204 = tpu.matmul %203, %1, %cst_35 {dimension_numbers = #tpu.dot_dimension_numbers<[1], [0], [0], [1], [0, 0, 1, 1], [], []>} : vector<8x32xbf16>, vector<32x128xbf16>, vector<8x128xf32> -> vector<8x128xf32>
    %205 = arith.truncf %182 : vector<8x32xf32> to vector<8x32xbf16>
    %cst_36 = arith.constant dense<0.000000e+00> : vector<8x128xf32>
    %206 = tpu.matmul %205, %2, %cst_36 {dimension_numbers = #tpu.dot_dimension_numbers<[1], [0], [0], [1], [0, 0, 1, 1], [], []>} : vector<8x32xbf16>, vector<32x128xbf16>, vector<8x128xf32> -> vector<8x128xf32>
    %207 = arith.addf %204, %206 : vector<8x128xf32>
    %208 = arith.addf %207, %5 : vector<8x128xf32>
    %209 = vector.extract_strided_slice %208 {offsets = [0, 0], sizes = [8, 96], strides = [1, 1]} : vector<8x128xf32> to vector<8x96xf32>
    %210 = arith.negf %209 : vector<8x96xf32>
    %211 = math.exp %210 : vector<8x96xf32>
    %cst_37 = arith.constant 1.000000e+00 : f32
    %212 = vector.broadcast %cst_37 : f32 to vector<8x96xf32>
    %213 = arith.addf %212, %211 : vector<8x96xf32>
    %214 = arith.divf %212, %213 : vector<8x96xf32>
    %215 = vector.extract_strided_slice %208 {offsets = [0, 96], sizes = [8, 32], strides = [1, 1]} : vector<8x128xf32> to vector<8x32xf32>
    %216 = math.tanh %215 : vector<8x32xf32>
    %217 = vector.extract_strided_slice %214 {offsets = [0, 0], sizes = [8, 32], strides = [1, 1]} : vector<8x96xf32> to vector<8x32xf32>
    %218 = vector.extract_strided_slice %214 {offsets = [0, 32], sizes = [8, 32], strides = [1, 1]} : vector<8x96xf32> to vector<8x32xf32>
    %219 = vector.extract_strided_slice %214 {offsets = [0, 64], sizes = [8, 32], strides = [1, 1]} : vector<8x96xf32> to vector<8x32xf32>
    %220 = arith.mulf %218, %180 : vector<8x32xf32>
    %221 = arith.mulf %217, %216 : vector<8x32xf32>
    %222 = arith.addf %220, %221 : vector<8x32xf32>
    %223 = math.tanh %222 : vector<8x32xf32>
    %224 = arith.mulf %219, %223 : vector<8x32xf32>
    %225 = vector.extract_strided_slice %13 {offsets = [40, 0], sizes = [8, 128], strides = [1, 1]} : vector<64x128xf32> to vector<8x128xf32>
    %226 = arith.truncf %202 : vector<8x32xf32> to vector<8x32xbf16>
    %cst_38 = arith.constant dense<0.000000e+00> : vector<8x128xf32>
    %227 = tpu.matmul %226, %0, %cst_38 {dimension_numbers = #tpu.dot_dimension_numbers<[1], [0], [0], [1], [0, 0, 1, 1], [], []>} : vector<8x32xbf16>, vector<32x128xbf16>, vector<8x128xf32> -> vector<8x128xf32>
    %228 = arith.addf %225, %227 : vector<8x128xf32>
    %229 = vector.extract_strided_slice %228 {offsets = [0, 0], sizes = [8, 96], strides = [1, 1]} : vector<8x128xf32> to vector<8x96xf32>
    %230 = arith.negf %229 : vector<8x96xf32>
    %231 = math.exp %230 : vector<8x96xf32>
    %cst_39 = arith.constant 1.000000e+00 : f32
    %232 = vector.broadcast %cst_39 : f32 to vector<8x96xf32>
    %233 = arith.addf %232, %231 : vector<8x96xf32>
    %234 = arith.divf %232, %233 : vector<8x96xf32>
    %235 = vector.extract_strided_slice %228 {offsets = [0, 96], sizes = [8, 32], strides = [1, 1]} : vector<8x128xf32> to vector<8x32xf32>
    %236 = math.tanh %235 : vector<8x32xf32>
    %237 = vector.extract_strided_slice %234 {offsets = [0, 0], sizes = [8, 32], strides = [1, 1]} : vector<8x96xf32> to vector<8x32xf32>
    %238 = vector.extract_strided_slice %234 {offsets = [0, 32], sizes = [8, 32], strides = [1, 1]} : vector<8x96xf32> to vector<8x32xf32>
    %239 = vector.extract_strided_slice %234 {offsets = [0, 64], sizes = [8, 32], strides = [1, 1]} : vector<8x96xf32> to vector<8x32xf32>
    %240 = arith.mulf %238, %200 : vector<8x32xf32>
    %241 = arith.mulf %237, %236 : vector<8x32xf32>
    %242 = arith.addf %240, %241 : vector<8x32xf32>
    %243 = math.tanh %242 : vector<8x32xf32>
    %244 = arith.mulf %239, %243 : vector<8x32xf32>
    %245 = arith.truncf %244 : vector<8x32xf32> to vector<8x32xbf16>
    %cst_40 = arith.constant dense<0.000000e+00> : vector<8x128xf32>
    %246 = tpu.matmul %245, %1, %cst_40 {dimension_numbers = #tpu.dot_dimension_numbers<[1], [0], [0], [1], [0, 0, 1, 1], [], []>} : vector<8x32xbf16>, vector<32x128xbf16>, vector<8x128xf32> -> vector<8x128xf32>
    %247 = arith.truncf %224 : vector<8x32xf32> to vector<8x32xbf16>
    %cst_41 = arith.constant dense<0.000000e+00> : vector<8x128xf32>
    %248 = tpu.matmul %247, %2, %cst_41 {dimension_numbers = #tpu.dot_dimension_numbers<[1], [0], [0], [1], [0, 0, 1, 1], [], []>} : vector<8x32xbf16>, vector<32x128xbf16>, vector<8x128xf32> -> vector<8x128xf32>
    %249 = arith.addf %246, %248 : vector<8x128xf32>
    %250 = arith.addf %249, %5 : vector<8x128xf32>
    %251 = vector.extract_strided_slice %250 {offsets = [0, 0], sizes = [8, 96], strides = [1, 1]} : vector<8x128xf32> to vector<8x96xf32>
    %252 = arith.negf %251 : vector<8x96xf32>
    %253 = math.exp %252 : vector<8x96xf32>
    %cst_42 = arith.constant 1.000000e+00 : f32
    %254 = vector.broadcast %cst_42 : f32 to vector<8x96xf32>
    %255 = arith.addf %254, %253 : vector<8x96xf32>
    %256 = arith.divf %254, %255 : vector<8x96xf32>
    %257 = vector.extract_strided_slice %250 {offsets = [0, 96], sizes = [8, 32], strides = [1, 1]} : vector<8x128xf32> to vector<8x32xf32>
    %258 = math.tanh %257 : vector<8x32xf32>
    %259 = vector.extract_strided_slice %256 {offsets = [0, 0], sizes = [8, 32], strides = [1, 1]} : vector<8x96xf32> to vector<8x32xf32>
    %260 = vector.extract_strided_slice %256 {offsets = [0, 32], sizes = [8, 32], strides = [1, 1]} : vector<8x96xf32> to vector<8x32xf32>
    %261 = vector.extract_strided_slice %256 {offsets = [0, 64], sizes = [8, 32], strides = [1, 1]} : vector<8x96xf32> to vector<8x32xf32>
    %262 = arith.mulf %260, %222 : vector<8x32xf32>
    %263 = arith.mulf %259, %258 : vector<8x32xf32>
    %264 = arith.addf %262, %263 : vector<8x32xf32>
    %265 = math.tanh %264 : vector<8x32xf32>
    %266 = arith.mulf %261, %265 : vector<8x32xf32>
    %267 = vector.extract_strided_slice %13 {offsets = [48, 0], sizes = [8, 128], strides = [1, 1]} : vector<64x128xf32> to vector<8x128xf32>
    %268 = arith.truncf %244 : vector<8x32xf32> to vector<8x32xbf16>
    %cst_43 = arith.constant dense<0.000000e+00> : vector<8x128xf32>
    %269 = tpu.matmul %268, %0, %cst_43 {dimension_numbers = #tpu.dot_dimension_numbers<[1], [0], [0], [1], [0, 0, 1, 1], [], []>} : vector<8x32xbf16>, vector<32x128xbf16>, vector<8x128xf32> -> vector<8x128xf32>
    %270 = arith.addf %267, %269 : vector<8x128xf32>
    %271 = vector.extract_strided_slice %270 {offsets = [0, 0], sizes = [8, 96], strides = [1, 1]} : vector<8x128xf32> to vector<8x96xf32>
    %272 = arith.negf %271 : vector<8x96xf32>
    %273 = math.exp %272 : vector<8x96xf32>
    %cst_44 = arith.constant 1.000000e+00 : f32
    %274 = vector.broadcast %cst_44 : f32 to vector<8x96xf32>
    %275 = arith.addf %274, %273 : vector<8x96xf32>
    %276 = arith.divf %274, %275 : vector<8x96xf32>
    %277 = vector.extract_strided_slice %270 {offsets = [0, 96], sizes = [8, 32], strides = [1, 1]} : vector<8x128xf32> to vector<8x32xf32>
    %278 = math.tanh %277 : vector<8x32xf32>
    %279 = vector.extract_strided_slice %276 {offsets = [0, 0], sizes = [8, 32], strides = [1, 1]} : vector<8x96xf32> to vector<8x32xf32>
    %280 = vector.extract_strided_slice %276 {offsets = [0, 32], sizes = [8, 32], strides = [1, 1]} : vector<8x96xf32> to vector<8x32xf32>
    %281 = vector.extract_strided_slice %276 {offsets = [0, 64], sizes = [8, 32], strides = [1, 1]} : vector<8x96xf32> to vector<8x32xf32>
    %282 = arith.mulf %280, %242 : vector<8x32xf32>
    %283 = arith.mulf %279, %278 : vector<8x32xf32>
    %284 = arith.addf %282, %283 : vector<8x32xf32>
    %285 = math.tanh %284 : vector<8x32xf32>
    %286 = arith.mulf %281, %285 : vector<8x32xf32>
    %287 = arith.truncf %286 : vector<8x32xf32> to vector<8x32xbf16>
    %cst_45 = arith.constant dense<0.000000e+00> : vector<8x128xf32>
    %288 = tpu.matmul %287, %1, %cst_45 {dimension_numbers = #tpu.dot_dimension_numbers<[1], [0], [0], [1], [0, 0, 1, 1], [], []>} : vector<8x32xbf16>, vector<32x128xbf16>, vector<8x128xf32> -> vector<8x128xf32>
    %289 = arith.truncf %266 : vector<8x32xf32> to vector<8x32xbf16>
    %cst_46 = arith.constant dense<0.000000e+00> : vector<8x128xf32>
    %290 = tpu.matmul %289, %2, %cst_46 {dimension_numbers = #tpu.dot_dimension_numbers<[1], [0], [0], [1], [0, 0, 1, 1], [], []>} : vector<8x32xbf16>, vector<32x128xbf16>, vector<8x128xf32> -> vector<8x128xf32>
    %291 = arith.addf %288, %290 : vector<8x128xf32>
    %292 = arith.addf %291, %5 : vector<8x128xf32>
    %293 = vector.extract_strided_slice %292 {offsets = [0, 0], sizes = [8, 96], strides = [1, 1]} : vector<8x128xf32> to vector<8x96xf32>
    %294 = arith.negf %293 : vector<8x96xf32>
    %295 = math.exp %294 : vector<8x96xf32>
    %cst_47 = arith.constant 1.000000e+00 : f32
    %296 = vector.broadcast %cst_47 : f32 to vector<8x96xf32>
    %297 = arith.addf %296, %295 : vector<8x96xf32>
    %298 = arith.divf %296, %297 : vector<8x96xf32>
    %299 = vector.extract_strided_slice %292 {offsets = [0, 96], sizes = [8, 32], strides = [1, 1]} : vector<8x128xf32> to vector<8x32xf32>
    %300 = math.tanh %299 : vector<8x32xf32>
    %301 = vector.extract_strided_slice %298 {offsets = [0, 0], sizes = [8, 32], strides = [1, 1]} : vector<8x96xf32> to vector<8x32xf32>
    %302 = vector.extract_strided_slice %298 {offsets = [0, 32], sizes = [8, 32], strides = [1, 1]} : vector<8x96xf32> to vector<8x32xf32>
    %303 = vector.extract_strided_slice %298 {offsets = [0, 64], sizes = [8, 32], strides = [1, 1]} : vector<8x96xf32> to vector<8x32xf32>
    %304 = arith.mulf %302, %264 : vector<8x32xf32>
    %305 = arith.mulf %301, %300 : vector<8x32xf32>
    %306 = arith.addf %304, %305 : vector<8x32xf32>
    %307 = math.tanh %306 : vector<8x32xf32>
    %308 = arith.mulf %303, %307 : vector<8x32xf32>
    %309 = vector.extract_strided_slice %13 {offsets = [56, 0], sizes = [8, 128], strides = [1, 1]} : vector<64x128xf32> to vector<8x128xf32>
    %310 = arith.truncf %286 : vector<8x32xf32> to vector<8x32xbf16>
    %cst_48 = arith.constant dense<0.000000e+00> : vector<8x128xf32>
    %311 = tpu.matmul %310, %0, %cst_48 {dimension_numbers = #tpu.dot_dimension_numbers<[1], [0], [0], [1], [0, 0, 1, 1], [], []>} : vector<8x32xbf16>, vector<32x128xbf16>, vector<8x128xf32> -> vector<8x128xf32>
    %312 = arith.addf %309, %311 : vector<8x128xf32>
    %313 = vector.extract_strided_slice %312 {offsets = [0, 0], sizes = [8, 96], strides = [1, 1]} : vector<8x128xf32> to vector<8x96xf32>
    %314 = arith.negf %313 : vector<8x96xf32>
    %315 = math.exp %314 : vector<8x96xf32>
    %cst_49 = arith.constant 1.000000e+00 : f32
    %316 = vector.broadcast %cst_49 : f32 to vector<8x96xf32>
    %317 = arith.addf %316, %315 : vector<8x96xf32>
    %318 = arith.divf %316, %317 : vector<8x96xf32>
    %319 = vector.extract_strided_slice %312 {offsets = [0, 96], sizes = [8, 32], strides = [1, 1]} : vector<8x128xf32> to vector<8x32xf32>
    %320 = math.tanh %319 : vector<8x32xf32>
    %321 = vector.extract_strided_slice %318 {offsets = [0, 0], sizes = [8, 32], strides = [1, 1]} : vector<8x96xf32> to vector<8x32xf32>
    %322 = vector.extract_strided_slice %318 {offsets = [0, 32], sizes = [8, 32], strides = [1, 1]} : vector<8x96xf32> to vector<8x32xf32>
    %323 = vector.extract_strided_slice %318 {offsets = [0, 64], sizes = [8, 32], strides = [1, 1]} : vector<8x96xf32> to vector<8x32xf32>
    %324 = arith.mulf %322, %284 : vector<8x32xf32>
    %325 = arith.mulf %321, %320 : vector<8x32xf32>
    %326 = arith.addf %324, %325 : vector<8x32xf32>
    %327 = math.tanh %326 : vector<8x32xf32>
    %328 = arith.mulf %323, %327 : vector<8x32xf32>
    %329 = arith.truncf %328 : vector<8x32xf32> to vector<8x32xbf16>
    %cst_50 = arith.constant dense<0.000000e+00> : vector<8x128xf32>
    %330 = tpu.matmul %329, %1, %cst_50 {dimension_numbers = #tpu.dot_dimension_numbers<[1], [0], [0], [1], [0, 0, 1, 1], [], []>} : vector<8x32xbf16>, vector<32x128xbf16>, vector<8x128xf32> -> vector<8x128xf32>
    %331 = arith.truncf %308 : vector<8x32xf32> to vector<8x32xbf16>
    %cst_51 = arith.constant dense<0.000000e+00> : vector<8x128xf32>
    %332 = tpu.matmul %331, %2, %cst_51 {dimension_numbers = #tpu.dot_dimension_numbers<[1], [0], [0], [1], [0, 0, 1, 1], [], []>} : vector<8x32xbf16>, vector<32x128xbf16>, vector<8x128xf32> -> vector<8x128xf32>
    %333 = arith.addf %330, %332 : vector<8x128xf32>
    %334 = arith.addf %333, %5 : vector<8x128xf32>
    %335 = vector.extract_strided_slice %334 {offsets = [0, 0], sizes = [8, 96], strides = [1, 1]} : vector<8x128xf32> to vector<8x96xf32>
    %336 = arith.negf %335 : vector<8x96xf32>
    %337 = math.exp %336 : vector<8x96xf32>
    %cst_52 = arith.constant 1.000000e+00 : f32
    %338 = vector.broadcast %cst_52 : f32 to vector<8x96xf32>
    %339 = arith.addf %338, %337 : vector<8x96xf32>
    %340 = arith.divf %338, %339 : vector<8x96xf32>
    %341 = vector.extract_strided_slice %334 {offsets = [0, 96], sizes = [8, 32], strides = [1, 1]} : vector<8x128xf32> to vector<8x32xf32>
    %342 = math.tanh %341 : vector<8x32xf32>
    %343 = vector.extract_strided_slice %340 {offsets = [0, 0], sizes = [8, 32], strides = [1, 1]} : vector<8x96xf32> to vector<8x32xf32>
    %344 = vector.extract_strided_slice %340 {offsets = [0, 32], sizes = [8, 32], strides = [1, 1]} : vector<8x96xf32> to vector<8x32xf32>
    %345 = vector.extract_strided_slice %340 {offsets = [0, 64], sizes = [8, 32], strides = [1, 1]} : vector<8x96xf32> to vector<8x32xf32>
    %346 = arith.mulf %344, %306 : vector<8x32xf32>
    %347 = arith.mulf %343, %342 : vector<8x32xf32>
    %348 = arith.addf %346, %347 : vector<8x32xf32>
    %349 = math.tanh %348 : vector<8x32xf32>
    %350 = arith.mulf %345, %349 : vector<8x32xf32>
    %c0_53 = arith.constant 0 : index
    %c0_54 = arith.constant 0 : index
    %351 = vector.load %arg7[%c0_53, %c0_54] : memref<32x64xf32, #tpu.memory_space<vmem>>, vector<32x64xf32>
    %c0_55 = arith.constant 0 : index
    %c0_56 = arith.constant 0 : index
    %352 = vector.load %arg8[%c0_55, %c0_56] : memref<256x64xf32, #tpu.memory_space<vmem>>, vector<256x64xf32>
    %353 = arith.negf %350 : vector<8x32xf32>
    %354 = math.exp %353 : vector<8x32xf32>
    %cst_57 = arith.constant 1.000000e+00 : f32
    %355 = vector.broadcast %cst_57 : f32 to vector<8x32xf32>
    %356 = arith.addf %355, %354 : vector<8x32xf32>
    %357 = arith.divf %355, %356 : vector<8x32xf32>
    %358 = arith.mulf %350, %357 : vector<8x32xf32>
    %cst_58 = arith.constant dense<0.000000e+00> : vector<8x64xf32>
    %359 = tpu.matmul %358, %351, %cst_58 {dimension_numbers = #tpu.dot_dimension_numbers<[1], [0], [0], [1], [0, 0, 1, 1], [], []>} : vector<8x32xf32>, vector<32x64xf32>, vector<8x64xf32> -> vector<8x64xf32>
    %cst_59 = arith.constant -2.200000e+00 : f32
    %360 = vector.broadcast %cst_59 : f32 to vector<8x32xf32>
    %361 = arith.cmpf oge, %350, %360 : vector<8x32xf32>
    %cst_60 = arith.constant -1.800000e+00 : f32
    %362 = vector.broadcast %cst_60 : f32 to vector<8x32xf32>
    %363 = arith.cmpf olt, %350, %362 : vector<8x32xf32>
    %364 = arith.andi %361, %363 : vector<8x32xi1>
    %365 = arith.extui %364 : vector<8x32xi1> to vector<8x32xi32>
    %366 = arith.sitofp %365 : vector<8x32xi32> to vector<8x32xf32>
    %cst_61 = arith.constant -1.800000e+00 : f32
    %367 = vector.broadcast %cst_61 : f32 to vector<8x32xf32>
    %368 = arith.cmpf oge, %350, %367 : vector<8x32xf32>
    %cst_62 = arith.constant -1.400000e+00 : f32
    %369 = vector.broadcast %cst_62 : f32 to vector<8x32xf32>
    %370 = arith.cmpf olt, %350, %369 : vector<8x32xf32>
    %371 = arith.andi %368, %370 : vector<8x32xi1>
    %372 = arith.extui %371 : vector<8x32xi1> to vector<8x32xi32>
    %373 = arith.sitofp %372 : vector<8x32xi32> to vector<8x32xf32>
    %cst_63 = arith.constant -1.400000e+00 : f32
    %374 = vector.broadcast %cst_63 : f32 to vector<8x32xf32>
    %375 = arith.cmpf oge, %350, %374 : vector<8x32xf32>
    %cst_64 = arith.constant -1.000000e+00 : f32
    %376 = vector.broadcast %cst_64 : f32 to vector<8x32xf32>
    %377 = arith.cmpf olt, %350, %376 : vector<8x32xf32>
    %378 = arith.andi %375, %377 : vector<8x32xi1>
    %379 = arith.extui %378 : vector<8x32xi1> to vector<8x32xi32>
    %380 = arith.sitofp %379 : vector<8x32xi32> to vector<8x32xf32>
    %cst_65 = arith.constant -1.000000e+00 : f32
    %381 = vector.broadcast %cst_65 : f32 to vector<8x32xf32>
    %382 = arith.cmpf oge, %350, %381 : vector<8x32xf32>
    %cst_66 = arith.constant -6.000000e-01 : f32
    %383 = vector.broadcast %cst_66 : f32 to vector<8x32xf32>
    %384 = arith.cmpf olt, %350, %383 : vector<8x32xf32>
    %385 = arith.andi %382, %384 : vector<8x32xi1>
    %386 = arith.extui %385 : vector<8x32xi1> to vector<8x32xi32>
    %387 = arith.sitofp %386 : vector<8x32xi32> to vector<8x32xf32>
    %cst_67 = arith.constant -6.000000e-01 : f32
    %388 = vector.broadcast %cst_67 : f32 to vector<8x32xf32>
    %389 = arith.cmpf oge, %350, %388 : vector<8x32xf32>
    %cst_68 = arith.constant -2.000000e-01 : f32
    %390 = vector.broadcast %cst_68 : f32 to vector<8x32xf32>
    %391 = arith.cmpf olt, %350, %390 : vector<8x32xf32>
    %392 = arith.andi %389, %391 : vector<8x32xi1>
    %393 = arith.extui %392 : vector<8x32xi1> to vector<8x32xi32>
    %394 = arith.sitofp %393 : vector<8x32xi32> to vector<8x32xf32>
    %cst_69 = arith.constant -2.000000e-01 : f32
    %395 = vector.broadcast %cst_69 : f32 to vector<8x32xf32>
    %396 = arith.cmpf oge, %350, %395 : vector<8x32xf32>
    %cst_70 = arith.constant 2.000000e-01 : f32
    %397 = vector.broadcast %cst_70 : f32 to vector<8x32xf32>
    %398 = arith.cmpf olt, %350, %397 : vector<8x32xf32>
    %399 = arith.andi %396, %398 : vector<8x32xi1>
    %400 = arith.extui %399 : vector<8x32xi1> to vector<8x32xi32>
    %401 = arith.sitofp %400 : vector<8x32xi32> to vector<8x32xf32>
    %cst_71 = arith.constant 2.000000e-01 : f32
    %402 = vector.broadcast %cst_71 : f32 to vector<8x32xf32>
    %403 = arith.cmpf oge, %350, %402 : vector<8x32xf32>
    %cst_72 = arith.constant 6.000000e-01 : f32
    %404 = vector.broadcast %cst_72 : f32 to vector<8x32xf32>
    %405 = arith.cmpf olt, %350, %404 : vector<8x32xf32>
    %406 = arith.andi %403, %405 : vector<8x32xi1>
    %407 = arith.extui %406 : vector<8x32xi1> to vector<8x32xi32>
    %408 = arith.sitofp %407 : vector<8x32xi32> to vector<8x32xf32>
    %cst_73 = arith.constant 6.000000e-01 : f32
    %409 = vector.broadcast %cst_73 : f32 to vector<8x32xf32>
    %410 = arith.cmpf oge, %350, %409 : vector<8x32xf32>
    %cst_74 = arith.constant 1.000000e+00 : f32
    %411 = vector.broadcast %cst_74 : f32 to vector<8x32xf32>
    %412 = arith.cmpf olt, %350, %411 : vector<8x32xf32>
    %413 = arith.andi %410, %412 : vector<8x32xi1>
    %414 = arith.extui %413 : vector<8x32xi1> to vector<8x32xi32>
    %415 = arith.sitofp %414 : vector<8x32xi32> to vector<8x32xf32>
    %cst_75 = arith.constant 1.000000e+00 : f32
    %416 = vector.broadcast %cst_75 : f32 to vector<8x32xf32>
    %417 = arith.cmpf oge, %350, %416 : vector<8x32xf32>
    %cst_76 = arith.constant 1.400000e+00 : f32
    %418 = vector.broadcast %cst_76 : f32 to vector<8x32xf32>
    %419 = arith.cmpf olt, %350, %418 : vector<8x32xf32>
    %420 = arith.andi %417, %419 : vector<8x32xi1>
    %421 = arith.extui %420 : vector<8x32xi1> to vector<8x32xi32>
    %422 = arith.sitofp %421 : vector<8x32xi32> to vector<8x32xf32>
    %cst_77 = arith.constant 1.400000e+00 : f32
    %423 = vector.broadcast %cst_77 : f32 to vector<8x32xf32>
    %424 = arith.cmpf oge, %350, %423 : vector<8x32xf32>
    %cst_78 = arith.constant 1.800000e+00 : f32
    %425 = vector.broadcast %cst_78 : f32 to vector<8x32xf32>
    %426 = arith.cmpf olt, %350, %425 : vector<8x32xf32>
    %427 = arith.andi %424, %426 : vector<8x32xi1>
    %428 = arith.extui %427 : vector<8x32xi1> to vector<8x32xi32>
    %429 = arith.sitofp %428 : vector<8x32xi32> to vector<8x32xf32>
    %cst_79 = arith.constant 1.800000e+00 : f32
    %430 = vector.broadcast %cst_79 : f32 to vector<8x32xf32>
    %431 = arith.cmpf oge, %350, %430 : vector<8x32xf32>
    %cst_80 = arith.constant 2.200000e+00 : f32
    %432 = vector.broadcast %cst_80 : f32 to vector<8x32xf32>
    %433 = arith.cmpf olt, %350, %432 : vector<8x32xf32>
    %434 = arith.andi %431, %433 : vector<8x32xi1>
    %435 = arith.extui %434 : vector<8x32xi1> to vector<8x32xi32>
    %436 = arith.sitofp %435 : vector<8x32xi32> to vector<8x32xf32>
    %cst_81 = arith.constant -2.200000e+00 : f32
    %437 = vector.broadcast %cst_81 : f32 to vector<8x32xf32>
    %438 = arith.subf %350, %437 : vector<8x32xf32>
    %cst_82 = arith.constant 2.500000e+00 : f32
    %439 = vector.broadcast %cst_82 : f32 to vector<8x32xf32>
    %440 = arith.mulf %438, %439 : vector<8x32xf32>
    %441 = arith.mulf %440, %366 : vector<8x32xf32>
    %cst_83 = arith.constant -1.400000e+00 : f32
    %442 = vector.broadcast %cst_83 : f32 to vector<8x32xf32>
    %443 = arith.subf %442, %350 : vector<8x32xf32>
    %cst_84 = arith.constant 2.500000e+00 : f32
    %444 = vector.broadcast %cst_84 : f32 to vector<8x32xf32>
    %445 = arith.mulf %443, %444 : vector<8x32xf32>
    %446 = arith.mulf %445, %373 : vector<8x32xf32>
    %447 = arith.addf %441, %446 : vector<8x32xf32>
    %cst_85 = arith.constant -1.800000e+00 : f32
    %448 = vector.broadcast %cst_85 : f32 to vector<8x32xf32>
    %449 = arith.subf %350, %448 : vector<8x32xf32>
    %cst_86 = arith.constant 2.500000e+00 : f32
    %450 = vector.broadcast %cst_86 : f32 to vector<8x32xf32>
    %451 = arith.mulf %449, %450 : vector<8x32xf32>
    %452 = arith.mulf %451, %373 : vector<8x32xf32>
    %cst_87 = arith.constant -1.000000e+00 : f32
    %453 = vector.broadcast %cst_87 : f32 to vector<8x32xf32>
    %454 = arith.subf %453, %350 : vector<8x32xf32>
    %cst_88 = arith.constant 2.500000e+00 : f32
    %455 = vector.broadcast %cst_88 : f32 to vector<8x32xf32>
    %456 = arith.mulf %454, %455 : vector<8x32xf32>
    %457 = arith.mulf %456, %380 : vector<8x32xf32>
    %458 = arith.addf %452, %457 : vector<8x32xf32>
    %cst_89 = arith.constant -1.400000e+00 : f32
    %459 = vector.broadcast %cst_89 : f32 to vector<8x32xf32>
    %460 = arith.subf %350, %459 : vector<8x32xf32>
    %cst_90 = arith.constant 2.500000e+00 : f32
    %461 = vector.broadcast %cst_90 : f32 to vector<8x32xf32>
    %462 = arith.mulf %460, %461 : vector<8x32xf32>
    %463 = arith.mulf %462, %380 : vector<8x32xf32>
    %cst_91 = arith.constant -6.000000e-01 : f32
    %464 = vector.broadcast %cst_91 : f32 to vector<8x32xf32>
    %465 = arith.subf %464, %350 : vector<8x32xf32>
    %cst_92 = arith.constant 2.500000e+00 : f32
    %466 = vector.broadcast %cst_92 : f32 to vector<8x32xf32>
    %467 = arith.mulf %465, %466 : vector<8x32xf32>
    %468 = arith.mulf %467, %387 : vector<8x32xf32>
    %469 = arith.addf %463, %468 : vector<8x32xf32>
    %cst_93 = arith.constant -1.000000e+00 : f32
    %470 = vector.broadcast %cst_93 : f32 to vector<8x32xf32>
    %471 = arith.subf %350, %470 : vector<8x32xf32>
    %cst_94 = arith.constant 2.500000e+00 : f32
    %472 = vector.broadcast %cst_94 : f32 to vector<8x32xf32>
    %473 = arith.mulf %471, %472 : vector<8x32xf32>
    %474 = arith.mulf %473, %387 : vector<8x32xf32>
    %cst_95 = arith.constant -2.000000e-01 : f32
    %475 = vector.broadcast %cst_95 : f32 to vector<8x32xf32>
    %476 = arith.subf %475, %350 : vector<8x32xf32>
    %cst_96 = arith.constant 2.500000e+00 : f32
    %477 = vector.broadcast %cst_96 : f32 to vector<8x32xf32>
    %478 = arith.mulf %476, %477 : vector<8x32xf32>
    %479 = arith.mulf %478, %394 : vector<8x32xf32>
    %480 = arith.addf %474, %479 : vector<8x32xf32>
    %cst_97 = arith.constant -6.000000e-01 : f32
    %481 = vector.broadcast %cst_97 : f32 to vector<8x32xf32>
    %482 = arith.subf %350, %481 : vector<8x32xf32>
    %cst_98 = arith.constant 2.500000e+00 : f32
    %483 = vector.broadcast %cst_98 : f32 to vector<8x32xf32>
    %484 = arith.mulf %482, %483 : vector<8x32xf32>
    %485 = arith.mulf %484, %394 : vector<8x32xf32>
    %cst_99 = arith.constant 2.000000e-01 : f32
    %486 = vector.broadcast %cst_99 : f32 to vector<8x32xf32>
    %487 = arith.subf %486, %350 : vector<8x32xf32>
    %cst_100 = arith.constant 2.500000e+00 : f32
    %488 = vector.broadcast %cst_100 : f32 to vector<8x32xf32>
    %489 = arith.mulf %487, %488 : vector<8x32xf32>
    %490 = arith.mulf %489, %401 : vector<8x32xf32>
    %491 = arith.addf %485, %490 : vector<8x32xf32>
    %cst_101 = arith.constant -2.000000e-01 : f32
    %492 = vector.broadcast %cst_101 : f32 to vector<8x32xf32>
    %493 = arith.subf %350, %492 : vector<8x32xf32>
    %cst_102 = arith.constant 2.500000e+00 : f32
    %494 = vector.broadcast %cst_102 : f32 to vector<8x32xf32>
    %495 = arith.mulf %493, %494 : vector<8x32xf32>
    %496 = arith.mulf %495, %401 : vector<8x32xf32>
    %cst_103 = arith.constant 6.000000e-01 : f32
    %497 = vector.broadcast %cst_103 : f32 to vector<8x32xf32>
    %498 = arith.subf %497, %350 : vector<8x32xf32>
    %cst_104 = arith.constant 2.500000e+00 : f32
    %499 = vector.broadcast %cst_104 : f32 to vector<8x32xf32>
    %500 = arith.mulf %498, %499 : vector<8x32xf32>
    %501 = arith.mulf %500, %408 : vector<8x32xf32>
    %502 = arith.addf %496, %501 : vector<8x32xf32>
    %cst_105 = arith.constant 2.000000e-01 : f32
    %503 = vector.broadcast %cst_105 : f32 to vector<8x32xf32>
    %504 = arith.subf %350, %503 : vector<8x32xf32>
    %cst_106 = arith.constant 2.500000e+00 : f32
    %505 = vector.broadcast %cst_106 : f32 to vector<8x32xf32>
    %506 = arith.mulf %504, %505 : vector<8x32xf32>
    %507 = arith.mulf %506, %408 : vector<8x32xf32>
    %cst_107 = arith.constant 1.000000e+00 : f32
    %508 = vector.broadcast %cst_107 : f32 to vector<8x32xf32>
    %509 = arith.subf %508, %350 : vector<8x32xf32>
    %cst_108 = arith.constant 2.500000e+00 : f32
    %510 = vector.broadcast %cst_108 : f32 to vector<8x32xf32>
    %511 = arith.mulf %509, %510 : vector<8x32xf32>
    %512 = arith.mulf %511, %415 : vector<8x32xf32>
    %513 = arith.addf %507, %512 : vector<8x32xf32>
    %cst_109 = arith.constant 6.000000e-01 : f32
    %514 = vector.broadcast %cst_109 : f32 to vector<8x32xf32>
    %515 = arith.subf %350, %514 : vector<8x32xf32>
    %cst_110 = arith.constant 2.500000e+00 : f32
    %516 = vector.broadcast %cst_110 : f32 to vector<8x32xf32>
    %517 = arith.mulf %515, %516 : vector<8x32xf32>
    %518 = arith.mulf %517, %415 : vector<8x32xf32>
    %cst_111 = arith.constant 1.400000e+00 : f32
    %519 = vector.broadcast %cst_111 : f32 to vector<8x32xf32>
    %520 = arith.subf %519, %350 : vector<8x32xf32>
    %cst_112 = arith.constant 2.500000e+00 : f32
    %521 = vector.broadcast %cst_112 : f32 to vector<8x32xf32>
    %522 = arith.mulf %520, %521 : vector<8x32xf32>
    %523 = arith.mulf %522, %422 : vector<8x32xf32>
    %524 = arith.addf %518, %523 : vector<8x32xf32>
    %cst_113 = arith.constant 1.000000e+00 : f32
    %525 = vector.broadcast %cst_113 : f32 to vector<8x32xf32>
    %526 = arith.subf %350, %525 : vector<8x32xf32>
    %cst_114 = arith.constant 2.500000e+00 : f32
    %527 = vector.broadcast %cst_114 : f32 to vector<8x32xf32>
    %528 = arith.mulf %526, %527 : vector<8x32xf32>
    %529 = arith.mulf %528, %422 : vector<8x32xf32>
    %cst_115 = arith.constant 1.800000e+00 : f32
    %530 = vector.broadcast %cst_115 : f32 to vector<8x32xf32>
    %531 = arith.subf %530, %350 : vector<8x32xf32>
    %cst_116 = arith.constant 2.500000e+00 : f32
    %532 = vector.broadcast %cst_116 : f32 to vector<8x32xf32>
    %533 = arith.mulf %531, %532 : vector<8x32xf32>
    %534 = arith.mulf %533, %429 : vector<8x32xf32>
    %535 = arith.addf %529, %534 : vector<8x32xf32>
    %cst_117 = arith.constant 1.400000e+00 : f32
    %536 = vector.broadcast %cst_117 : f32 to vector<8x32xf32>
    %537 = arith.subf %350, %536 : vector<8x32xf32>
    %cst_118 = arith.constant 2.500000e+00 : f32
    %538 = vector.broadcast %cst_118 : f32 to vector<8x32xf32>
    %539 = arith.mulf %537, %538 : vector<8x32xf32>
    %540 = arith.mulf %539, %429 : vector<8x32xf32>
    %cst_119 = arith.constant 2.200000e+00 : f32
    %541 = vector.broadcast %cst_119 : f32 to vector<8x32xf32>
    %542 = arith.subf %541, %350 : vector<8x32xf32>
    %cst_120 = arith.constant 2.500000e+00 : f32
    %543 = vector.broadcast %cst_120 : f32 to vector<8x32xf32>
    %544 = arith.mulf %542, %543 : vector<8x32xf32>
    %545 = arith.mulf %544, %436 : vector<8x32xf32>
    %546 = arith.addf %540, %545 : vector<8x32xf32>
    %cst_121 = arith.constant -2.200000e+00 : f32
    %547 = vector.broadcast %cst_121 : f32 to vector<8x32xf32>
    %548 = arith.subf %350, %547 : vector<8x32xf32>
    %cst_122 = arith.constant 1.250000e+00 : f32
    %549 = vector.broadcast %cst_122 : f32 to vector<8x32xf32>
    %550 = arith.mulf %548, %549 : vector<8x32xf32>
    %551 = arith.mulf %550, %447 : vector<8x32xf32>
    %cst_123 = arith.constant -1.000000e+00 : f32
    %552 = vector.broadcast %cst_123 : f32 to vector<8x32xf32>
    %553 = arith.subf %552, %350 : vector<8x32xf32>
    %cst_124 = arith.constant 1.250000e+00 : f32
    %554 = vector.broadcast %cst_124 : f32 to vector<8x32xf32>
    %555 = arith.mulf %553, %554 : vector<8x32xf32>
    %556 = arith.mulf %555, %458 : vector<8x32xf32>
    %557 = arith.addf %551, %556 : vector<8x32xf32>
    %cst_125 = arith.constant -1.800000e+00 : f32
    %558 = vector.broadcast %cst_125 : f32 to vector<8x32xf32>
    %559 = arith.subf %350, %558 : vector<8x32xf32>
    %cst_126 = arith.constant 1.250000e+00 : f32
    %560 = vector.broadcast %cst_126 : f32 to vector<8x32xf32>
    %561 = arith.mulf %559, %560 : vector<8x32xf32>
    %562 = arith.mulf %561, %458 : vector<8x32xf32>
    %cst_127 = arith.constant -6.000000e-01 : f32
    %563 = vector.broadcast %cst_127 : f32 to vector<8x32xf32>
    %564 = arith.subf %563, %350 : vector<8x32xf32>
    %cst_128 = arith.constant 1.250000e+00 : f32
    %565 = vector.broadcast %cst_128 : f32 to vector<8x32xf32>
    %566 = arith.mulf %564, %565 : vector<8x32xf32>
    %567 = arith.mulf %566, %469 : vector<8x32xf32>
    %568 = arith.addf %562, %567 : vector<8x32xf32>
    %cst_129 = arith.constant -1.400000e+00 : f32
    %569 = vector.broadcast %cst_129 : f32 to vector<8x32xf32>
    %570 = arith.subf %350, %569 : vector<8x32xf32>
    %cst_130 = arith.constant 1.250000e+00 : f32
    %571 = vector.broadcast %cst_130 : f32 to vector<8x32xf32>
    %572 = arith.mulf %570, %571 : vector<8x32xf32>
    %573 = arith.mulf %572, %469 : vector<8x32xf32>
    %cst_131 = arith.constant -2.000000e-01 : f32
    %574 = vector.broadcast %cst_131 : f32 to vector<8x32xf32>
    %575 = arith.subf %574, %350 : vector<8x32xf32>
    %cst_132 = arith.constant 1.250000e+00 : f32
    %576 = vector.broadcast %cst_132 : f32 to vector<8x32xf32>
    %577 = arith.mulf %575, %576 : vector<8x32xf32>
    %578 = arith.mulf %577, %480 : vector<8x32xf32>
    %579 = arith.addf %573, %578 : vector<8x32xf32>
    %cst_133 = arith.constant -1.000000e+00 : f32
    %580 = vector.broadcast %cst_133 : f32 to vector<8x32xf32>
    %581 = arith.subf %350, %580 : vector<8x32xf32>
    %cst_134 = arith.constant 1.250000e+00 : f32
    %582 = vector.broadcast %cst_134 : f32 to vector<8x32xf32>
    %583 = arith.mulf %581, %582 : vector<8x32xf32>
    %584 = arith.mulf %583, %480 : vector<8x32xf32>
    %cst_135 = arith.constant 2.000000e-01 : f32
    %585 = vector.broadcast %cst_135 : f32 to vector<8x32xf32>
    %586 = arith.subf %585, %350 : vector<8x32xf32>
    %cst_136 = arith.constant 1.250000e+00 : f32
    %587 = vector.broadcast %cst_136 : f32 to vector<8x32xf32>
    %588 = arith.mulf %586, %587 : vector<8x32xf32>
    %589 = arith.mulf %588, %491 : vector<8x32xf32>
    %590 = arith.addf %584, %589 : vector<8x32xf32>
    %cst_137 = arith.constant -6.000000e-01 : f32
    %591 = vector.broadcast %cst_137 : f32 to vector<8x32xf32>
    %592 = arith.subf %350, %591 : vector<8x32xf32>
    %cst_138 = arith.constant 1.250000e+00 : f32
    %593 = vector.broadcast %cst_138 : f32 to vector<8x32xf32>
    %594 = arith.mulf %592, %593 : vector<8x32xf32>
    %595 = arith.mulf %594, %491 : vector<8x32xf32>
    %cst_139 = arith.constant 6.000000e-01 : f32
    %596 = vector.broadcast %cst_139 : f32 to vector<8x32xf32>
    %597 = arith.subf %596, %350 : vector<8x32xf32>
    %cst_140 = arith.constant 1.250000e+00 : f32
    %598 = vector.broadcast %cst_140 : f32 to vector<8x32xf32>
    %599 = arith.mulf %597, %598 : vector<8x32xf32>
    %600 = arith.mulf %599, %502 : vector<8x32xf32>
    %601 = arith.addf %595, %600 : vector<8x32xf32>
    %cst_141 = arith.constant -2.000000e-01 : f32
    %602 = vector.broadcast %cst_141 : f32 to vector<8x32xf32>
    %603 = arith.subf %350, %602 : vector<8x32xf32>
    %cst_142 = arith.constant 1.250000e+00 : f32
    %604 = vector.broadcast %cst_142 : f32 to vector<8x32xf32>
    %605 = arith.mulf %603, %604 : vector<8x32xf32>
    %606 = arith.mulf %605, %502 : vector<8x32xf32>
    %cst_143 = arith.constant 1.000000e+00 : f32
    %607 = vector.broadcast %cst_143 : f32 to vector<8x32xf32>
    %608 = arith.subf %607, %350 : vector<8x32xf32>
    %cst_144 = arith.constant 1.250000e+00 : f32
    %609 = vector.broadcast %cst_144 : f32 to vector<8x32xf32>
    %610 = arith.mulf %608, %609 : vector<8x32xf32>
    %611 = arith.mulf %610, %513 : vector<8x32xf32>
    %612 = arith.addf %606, %611 : vector<8x32xf32>
    %cst_145 = arith.constant 2.000000e-01 : f32
    %613 = vector.broadcast %cst_145 : f32 to vector<8x32xf32>
    %614 = arith.subf %350, %613 : vector<8x32xf32>
    %cst_146 = arith.constant 1.250000e+00 : f32
    %615 = vector.broadcast %cst_146 : f32 to vector<8x32xf32>
    %616 = arith.mulf %614, %615 : vector<8x32xf32>
    %617 = arith.mulf %616, %513 : vector<8x32xf32>
    %cst_147 = arith.constant 1.400000e+00 : f32
    %618 = vector.broadcast %cst_147 : f32 to vector<8x32xf32>
    %619 = arith.subf %618, %350 : vector<8x32xf32>
    %cst_148 = arith.constant 1.250000e+00 : f32
    %620 = vector.broadcast %cst_148 : f32 to vector<8x32xf32>
    %621 = arith.mulf %619, %620 : vector<8x32xf32>
    %622 = arith.mulf %621, %524 : vector<8x32xf32>
    %623 = arith.addf %617, %622 : vector<8x32xf32>
    %cst_149 = arith.constant 6.000000e-01 : f32
    %624 = vector.broadcast %cst_149 : f32 to vector<8x32xf32>
    %625 = arith.subf %350, %624 : vector<8x32xf32>
    %cst_150 = arith.constant 1.250000e+00 : f32
    %626 = vector.broadcast %cst_150 : f32 to vector<8x32xf32>
    %627 = arith.mulf %625, %626 : vector<8x32xf32>
    %628 = arith.mulf %627, %524 : vector<8x32xf32>
    %cst_151 = arith.constant 1.800000e+00 : f32
    %629 = vector.broadcast %cst_151 : f32 to vector<8x32xf32>
    %630 = arith.subf %629, %350 : vector<8x32xf32>
    %cst_152 = arith.constant 1.250000e+00 : f32
    %631 = vector.broadcast %cst_152 : f32 to vector<8x32xf32>
    %632 = arith.mulf %630, %631 : vector<8x32xf32>
    %633 = arith.mulf %632, %535 : vector<8x32xf32>
    %634 = arith.addf %628, %633 : vector<8x32xf32>
    %cst_153 = arith.constant 1.000000e+00 : f32
    %635 = vector.broadcast %cst_153 : f32 to vector<8x32xf32>
    %636 = arith.subf %350, %635 : vector<8x32xf32>
    %cst_154 = arith.constant 1.250000e+00 : f32
    %637 = vector.broadcast %cst_154 : f32 to vector<8x32xf32>
    %638 = arith.mulf %636, %637 : vector<8x32xf32>
    %639 = arith.mulf %638, %535 : vector<8x32xf32>
    %cst_155 = arith.constant 2.200000e+00 : f32
    %640 = vector.broadcast %cst_155 : f32 to vector<8x32xf32>
    %641 = arith.subf %640, %350 : vector<8x32xf32>
    %cst_156 = arith.constant 1.250000e+00 : f32
    %642 = vector.broadcast %cst_156 : f32 to vector<8x32xf32>
    %643 = arith.mulf %641, %642 : vector<8x32xf32>
    %644 = arith.mulf %643, %546 : vector<8x32xf32>
    %645 = arith.addf %639, %644 : vector<8x32xf32>
    %cst_157 = arith.constant -2.200000e+00 : f32
    %646 = vector.broadcast %cst_157 : f32 to vector<8x32xf32>
    %647 = arith.subf %350, %646 : vector<8x32xf32>
    %cst_158 = arith.constant 0.833333313 : f32
    %648 = vector.broadcast %cst_158 : f32 to vector<8x32xf32>
    %649 = arith.mulf %647, %648 : vector<8x32xf32>
    %650 = arith.mulf %649, %557 : vector<8x32xf32>
    %cst_159 = arith.constant -6.000000e-01 : f32
    %651 = vector.broadcast %cst_159 : f32 to vector<8x32xf32>
    %652 = arith.subf %651, %350 : vector<8x32xf32>
    %cst_160 = arith.constant 0.833333313 : f32
    %653 = vector.broadcast %cst_160 : f32 to vector<8x32xf32>
    %654 = arith.mulf %652, %653 : vector<8x32xf32>
    %655 = arith.mulf %654, %568 : vector<8x32xf32>
    %656 = arith.addf %650, %655 : vector<8x32xf32>
    %cst_161 = arith.constant -1.800000e+00 : f32
    %657 = vector.broadcast %cst_161 : f32 to vector<8x32xf32>
    %658 = arith.subf %350, %657 : vector<8x32xf32>
    %cst_162 = arith.constant 0.833333313 : f32
    %659 = vector.broadcast %cst_162 : f32 to vector<8x32xf32>
    %660 = arith.mulf %658, %659 : vector<8x32xf32>
    %661 = arith.mulf %660, %568 : vector<8x32xf32>
    %cst_163 = arith.constant -2.000000e-01 : f32
    %662 = vector.broadcast %cst_163 : f32 to vector<8x32xf32>
    %663 = arith.subf %662, %350 : vector<8x32xf32>
    %cst_164 = arith.constant 0.833333313 : f32
    %664 = vector.broadcast %cst_164 : f32 to vector<8x32xf32>
    %665 = arith.mulf %663, %664 : vector<8x32xf32>
    %666 = arith.mulf %665, %579 : vector<8x32xf32>
    %667 = arith.addf %661, %666 : vector<8x32xf32>
    %cst_165 = arith.constant -1.400000e+00 : f32
    %668 = vector.broadcast %cst_165 : f32 to vector<8x32xf32>
    %669 = arith.subf %350, %668 : vector<8x32xf32>
    %cst_166 = arith.constant 0.833333313 : f32
    %670 = vector.broadcast %cst_166 : f32 to vector<8x32xf32>
    %671 = arith.mulf %669, %670 : vector<8x32xf32>
    %672 = arith.mulf %671, %579 : vector<8x32xf32>
    %cst_167 = arith.constant 2.000000e-01 : f32
    %673 = vector.broadcast %cst_167 : f32 to vector<8x32xf32>
    %674 = arith.subf %673, %350 : vector<8x32xf32>
    %cst_168 = arith.constant 0.833333313 : f32
    %675 = vector.broadcast %cst_168 : f32 to vector<8x32xf32>
    %676 = arith.mulf %674, %675 : vector<8x32xf32>
    %677 = arith.mulf %676, %590 : vector<8x32xf32>
    %678 = arith.addf %672, %677 : vector<8x32xf32>
    %cst_169 = arith.constant -1.000000e+00 : f32
    %679 = vector.broadcast %cst_169 : f32 to vector<8x32xf32>
    %680 = arith.subf %350, %679 : vector<8x32xf32>
    %cst_170 = arith.constant 0.833333313 : f32
    %681 = vector.broadcast %cst_170 : f32 to vector<8x32xf32>
    %682 = arith.mulf %680, %681 : vector<8x32xf32>
    %683 = arith.mulf %682, %590 : vector<8x32xf32>
    %cst_171 = arith.constant 6.000000e-01 : f32
    %684 = vector.broadcast %cst_171 : f32 to vector<8x32xf32>
    %685 = arith.subf %684, %350 : vector<8x32xf32>
    %cst_172 = arith.constant 0.833333313 : f32
    %686 = vector.broadcast %cst_172 : f32 to vector<8x32xf32>
    %687 = arith.mulf %685, %686 : vector<8x32xf32>
    %688 = arith.mulf %687, %601 : vector<8x32xf32>
    %689 = arith.addf %683, %688 : vector<8x32xf32>
    %cst_173 = arith.constant -6.000000e-01 : f32
    %690 = vector.broadcast %cst_173 : f32 to vector<8x32xf32>
    %691 = arith.subf %350, %690 : vector<8x32xf32>
    %cst_174 = arith.constant 0.833333313 : f32
    %692 = vector.broadcast %cst_174 : f32 to vector<8x32xf32>
    %693 = arith.mulf %691, %692 : vector<8x32xf32>
    %694 = arith.mulf %693, %601 : vector<8x32xf32>
    %cst_175 = arith.constant 1.000000e+00 : f32
    %695 = vector.broadcast %cst_175 : f32 to vector<8x32xf32>
    %696 = arith.subf %695, %350 : vector<8x32xf32>
    %cst_176 = arith.constant 0.833333313 : f32
    %697 = vector.broadcast %cst_176 : f32 to vector<8x32xf32>
    %698 = arith.mulf %696, %697 : vector<8x32xf32>
    %699 = arith.mulf %698, %612 : vector<8x32xf32>
    %700 = arith.addf %694, %699 : vector<8x32xf32>
    %cst_177 = arith.constant -2.000000e-01 : f32
    %701 = vector.broadcast %cst_177 : f32 to vector<8x32xf32>
    %702 = arith.subf %350, %701 : vector<8x32xf32>
    %cst_178 = arith.constant 0.833333313 : f32
    %703 = vector.broadcast %cst_178 : f32 to vector<8x32xf32>
    %704 = arith.mulf %702, %703 : vector<8x32xf32>
    %705 = arith.mulf %704, %612 : vector<8x32xf32>
    %cst_179 = arith.constant 1.400000e+00 : f32
    %706 = vector.broadcast %cst_179 : f32 to vector<8x32xf32>
    %707 = arith.subf %706, %350 : vector<8x32xf32>
    %cst_180 = arith.constant 0.833333313 : f32
    %708 = vector.broadcast %cst_180 : f32 to vector<8x32xf32>
    %709 = arith.mulf %707, %708 : vector<8x32xf32>
    %710 = arith.mulf %709, %623 : vector<8x32xf32>
    %711 = arith.addf %705, %710 : vector<8x32xf32>
    %cst_181 = arith.constant 2.000000e-01 : f32
    %712 = vector.broadcast %cst_181 : f32 to vector<8x32xf32>
    %713 = arith.subf %350, %712 : vector<8x32xf32>
    %cst_182 = arith.constant 0.833333313 : f32
    %714 = vector.broadcast %cst_182 : f32 to vector<8x32xf32>
    %715 = arith.mulf %713, %714 : vector<8x32xf32>
    %716 = arith.mulf %715, %623 : vector<8x32xf32>
    %cst_183 = arith.constant 1.800000e+00 : f32
    %717 = vector.broadcast %cst_183 : f32 to vector<8x32xf32>
    %718 = arith.subf %717, %350 : vector<8x32xf32>
    %cst_184 = arith.constant 0.833333313 : f32
    %719 = vector.broadcast %cst_184 : f32 to vector<8x32xf32>
    %720 = arith.mulf %718, %719 : vector<8x32xf32>
    %721 = arith.mulf %720, %634 : vector<8x32xf32>
    %722 = arith.addf %716, %721 : vector<8x32xf32>
    %cst_185 = arith.constant 6.000000e-01 : f32
    %723 = vector.broadcast %cst_185 : f32 to vector<8x32xf32>
    %724 = arith.subf %350, %723 : vector<8x32xf32>
    %cst_186 = arith.constant 0.833333313 : f32
    %725 = vector.broadcast %cst_186 : f32 to vector<8x32xf32>
    %726 = arith.mulf %724, %725 : vector<8x32xf32>
    %727 = arith.mulf %726, %634 : vector<8x32xf32>
    %cst_187 = arith.constant 2.200000e+00 : f32
    %728 = vector.broadcast %cst_187 : f32 to vector<8x32xf32>
    %729 = arith.subf %728, %350 : vector<8x32xf32>
    %cst_188 = arith.constant 0.833333313 : f32
    %730 = vector.broadcast %cst_188 : f32 to vector<8x32xf32>
    %731 = arith.mulf %729, %730 : vector<8x32xf32>
    %732 = arith.mulf %731, %645 : vector<8x32xf32>
    %733 = arith.addf %727, %732 : vector<8x32xf32>
    %734 = tpu.concatenate %656, %667, %678, %689, %700, %711, %722, %733 in 1 : vector<8x32xf32>, vector<8x32xf32>, vector<8x32xf32>, vector<8x32xf32>, vector<8x32xf32>, vector<8x32xf32>, vector<8x32xf32>, vector<8x32xf32> -> vector<8x256xf32>
    %cst_189 = arith.constant dense<0.000000e+00> : vector<8x64xf32>
    %735 = tpu.matmul %734, %352, %cst_189 {dimension_numbers = #tpu.dot_dimension_numbers<[1], [0], [0], [1], [0, 0, 1, 1], [], []>} : vector<8x256xf32>, vector<256x64xf32>, vector<8x64xf32> -> vector<8x64xf32>
    %736 = arith.addf %359, %735 : vector<8x64xf32>
    %c0_190 = arith.constant 0 : index
    %c0_191 = arith.constant 0 : index
    %737 = vector.load %arg9[%c0_190, %c0_191] : memref<64x128xf32, #tpu.memory_space<vmem>>, vector<64x128xf32>
    %c0_192 = arith.constant 0 : index
    %c0_193 = arith.constant 0 : index
    %738 = vector.load %arg10[%c0_192, %c0_193] : memref<512x128xf32, #tpu.memory_space<vmem>>, vector<512x128xf32>
    %739 = arith.negf %736 : vector<8x64xf32>
    %740 = math.exp %739 : vector<8x64xf32>
    %cst_194 = arith.constant 1.000000e+00 : f32
    %741 = vector.broadcast %cst_194 : f32 to vector<8x64xf32>
    %742 = arith.addf %741, %740 : vector<8x64xf32>
    %743 = arith.divf %741, %742 : vector<8x64xf32>
    %744 = arith.mulf %736, %743 : vector<8x64xf32>
    %cst_195 = arith.constant dense<0.000000e+00> : vector<8x128xf32>
    %745 = tpu.matmul %744, %737, %cst_195 {dimension_numbers = #tpu.dot_dimension_numbers<[1], [0], [0], [1], [0, 0, 1, 1], [], []>} : vector<8x64xf32>, vector<64x128xf32>, vector<8x128xf32> -> vector<8x128xf32>
    %cst_196 = arith.constant -2.200000e+00 : f32
    %746 = vector.broadcast %cst_196 : f32 to vector<8x64xf32>
    %747 = arith.cmpf oge, %736, %746 : vector<8x64xf32>
    %cst_197 = arith.constant -1.800000e+00 : f32
    %748 = vector.broadcast %cst_197 : f32 to vector<8x64xf32>
    %749 = arith.cmpf olt, %736, %748 : vector<8x64xf32>
    %750 = arith.andi %747, %749 : vector<8x64xi1>
    %751 = arith.extui %750 : vector<8x64xi1> to vector<8x64xi32>
    %752 = arith.sitofp %751 : vector<8x64xi32> to vector<8x64xf32>
    %cst_198 = arith.constant -1.800000e+00 : f32
    %753 = vector.broadcast %cst_198 : f32 to vector<8x64xf32>
    %754 = arith.cmpf oge, %736, %753 : vector<8x64xf32>
    %cst_199 = arith.constant -1.400000e+00 : f32
    %755 = vector.broadcast %cst_199 : f32 to vector<8x64xf32>
    %756 = arith.cmpf olt, %736, %755 : vector<8x64xf32>
    %757 = arith.andi %754, %756 : vector<8x64xi1>
    %758 = arith.extui %757 : vector<8x64xi1> to vector<8x64xi32>
    %759 = arith.sitofp %758 : vector<8x64xi32> to vector<8x64xf32>
    %cst_200 = arith.constant -1.400000e+00 : f32
    %760 = vector.broadcast %cst_200 : f32 to vector<8x64xf32>
    %761 = arith.cmpf oge, %736, %760 : vector<8x64xf32>
    %cst_201 = arith.constant -1.000000e+00 : f32
    %762 = vector.broadcast %cst_201 : f32 to vector<8x64xf32>
    %763 = arith.cmpf olt, %736, %762 : vector<8x64xf32>
    %764 = arith.andi %761, %763 : vector<8x64xi1>
    %765 = arith.extui %764 : vector<8x64xi1> to vector<8x64xi32>
    %766 = arith.sitofp %765 : vector<8x64xi32> to vector<8x64xf32>
    %cst_202 = arith.constant -1.000000e+00 : f32
    %767 = vector.broadcast %cst_202 : f32 to vector<8x64xf32>
    %768 = arith.cmpf oge, %736, %767 : vector<8x64xf32>
    %cst_203 = arith.constant -6.000000e-01 : f32
    %769 = vector.broadcast %cst_203 : f32 to vector<8x64xf32>
    %770 = arith.cmpf olt, %736, %769 : vector<8x64xf32>
    %771 = arith.andi %768, %770 : vector<8x64xi1>
    %772 = arith.extui %771 : vector<8x64xi1> to vector<8x64xi32>
    %773 = arith.sitofp %772 : vector<8x64xi32> to vector<8x64xf32>
    %cst_204 = arith.constant -6.000000e-01 : f32
    %774 = vector.broadcast %cst_204 : f32 to vector<8x64xf32>
    %775 = arith.cmpf oge, %736, %774 : vector<8x64xf32>
    %cst_205 = arith.constant -2.000000e-01 : f32
    %776 = vector.broadcast %cst_205 : f32 to vector<8x64xf32>
    %777 = arith.cmpf olt, %736, %776 : vector<8x64xf32>
    %778 = arith.andi %775, %777 : vector<8x64xi1>
    %779 = arith.extui %778 : vector<8x64xi1> to vector<8x64xi32>
    %780 = arith.sitofp %779 : vector<8x64xi32> to vector<8x64xf32>
    %cst_206 = arith.constant -2.000000e-01 : f32
    %781 = vector.broadcast %cst_206 : f32 to vector<8x64xf32>
    %782 = arith.cmpf oge, %736, %781 : vector<8x64xf32>
    %cst_207 = arith.constant 2.000000e-01 : f32
    %783 = vector.broadcast %cst_207 : f32 to vector<8x64xf32>
    %784 = arith.cmpf olt, %736, %783 : vector<8x64xf32>
    %785 = arith.andi %782, %784 : vector<8x64xi1>
    %786 = arith.extui %785 : vector<8x64xi1> to vector<8x64xi32>
    %787 = arith.sitofp %786 : vector<8x64xi32> to vector<8x64xf32>
    %cst_208 = arith.constant 2.000000e-01 : f32
    %788 = vector.broadcast %cst_208 : f32 to vector<8x64xf32>
    %789 = arith.cmpf oge, %736, %788 : vector<8x64xf32>
    %cst_209 = arith.constant 6.000000e-01 : f32
    %790 = vector.broadcast %cst_209 : f32 to vector<8x64xf32>
    %791 = arith.cmpf olt, %736, %790 : vector<8x64xf32>
    %792 = arith.andi %789, %791 : vector<8x64xi1>
    %793 = arith.extui %792 : vector<8x64xi1> to vector<8x64xi32>
    %794 = arith.sitofp %793 : vector<8x64xi32> to vector<8x64xf32>
    %cst_210 = arith.constant 6.000000e-01 : f32
    %795 = vector.broadcast %cst_210 : f32 to vector<8x64xf32>
    %796 = arith.cmpf oge, %736, %795 : vector<8x64xf32>
    %cst_211 = arith.constant 1.000000e+00 : f32
    %797 = vector.broadcast %cst_211 : f32 to vector<8x64xf32>
    %798 = arith.cmpf olt, %736, %797 : vector<8x64xf32>
    %799 = arith.andi %796, %798 : vector<8x64xi1>
    %800 = arith.extui %799 : vector<8x64xi1> to vector<8x64xi32>
    %801 = arith.sitofp %800 : vector<8x64xi32> to vector<8x64xf32>
    %cst_212 = arith.constant 1.000000e+00 : f32
    %802 = vector.broadcast %cst_212 : f32 to vector<8x64xf32>
    %803 = arith.cmpf oge, %736, %802 : vector<8x64xf32>
    %cst_213 = arith.constant 1.400000e+00 : f32
    %804 = vector.broadcast %cst_213 : f32 to vector<8x64xf32>
    %805 = arith.cmpf olt, %736, %804 : vector<8x64xf32>
    %806 = arith.andi %803, %805 : vector<8x64xi1>
    %807 = arith.extui %806 : vector<8x64xi1> to vector<8x64xi32>
    %808 = arith.sitofp %807 : vector<8x64xi32> to vector<8x64xf32>
    %cst_214 = arith.constant 1.400000e+00 : f32
    %809 = vector.broadcast %cst_214 : f32 to vector<8x64xf32>
    %810 = arith.cmpf oge, %736, %809 : vector<8x64xf32>
    %cst_215 = arith.constant 1.800000e+00 : f32
    %811 = vector.broadcast %cst_215 : f32 to vector<8x64xf32>
    %812 = arith.cmpf olt, %736, %811 : vector<8x64xf32>
    %813 = arith.andi %810, %812 : vector<8x64xi1>
    %814 = arith.extui %813 : vector<8x64xi1> to vector<8x64xi32>
    %815 = arith.sitofp %814 : vector<8x64xi32> to vector<8x64xf32>
    %cst_216 = arith.constant 1.800000e+00 : f32
    %816 = vector.broadcast %cst_216 : f32 to vector<8x64xf32>
    %817 = arith.cmpf oge, %736, %816 : vector<8x64xf32>
    %cst_217 = arith.constant 2.200000e+00 : f32
    %818 = vector.broadcast %cst_217 : f32 to vector<8x64xf32>
    %819 = arith.cmpf olt, %736, %818 : vector<8x64xf32>
    %820 = arith.andi %817, %819 : vector<8x64xi1>
    %821 = arith.extui %820 : vector<8x64xi1> to vector<8x64xi32>
    %822 = arith.sitofp %821 : vector<8x64xi32> to vector<8x64xf32>
    %cst_218 = arith.constant -2.200000e+00 : f32
    %823 = vector.broadcast %cst_218 : f32 to vector<8x64xf32>
    %824 = arith.subf %736, %823 : vector<8x64xf32>
    %cst_219 = arith.constant 2.500000e+00 : f32
    %825 = vector.broadcast %cst_219 : f32 to vector<8x64xf32>
    %826 = arith.mulf %824, %825 : vector<8x64xf32>
    %827 = arith.mulf %826, %752 : vector<8x64xf32>
    %cst_220 = arith.constant -1.400000e+00 : f32
    %828 = vector.broadcast %cst_220 : f32 to vector<8x64xf32>
    %829 = arith.subf %828, %736 : vector<8x64xf32>
    %cst_221 = arith.constant 2.500000e+00 : f32
    %830 = vector.broadcast %cst_221 : f32 to vector<8x64xf32>
    %831 = arith.mulf %829, %830 : vector<8x64xf32>
    %832 = arith.mulf %831, %759 : vector<8x64xf32>
    %833 = arith.addf %827, %832 : vector<8x64xf32>
    %cst_222 = arith.constant -1.800000e+00 : f32
    %834 = vector.broadcast %cst_222 : f32 to vector<8x64xf32>
    %835 = arith.subf %736, %834 : vector<8x64xf32>
    %cst_223 = arith.constant 2.500000e+00 : f32
    %836 = vector.broadcast %cst_223 : f32 to vector<8x64xf32>
    %837 = arith.mulf %835, %836 : vector<8x64xf32>
    %838 = arith.mulf %837, %759 : vector<8x64xf32>
    %cst_224 = arith.constant -1.000000e+00 : f32
    %839 = vector.broadcast %cst_224 : f32 to vector<8x64xf32>
    %840 = arith.subf %839, %736 : vector<8x64xf32>
    %cst_225 = arith.constant 2.500000e+00 : f32
    %841 = vector.broadcast %cst_225 : f32 to vector<8x64xf32>
    %842 = arith.mulf %840, %841 : vector<8x64xf32>
    %843 = arith.mulf %842, %766 : vector<8x64xf32>
    %844 = arith.addf %838, %843 : vector<8x64xf32>
    %cst_226 = arith.constant -1.400000e+00 : f32
    %845 = vector.broadcast %cst_226 : f32 to vector<8x64xf32>
    %846 = arith.subf %736, %845 : vector<8x64xf32>
    %cst_227 = arith.constant 2.500000e+00 : f32
    %847 = vector.broadcast %cst_227 : f32 to vector<8x64xf32>
    %848 = arith.mulf %846, %847 : vector<8x64xf32>
    %849 = arith.mulf %848, %766 : vector<8x64xf32>
    %cst_228 = arith.constant -6.000000e-01 : f32
    %850 = vector.broadcast %cst_228 : f32 to vector<8x64xf32>
    %851 = arith.subf %850, %736 : vector<8x64xf32>
    %cst_229 = arith.constant 2.500000e+00 : f32
    %852 = vector.broadcast %cst_229 : f32 to vector<8x64xf32>
    %853 = arith.mulf %851, %852 : vector<8x64xf32>
    %854 = arith.mulf %853, %773 : vector<8x64xf32>
    %855 = arith.addf %849, %854 : vector<8x64xf32>
    %cst_230 = arith.constant -1.000000e+00 : f32
    %856 = vector.broadcast %cst_230 : f32 to vector<8x64xf32>
    %857 = arith.subf %736, %856 : vector<8x64xf32>
    %cst_231 = arith.constant 2.500000e+00 : f32
    %858 = vector.broadcast %cst_231 : f32 to vector<8x64xf32>
    %859 = arith.mulf %857, %858 : vector<8x64xf32>
    %860 = arith.mulf %859, %773 : vector<8x64xf32>
    %cst_232 = arith.constant -2.000000e-01 : f32
    %861 = vector.broadcast %cst_232 : f32 to vector<8x64xf32>
    %862 = arith.subf %861, %736 : vector<8x64xf32>
    %cst_233 = arith.constant 2.500000e+00 : f32
    %863 = vector.broadcast %cst_233 : f32 to vector<8x64xf32>
    %864 = arith.mulf %862, %863 : vector<8x64xf32>
    %865 = arith.mulf %864, %780 : vector<8x64xf32>
    %866 = arith.addf %860, %865 : vector<8x64xf32>
    %cst_234 = arith.constant -6.000000e-01 : f32
    %867 = vector.broadcast %cst_234 : f32 to vector<8x64xf32>
    %868 = arith.subf %736, %867 : vector<8x64xf32>
    %cst_235 = arith.constant 2.500000e+00 : f32
    %869 = vector.broadcast %cst_235 : f32 to vector<8x64xf32>
    %870 = arith.mulf %868, %869 : vector<8x64xf32>
    %871 = arith.mulf %870, %780 : vector<8x64xf32>
    %cst_236 = arith.constant 2.000000e-01 : f32
    %872 = vector.broadcast %cst_236 : f32 to vector<8x64xf32>
    %873 = arith.subf %872, %736 : vector<8x64xf32>
    %cst_237 = arith.constant 2.500000e+00 : f32
    %874 = vector.broadcast %cst_237 : f32 to vector<8x64xf32>
    %875 = arith.mulf %873, %874 : vector<8x64xf32>
    %876 = arith.mulf %875, %787 : vector<8x64xf32>
    %877 = arith.addf %871, %876 : vector<8x64xf32>
    %cst_238 = arith.constant -2.000000e-01 : f32
    %878 = vector.broadcast %cst_238 : f32 to vector<8x64xf32>
    %879 = arith.subf %736, %878 : vector<8x64xf32>
    %cst_239 = arith.constant 2.500000e+00 : f32
    %880 = vector.broadcast %cst_239 : f32 to vector<8x64xf32>
    %881 = arith.mulf %879, %880 : vector<8x64xf32>
    %882 = arith.mulf %881, %787 : vector<8x64xf32>
    %cst_240 = arith.constant 6.000000e-01 : f32
    %883 = vector.broadcast %cst_240 : f32 to vector<8x64xf32>
    %884 = arith.subf %883, %736 : vector<8x64xf32>
    %cst_241 = arith.constant 2.500000e+00 : f32
    %885 = vector.broadcast %cst_241 : f32 to vector<8x64xf32>
    %886 = arith.mulf %884, %885 : vector<8x64xf32>
    %887 = arith.mulf %886, %794 : vector<8x64xf32>
    %888 = arith.addf %882, %887 : vector<8x64xf32>
    %cst_242 = arith.constant 2.000000e-01 : f32
    %889 = vector.broadcast %cst_242 : f32 to vector<8x64xf32>
    %890 = arith.subf %736, %889 : vector<8x64xf32>
    %cst_243 = arith.constant 2.500000e+00 : f32
    %891 = vector.broadcast %cst_243 : f32 to vector<8x64xf32>
    %892 = arith.mulf %890, %891 : vector<8x64xf32>
    %893 = arith.mulf %892, %794 : vector<8x64xf32>
    %cst_244 = arith.constant 1.000000e+00 : f32
    %894 = vector.broadcast %cst_244 : f32 to vector<8x64xf32>
    %895 = arith.subf %894, %736 : vector<8x64xf32>
    %cst_245 = arith.constant 2.500000e+00 : f32
    %896 = vector.broadcast %cst_245 : f32 to vector<8x64xf32>
    %897 = arith.mulf %895, %896 : vector<8x64xf32>
    %898 = arith.mulf %897, %801 : vector<8x64xf32>
    %899 = arith.addf %893, %898 : vector<8x64xf32>
    %cst_246 = arith.constant 6.000000e-01 : f32
    %900 = vector.broadcast %cst_246 : f32 to vector<8x64xf32>
    %901 = arith.subf %736, %900 : vector<8x64xf32>
    %cst_247 = arith.constant 2.500000e+00 : f32
    %902 = vector.broadcast %cst_247 : f32 to vector<8x64xf32>
    %903 = arith.mulf %901, %902 : vector<8x64xf32>
    %904 = arith.mulf %903, %801 : vector<8x64xf32>
    %cst_248 = arith.constant 1.400000e+00 : f32
    %905 = vector.broadcast %cst_248 : f32 to vector<8x64xf32>
    %906 = arith.subf %905, %736 : vector<8x64xf32>
    %cst_249 = arith.constant 2.500000e+00 : f32
    %907 = vector.broadcast %cst_249 : f32 to vector<8x64xf32>
    %908 = arith.mulf %906, %907 : vector<8x64xf32>
    %909 = arith.mulf %908, %808 : vector<8x64xf32>
    %910 = arith.addf %904, %909 : vector<8x64xf32>
    %cst_250 = arith.constant 1.000000e+00 : f32
    %911 = vector.broadcast %cst_250 : f32 to vector<8x64xf32>
    %912 = arith.subf %736, %911 : vector<8x64xf32>
    %cst_251 = arith.constant 2.500000e+00 : f32
    %913 = vector.broadcast %cst_251 : f32 to vector<8x64xf32>
    %914 = arith.mulf %912, %913 : vector<8x64xf32>
    %915 = arith.mulf %914, %808 : vector<8x64xf32>
    %cst_252 = arith.constant 1.800000e+00 : f32
    %916 = vector.broadcast %cst_252 : f32 to vector<8x64xf32>
    %917 = arith.subf %916, %736 : vector<8x64xf32>
    %cst_253 = arith.constant 2.500000e+00 : f32
    %918 = vector.broadcast %cst_253 : f32 to vector<8x64xf32>
    %919 = arith.mulf %917, %918 : vector<8x64xf32>
    %920 = arith.mulf %919, %815 : vector<8x64xf32>
    %921 = arith.addf %915, %920 : vector<8x64xf32>
    %cst_254 = arith.constant 1.400000e+00 : f32
    %922 = vector.broadcast %cst_254 : f32 to vector<8x64xf32>
    %923 = arith.subf %736, %922 : vector<8x64xf32>
    %cst_255 = arith.constant 2.500000e+00 : f32
    %924 = vector.broadcast %cst_255 : f32 to vector<8x64xf32>
    %925 = arith.mulf %923, %924 : vector<8x64xf32>
    %926 = arith.mulf %925, %815 : vector<8x64xf32>
    %cst_256 = arith.constant 2.200000e+00 : f32
    %927 = vector.broadcast %cst_256 : f32 to vector<8x64xf32>
    %928 = arith.subf %927, %736 : vector<8x64xf32>
    %cst_257 = arith.constant 2.500000e+00 : f32
    %929 = vector.broadcast %cst_257 : f32 to vector<8x64xf32>
    %930 = arith.mulf %928, %929 : vector<8x64xf32>
    %931 = arith.mulf %930, %822 : vector<8x64xf32>
    %932 = arith.addf %926, %931 : vector<8x64xf32>
    %cst_258 = arith.constant -2.200000e+00 : f32
    %933 = vector.broadcast %cst_258 : f32 to vector<8x64xf32>
    %934 = arith.subf %736, %933 : vector<8x64xf32>
    %cst_259 = arith.constant 1.250000e+00 : f32
    %935 = vector.broadcast %cst_259 : f32 to vector<8x64xf32>
    %936 = arith.mulf %934, %935 : vector<8x64xf32>
    %937 = arith.mulf %936, %833 : vector<8x64xf32>
    %cst_260 = arith.constant -1.000000e+00 : f32
    %938 = vector.broadcast %cst_260 : f32 to vector<8x64xf32>
    %939 = arith.subf %938, %736 : vector<8x64xf32>
    %cst_261 = arith.constant 1.250000e+00 : f32
    %940 = vector.broadcast %cst_261 : f32 to vector<8x64xf32>
    %941 = arith.mulf %939, %940 : vector<8x64xf32>
    %942 = arith.mulf %941, %844 : vector<8x64xf32>
    %943 = arith.addf %937, %942 : vector<8x64xf32>
    %cst_262 = arith.constant -1.800000e+00 : f32
    %944 = vector.broadcast %cst_262 : f32 to vector<8x64xf32>
    %945 = arith.subf %736, %944 : vector<8x64xf32>
    %cst_263 = arith.constant 1.250000e+00 : f32
    %946 = vector.broadcast %cst_263 : f32 to vector<8x64xf32>
    %947 = arith.mulf %945, %946 : vector<8x64xf32>
    %948 = arith.mulf %947, %844 : vector<8x64xf32>
    %cst_264 = arith.constant -6.000000e-01 : f32
    %949 = vector.broadcast %cst_264 : f32 to vector<8x64xf32>
    %950 = arith.subf %949, %736 : vector<8x64xf32>
    %cst_265 = arith.constant 1.250000e+00 : f32
    %951 = vector.broadcast %cst_265 : f32 to vector<8x64xf32>
    %952 = arith.mulf %950, %951 : vector<8x64xf32>
    %953 = arith.mulf %952, %855 : vector<8x64xf32>
    %954 = arith.addf %948, %953 : vector<8x64xf32>
    %cst_266 = arith.constant -1.400000e+00 : f32
    %955 = vector.broadcast %cst_266 : f32 to vector<8x64xf32>
    %956 = arith.subf %736, %955 : vector<8x64xf32>
    %cst_267 = arith.constant 1.250000e+00 : f32
    %957 = vector.broadcast %cst_267 : f32 to vector<8x64xf32>
    %958 = arith.mulf %956, %957 : vector<8x64xf32>
    %959 = arith.mulf %958, %855 : vector<8x64xf32>
    %cst_268 = arith.constant -2.000000e-01 : f32
    %960 = vector.broadcast %cst_268 : f32 to vector<8x64xf32>
    %961 = arith.subf %960, %736 : vector<8x64xf32>
    %cst_269 = arith.constant 1.250000e+00 : f32
    %962 = vector.broadcast %cst_269 : f32 to vector<8x64xf32>
    %963 = arith.mulf %961, %962 : vector<8x64xf32>
    %964 = arith.mulf %963, %866 : vector<8x64xf32>
    %965 = arith.addf %959, %964 : vector<8x64xf32>
    %cst_270 = arith.constant -1.000000e+00 : f32
    %966 = vector.broadcast %cst_270 : f32 to vector<8x64xf32>
    %967 = arith.subf %736, %966 : vector<8x64xf32>
    %cst_271 = arith.constant 1.250000e+00 : f32
    %968 = vector.broadcast %cst_271 : f32 to vector<8x64xf32>
    %969 = arith.mulf %967, %968 : vector<8x64xf32>
    %970 = arith.mulf %969, %866 : vector<8x64xf32>
    %cst_272 = arith.constant 2.000000e-01 : f32
    %971 = vector.broadcast %cst_272 : f32 to vector<8x64xf32>
    %972 = arith.subf %971, %736 : vector<8x64xf32>
    %cst_273 = arith.constant 1.250000e+00 : f32
    %973 = vector.broadcast %cst_273 : f32 to vector<8x64xf32>
    %974 = arith.mulf %972, %973 : vector<8x64xf32>
    %975 = arith.mulf %974, %877 : vector<8x64xf32>
    %976 = arith.addf %970, %975 : vector<8x64xf32>
    %cst_274 = arith.constant -6.000000e-01 : f32
    %977 = vector.broadcast %cst_274 : f32 to vector<8x64xf32>
    %978 = arith.subf %736, %977 : vector<8x64xf32>
    %cst_275 = arith.constant 1.250000e+00 : f32
    %979 = vector.broadcast %cst_275 : f32 to vector<8x64xf32>
    %980 = arith.mulf %978, %979 : vector<8x64xf32>
    %981 = arith.mulf %980, %877 : vector<8x64xf32>
    %cst_276 = arith.constant 6.000000e-01 : f32
    %982 = vector.broadcast %cst_276 : f32 to vector<8x64xf32>
    %983 = arith.subf %982, %736 : vector<8x64xf32>
    %cst_277 = arith.constant 1.250000e+00 : f32
    %984 = vector.broadcast %cst_277 : f32 to vector<8x64xf32>
    %985 = arith.mulf %983, %984 : vector<8x64xf32>
    %986 = arith.mulf %985, %888 : vector<8x64xf32>
    %987 = arith.addf %981, %986 : vector<8x64xf32>
    %cst_278 = arith.constant -2.000000e-01 : f32
    %988 = vector.broadcast %cst_278 : f32 to vector<8x64xf32>
    %989 = arith.subf %736, %988 : vector<8x64xf32>
    %cst_279 = arith.constant 1.250000e+00 : f32
    %990 = vector.broadcast %cst_279 : f32 to vector<8x64xf32>
    %991 = arith.mulf %989, %990 : vector<8x64xf32>
    %992 = arith.mulf %991, %888 : vector<8x64xf32>
    %cst_280 = arith.constant 1.000000e+00 : f32
    %993 = vector.broadcast %cst_280 : f32 to vector<8x64xf32>
    %994 = arith.subf %993, %736 : vector<8x64xf32>
    %cst_281 = arith.constant 1.250000e+00 : f32
    %995 = vector.broadcast %cst_281 : f32 to vector<8x64xf32>
    %996 = arith.mulf %994, %995 : vector<8x64xf32>
    %997 = arith.mulf %996, %899 : vector<8x64xf32>
    %998 = arith.addf %992, %997 : vector<8x64xf32>
    %cst_282 = arith.constant 2.000000e-01 : f32
    %999 = vector.broadcast %cst_282 : f32 to vector<8x64xf32>
    %1000 = arith.subf %736, %999 : vector<8x64xf32>
    %cst_283 = arith.constant 1.250000e+00 : f32
    %1001 = vector.broadcast %cst_283 : f32 to vector<8x64xf32>
    %1002 = arith.mulf %1000, %1001 : vector<8x64xf32>
    %1003 = arith.mulf %1002, %899 : vector<8x64xf32>
    %cst_284 = arith.constant 1.400000e+00 : f32
    %1004 = vector.broadcast %cst_284 : f32 to vector<8x64xf32>
    %1005 = arith.subf %1004, %736 : vector<8x64xf32>
    %cst_285 = arith.constant 1.250000e+00 : f32
    %1006 = vector.broadcast %cst_285 : f32 to vector<8x64xf32>
    %1007 = arith.mulf %1005, %1006 : vector<8x64xf32>
    %1008 = arith.mulf %1007, %910 : vector<8x64xf32>
    %1009 = arith.addf %1003, %1008 : vector<8x64xf32>
    %cst_286 = arith.constant 6.000000e-01 : f32
    %1010 = vector.broadcast %cst_286 : f32 to vector<8x64xf32>
    %1011 = arith.subf %736, %1010 : vector<8x64xf32>
    %cst_287 = arith.constant 1.250000e+00 : f32
    %1012 = vector.broadcast %cst_287 : f32 to vector<8x64xf32>
    %1013 = arith.mulf %1011, %1012 : vector<8x64xf32>
    %1014 = arith.mulf %1013, %910 : vector<8x64xf32>
    %cst_288 = arith.constant 1.800000e+00 : f32
    %1015 = vector.broadcast %cst_288 : f32 to vector<8x64xf32>
    %1016 = arith.subf %1015, %736 : vector<8x64xf32>
    %cst_289 = arith.constant 1.250000e+00 : f32
    %1017 = vector.broadcast %cst_289 : f32 to vector<8x64xf32>
    %1018 = arith.mulf %1016, %1017 : vector<8x64xf32>
    %1019 = arith.mulf %1018, %921 : vector<8x64xf32>
    %1020 = arith.addf %1014, %1019 : vector<8x64xf32>
    %cst_290 = arith.constant 1.000000e+00 : f32
    %1021 = vector.broadcast %cst_290 : f32 to vector<8x64xf32>
    %1022 = arith.subf %736, %1021 : vector<8x64xf32>
    %cst_291 = arith.constant 1.250000e+00 : f32
    %1023 = vector.broadcast %cst_291 : f32 to vector<8x64xf32>
    %1024 = arith.mulf %1022, %1023 : vector<8x64xf32>
    %1025 = arith.mulf %1024, %921 : vector<8x64xf32>
    %cst_292 = arith.constant 2.200000e+00 : f32
    %1026 = vector.broadcast %cst_292 : f32 to vector<8x64xf32>
    %1027 = arith.subf %1026, %736 : vector<8x64xf32>
    %cst_293 = arith.constant 1.250000e+00 : f32
    %1028 = vector.broadcast %cst_293 : f32 to vector<8x64xf32>
    %1029 = arith.mulf %1027, %1028 : vector<8x64xf32>
    %1030 = arith.mulf %1029, %932 : vector<8x64xf32>
    %1031 = arith.addf %1025, %1030 : vector<8x64xf32>
    %cst_294 = arith.constant -2.200000e+00 : f32
    %1032 = vector.broadcast %cst_294 : f32 to vector<8x64xf32>
    %1033 = arith.subf %736, %1032 : vector<8x64xf32>
    %cst_295 = arith.constant 0.833333313 : f32
    %1034 = vector.broadcast %cst_295 : f32 to vector<8x64xf32>
    %1035 = arith.mulf %1033, %1034 : vector<8x64xf32>
    %1036 = arith.mulf %1035, %943 : vector<8x64xf32>
    %cst_296 = arith.constant -6.000000e-01 : f32
    %1037 = vector.broadcast %cst_296 : f32 to vector<8x64xf32>
    %1038 = arith.subf %1037, %736 : vector<8x64xf32>
    %cst_297 = arith.constant 0.833333313 : f32
    %1039 = vector.broadcast %cst_297 : f32 to vector<8x64xf32>
    %1040 = arith.mulf %1038, %1039 : vector<8x64xf32>
    %1041 = arith.mulf %1040, %954 : vector<8x64xf32>
    %1042 = arith.addf %1036, %1041 : vector<8x64xf32>
    %cst_298 = arith.constant -1.800000e+00 : f32
    %1043 = vector.broadcast %cst_298 : f32 to vector<8x64xf32>
    %1044 = arith.subf %736, %1043 : vector<8x64xf32>
    %cst_299 = arith.constant 0.833333313 : f32
    %1045 = vector.broadcast %cst_299 : f32 to vector<8x64xf32>
    %1046 = arith.mulf %1044, %1045 : vector<8x64xf32>
    %1047 = arith.mulf %1046, %954 : vector<8x64xf32>
    %cst_300 = arith.constant -2.000000e-01 : f32
    %1048 = vector.broadcast %cst_300 : f32 to vector<8x64xf32>
    %1049 = arith.subf %1048, %736 : vector<8x64xf32>
    %cst_301 = arith.constant 0.833333313 : f32
    %1050 = vector.broadcast %cst_301 : f32 to vector<8x64xf32>
    %1051 = arith.mulf %1049, %1050 : vector<8x64xf32>
    %1052 = arith.mulf %1051, %965 : vector<8x64xf32>
    %1053 = arith.addf %1047, %1052 : vector<8x64xf32>
    %cst_302 = arith.constant -1.400000e+00 : f32
    %1054 = vector.broadcast %cst_302 : f32 to vector<8x64xf32>
    %1055 = arith.subf %736, %1054 : vector<8x64xf32>
    %cst_303 = arith.constant 0.833333313 : f32
    %1056 = vector.broadcast %cst_303 : f32 to vector<8x64xf32>
    %1057 = arith.mulf %1055, %1056 : vector<8x64xf32>
    %1058 = arith.mulf %1057, %965 : vector<8x64xf32>
    %cst_304 = arith.constant 2.000000e-01 : f32
    %1059 = vector.broadcast %cst_304 : f32 to vector<8x64xf32>
    %1060 = arith.subf %1059, %736 : vector<8x64xf32>
    %cst_305 = arith.constant 0.833333313 : f32
    %1061 = vector.broadcast %cst_305 : f32 to vector<8x64xf32>
    %1062 = arith.mulf %1060, %1061 : vector<8x64xf32>
    %1063 = arith.mulf %1062, %976 : vector<8x64xf32>
    %1064 = arith.addf %1058, %1063 : vector<8x64xf32>
    %cst_306 = arith.constant -1.000000e+00 : f32
    %1065 = vector.broadcast %cst_306 : f32 to vector<8x64xf32>
    %1066 = arith.subf %736, %1065 : vector<8x64xf32>
    %cst_307 = arith.constant 0.833333313 : f32
    %1067 = vector.broadcast %cst_307 : f32 to vector<8x64xf32>
    %1068 = arith.mulf %1066, %1067 : vector<8x64xf32>
    %1069 = arith.mulf %1068, %976 : vector<8x64xf32>
    %cst_308 = arith.constant 6.000000e-01 : f32
    %1070 = vector.broadcast %cst_308 : f32 to vector<8x64xf32>
    %1071 = arith.subf %1070, %736 : vector<8x64xf32>
    %cst_309 = arith.constant 0.833333313 : f32
    %1072 = vector.broadcast %cst_309 : f32 to vector<8x64xf32>
    %1073 = arith.mulf %1071, %1072 : vector<8x64xf32>
    %1074 = arith.mulf %1073, %987 : vector<8x64xf32>
    %1075 = arith.addf %1069, %1074 : vector<8x64xf32>
    %cst_310 = arith.constant -6.000000e-01 : f32
    %1076 = vector.broadcast %cst_310 : f32 to vector<8x64xf32>
    %1077 = arith.subf %736, %1076 : vector<8x64xf32>
    %cst_311 = arith.constant 0.833333313 : f32
    %1078 = vector.broadcast %cst_311 : f32 to vector<8x64xf32>
    %1079 = arith.mulf %1077, %1078 : vector<8x64xf32>
    %1080 = arith.mulf %1079, %987 : vector<8x64xf32>
    %cst_312 = arith.constant 1.000000e+00 : f32
    %1081 = vector.broadcast %cst_312 : f32 to vector<8x64xf32>
    %1082 = arith.subf %1081, %736 : vector<8x64xf32>
    %cst_313 = arith.constant 0.833333313 : f32
    %1083 = vector.broadcast %cst_313 : f32 to vector<8x64xf32>
    %1084 = arith.mulf %1082, %1083 : vector<8x64xf32>
    %1085 = arith.mulf %1084, %998 : vector<8x64xf32>
    %1086 = arith.addf %1080, %1085 : vector<8x64xf32>
    %cst_314 = arith.constant -2.000000e-01 : f32
    %1087 = vector.broadcast %cst_314 : f32 to vector<8x64xf32>
    %1088 = arith.subf %736, %1087 : vector<8x64xf32>
    %cst_315 = arith.constant 0.833333313 : f32
    %1089 = vector.broadcast %cst_315 : f32 to vector<8x64xf32>
    %1090 = arith.mulf %1088, %1089 : vector<8x64xf32>
    %1091 = arith.mulf %1090, %998 : vector<8x64xf32>
    %cst_316 = arith.constant 1.400000e+00 : f32
    %1092 = vector.broadcast %cst_316 : f32 to vector<8x64xf32>
    %1093 = arith.subf %1092, %736 : vector<8x64xf32>
    %cst_317 = arith.constant 0.833333313 : f32
    %1094 = vector.broadcast %cst_317 : f32 to vector<8x64xf32>
    %1095 = arith.mulf %1093, %1094 : vector<8x64xf32>
    %1096 = arith.mulf %1095, %1009 : vector<8x64xf32>
    %1097 = arith.addf %1091, %1096 : vector<8x64xf32>
    %cst_318 = arith.constant 2.000000e-01 : f32
    %1098 = vector.broadcast %cst_318 : f32 to vector<8x64xf32>
    %1099 = arith.subf %736, %1098 : vector<8x64xf32>
    %cst_319 = arith.constant 0.833333313 : f32
    %1100 = vector.broadcast %cst_319 : f32 to vector<8x64xf32>
    %1101 = arith.mulf %1099, %1100 : vector<8x64xf32>
    %1102 = arith.mulf %1101, %1009 : vector<8x64xf32>
    %cst_320 = arith.constant 1.800000e+00 : f32
    %1103 = vector.broadcast %cst_320 : f32 to vector<8x64xf32>
    %1104 = arith.subf %1103, %736 : vector<8x64xf32>
    %cst_321 = arith.constant 0.833333313 : f32
    %1105 = vector.broadcast %cst_321 : f32 to vector<8x64xf32>
    %1106 = arith.mulf %1104, %1105 : vector<8x64xf32>
    %1107 = arith.mulf %1106, %1020 : vector<8x64xf32>
    %1108 = arith.addf %1102, %1107 : vector<8x64xf32>
    %cst_322 = arith.constant 6.000000e-01 : f32
    %1109 = vector.broadcast %cst_322 : f32 to vector<8x64xf32>
    %1110 = arith.subf %736, %1109 : vector<8x64xf32>
    %cst_323 = arith.constant 0.833333313 : f32
    %1111 = vector.broadcast %cst_323 : f32 to vector<8x64xf32>
    %1112 = arith.mulf %1110, %1111 : vector<8x64xf32>
    %1113 = arith.mulf %1112, %1020 : vector<8x64xf32>
    %cst_324 = arith.constant 2.200000e+00 : f32
    %1114 = vector.broadcast %cst_324 : f32 to vector<8x64xf32>
    %1115 = arith.subf %1114, %736 : vector<8x64xf32>
    %cst_325 = arith.constant 0.833333313 : f32
    %1116 = vector.broadcast %cst_325 : f32 to vector<8x64xf32>
    %1117 = arith.mulf %1115, %1116 : vector<8x64xf32>
    %1118 = arith.mulf %1117, %1031 : vector<8x64xf32>
    %1119 = arith.addf %1113, %1118 : vector<8x64xf32>
    %1120 = tpu.concatenate %1042, %1053, %1064, %1075, %1086, %1097, %1108, %1119 in 1 : vector<8x64xf32>, vector<8x64xf32>, vector<8x64xf32>, vector<8x64xf32>, vector<8x64xf32>, vector<8x64xf32>, vector<8x64xf32>, vector<8x64xf32> -> vector<8x512xf32>
    %cst_326 = arith.constant dense<0.000000e+00> : vector<8x128xf32>
    %1121 = tpu.matmul %1120, %738, %cst_326 {dimension_numbers = #tpu.dot_dimension_numbers<[1], [0], [0], [1], [0, 0, 1, 1], [], []>} : vector<8x512xf32>, vector<512x128xf32>, vector<8x128xf32> -> vector<8x128xf32>
    %1122 = arith.addf %745, %1121 : vector<8x128xf32>
    %c0_327 = arith.constant 0 : index
    %c0_328 = arith.constant 0 : index
    %1123 = vector.load %arg11[%c0_327, %c0_328] : memref<8x128xf32, #tpu.memory_space<vmem>>, vector<8x128xf32>
    tpu.vector_store %arg11[%c0_327, %c0_328], %1122 {strides = array<i32>} : memref<8x128xf32, #tpu.memory_space<vmem>>, vector<8x128xf32>,
    return
  }
}

</mosaic_0001>

<llo_original>
// kernel: lstm_kan_forward.1
$region0: #{lstm_kan_forward.1}
  #allocation0 [shape = 'u32[]', space=smem, size = 0x4, offset = 0x4, fixed_abs, tag = 'smem constant byte address 0x4 - core index']
  #allocation1 [shape = 'u32[144,128]{1,0:T(1,128)}', space=vmem, size = 0x12000, scoped, tag = 'internal scratch']
  %s0 = inlined_call_operand.vmem [shape: f32[64,1], index: 0, kind: input, shape index: {}]
  %s1 = inlined_call_operand.vmem [shape: f32[1,128], index: 1, kind: input, shape index: {}]
  %s2 = inlined_call_operand.vmem [shape: f32[1,128], index: 2, kind: input, shape index: {}]
  %s3 = inlined_call_operand.vmem [shape: bf16[32,128], index: 3, kind: input, shape index: {}]
  %s4 = inlined_call_operand.vmem [shape: bf16[32,128], index: 4, kind: input, shape index: {}]
  %s5 = inlined_call_operand.vmem [shape: bf16[32,128], index: 5, kind: input, shape index: {}]
  %s6 = inlined_call_operand.vmem [shape: f32[1,128], index: 6, kind: input, shape index: {}]
  %s7 = inlined_call_operand.vmem [shape: f32[32,64], index: 7, kind: input, shape index: {}]
  %s8 = inlined_call_operand.vmem [shape: f32[256,64], index: 8, kind: input, shape index: {}]
  %s9 = inlined_call_operand.vmem [shape: f32[64,128], index: 9, kind: input, shape index: {}]
  %s10 = inlined_call_operand.hbm [shape: f32[512,128], index: 10, kind: input, shape index: {}]
  %s11 = inlined_call_operand.vmem [shape: f32[8,128], index: 11, kind: output, shape index: {}]
  %s12 = sld [smem:[#allocation0]]
  $region58: #{lstm_kan_forward.1} parent=0
    _
  %s14 = ssub.s32 1, %s12
  %s15 = scalar_select 0, %s14, %s12
  $region1: #{lstm_kan_forward.1} parent=0
    #allocation2 [shape = 'u8[262144]{0}', space=vmem, size = 0x40000, scoped, tag = 'input window, operand 10, single buffered']
    #allocation3 [shape = 's32[1]{0}', space=sflag, size = 0x4, scoped, tag = 'scoped memory for lstm_kan_forward.1']
    %16 = vsyncpa [#allocation3], 0
    // Predicated region
    $region2: #{lstm_kan_forward.1} parent=1 // pred_check
      _
    $region3: #{lstm_kan_forward.1} parent=1 // pred_check_branch
      %18 = sbr.rel (0) target = $region5
    $region4: #{lstm_kan_forward.1} parent=1 // pred_region
      _
    $region5: #{lstm_kan_forward.1} parent=1 // pred_fallthru
      _
    // Predicated region
    $region6: #{lstm_kan_forward.1} parent=1 // pred_check
      _
    $region7: #{lstm_kan_forward.1} parent=1 // pred_check_branch
      %20 = sbr.rel (0) target = $region9
    $region8: #{lstm_kan_forward.1} parent=1 // pred_region
      _
    $region9: #{lstm_kan_forward.1} parent=1 // pred_fallthru
      _
    // Predicated region
    $region10: #{lstm_kan_forward.1} parent=1 // pred_check
      _
    $region11: #{lstm_kan_forward.1} parent=1 // pred_check_branch
      %22 = sbr.rel (0) target = $region13
    $region12: #{lstm_kan_forward.1} parent=1 // pred_region
      _
    $region13: #{lstm_kan_forward.1} parent=1 // pred_fallthru
      _
    // Predicated region
    $region14: #{lstm_kan_forward.1} parent=1 // pred_check
      _
    $region15: #{lstm_kan_forward.1} parent=1 // pred_check_branch
      %24 = sbr.rel (0) target = $region17
    $region16: #{lstm_kan_forward.1} parent=1 // pred_region
      _
    $region17: #{lstm_kan_forward.1} parent=1 // pred_fallthru
      _
    // Predicated region
    $region18: #{lstm_kan_forward.1} parent=1 // pred_check
      _
    $region19: #{lstm_kan_forward.1} parent=1 // pred_check_branch
      %26 = sbr.rel (0) target = $region21
    $region20: #{lstm_kan_forward.1} parent=1 // pred_region
      _
    $region21: #{lstm_kan_forward.1} parent=1 // pred_fallthru
      _
    // Predicated region
    $region22: #{lstm_kan_forward.1} parent=1 // pred_check
      _
    $region23: #{lstm_kan_forward.1} parent=1 // pred_check_branch
      %28 = sbr.rel (0) target = $region25
    $region24: #{lstm_kan_forward.1} parent=1 // pred_region
      _
    $region25: #{lstm_kan_forward.1} parent=1 // pred_fallthru
      _
    // Predicated region
    $region26: #{lstm_kan_forward.1} parent=1 // pred_check
      _
    $region27: #{lstm_kan_forward.1} parent=1 // pred_check_branch
      %30 = sbr.rel (0) target = $region29
    $region28: #{lstm_kan_forward.1} parent=1 // pred_region
      _
    $region29: #{lstm_kan_forward.1} parent=1 // pred_fallthru
      _
    // Predicated region
    $region30: #{lstm_kan_forward.1} parent=1 // pred_check
      _
    $region31: #{lstm_kan_forward.1} parent=1 // pred_check_branch
      %32 = sbr.rel (0) target = $region33
    $region32: #{lstm_kan_forward.1} parent=1 // pred_region
      _
    $region33: #{lstm_kan_forward.1} parent=1 // pred_fallthru
      _
    // Predicated region
    $region34: #{lstm_kan_forward.1} parent=1 // pred_check
      _
    $region35: #{lstm_kan_forward.1} parent=1 // pred_check_branch
      %34 = sbr.rel (0) target = $region37
    $region36: #{lstm_kan_forward.1} parent=1 // pred_region
      _
    $region37: #{lstm_kan_forward.1} parent=1 // pred_fallthru
      _
    // Predicated region
    $region38: #{lstm_kan_forward.1} parent=1 // pred_check
      _
    $region39: #{lstm_kan_forward.1} parent=1 // pred_check_branch
      %36 = sbr.rel (0) target = $region41
    $region40: #{lstm_kan_forward.1} parent=1 // pred_region
      _
    $region41: #{lstm_kan_forward.1} parent=1 // pred_fallthru
      _
    // Predicated region
    $region42: #{lstm_kan_forward.1} parent=1 // pred_check
      _
    $region43: #{lstm_kan_forward.1} parent=1 // pred_check_branch
      %38 = sbr.rel (0) target = $region45
    $region44: #{lstm_kan_forward.1} parent=1 // pred_region
      %s40 = ssub.s32 8192, 8192
      %41 = vsyncadd [#allocation3], %s40
      %s42 = sshll.u32 [#allocation2], 4
      %s43 = int_to_ptr.vmem [resolvable:$true] %s42
      %48 = dma.hbm_to_vmem [thread:$0]  %s10, 8192, %s43, [#allocation3], 128, 128, 8
    $region45: #{lstm_kan_forward.1} parent=1 // pred_fallthru
      _
    // Predicated region
    $region46: #{lstm_kan_forward.1} parent=1 // pred_check
      _
    $region47: #{lstm_kan_forward.1} parent=1 // pred_check_branch
      %50 = sbr.rel (0) target = $region49
    $region48: #{lstm_kan_forward.1} parent=1 // pred_region
      %51 = dma.done [#allocation3], 8192
    $region49: #{lstm_kan_forward.1} parent=1 // pred_fallthru
      _
    %v53 = vld [vmem:[%s3] sm:$0xf]
    %v54 = vld [vmem:[%s3 + $0x4] sm:$0xf]
    %v55 = vld [vmem:[%s3 + $0x8] sm:$0xf]
    %v56 = vld [vmem:[%s3 + $0xc] sm:$0xf]
    %v57 = vld [vmem:[%s4] sm:$0xf]
    %v58 = vld [vmem:[%s4 + $0x4] sm:$0xf]
    %v59 = vld [vmem:[%s4 + $0x8] sm:$0xf]
    %v60 = vld [vmem:[%s4 + $0xc] sm:$0xf]
    %v61 = vld [vmem:[%s5] sm:$0xf]
    %v62 = vld [vmem:[%s5 + $0x4] sm:$0xf]
    %v63 = vld [vmem:[%s5 + $0x8] sm:$0xf]
    %v64 = vld [vmem:[%s5 + $0xc] sm:$0xf]
    %v65 = vld [vmem:[%s6] sm:$0x1]
    %v67 = vlaneseq
    %v68 = vshrl.u32 %v67, 7
    %v69 = vsub.s32 0, %v68
    %v70 = vrot.slane %v65, %v69
    %v72 = vld [vmem:[%s0] sm:$0xff]
    %v73 = vld [vmem:[%s0 + $0x8] sm:$0xff]
    %v74 = vld [vmem:[%s0 + $0x10] sm:$0xff]
    %v75 = vld [vmem:[%s0 + $0x18] sm:$0xff]
    %v76 = vld [vmem:[%s0 + $0x20] sm:$0xff]
    %v77 = vld [vmem:[%s0 + $0x28] sm:$0xff]
    %v78 = vld [vmem:[%s0 + $0x30] sm:$0xff]
    %v79 = vld [vmem:[%s0 + $0x38] sm:$0xff]
    %v80 = vld [vmem:[%s1] sm:$0x1]
    %82 = vset.pattern.permute.xlu0 0
    %83 = vperm.xlu0 %82, %v72
    %v84 = vpop.permute.xlu0 %83
    %87 = vset.pattern.permute.xlu0 0
    %88 = vperm.xlu0 %87, %v73
    %v89 = vpop.permute.xlu0 %88
    %92 = vset.pattern.permute.xlu0 0
    %93 = vperm.xlu0 %92, %v74
    %v94 = vpop.permute.xlu0 %93
    %97 = vset.pattern.permute.xlu0 0
    %98 = vperm.xlu0 %97, %v75
    %v99 = vpop.permute.xlu0 %98
    %102 = vset.pattern.permute.xlu0 0
    %103 = vperm.xlu0 %102, %v76
    %v104 = vpop.permute.xlu0 %103
    %107 = vset.pattern.permute.xlu0 0
    %108 = vperm.xlu0 %107, %v77
    %v109 = vpop.permute.xlu0 %108
    %112 = vset.pattern.permute.xlu0 0
    %113 = vperm.xlu0 %112, %v78
    %v114 = vpop.permute.xlu0 %113
    %117 = vset.pattern.permute.xlu0 0
    %118 = vperm.xlu0 %117, %v79
    %v119 = vpop.permute.xlu0 %118
    %v122 = vlaneseq
    %v123 = vshrl.u32 %v122, 7
    %v124 = vsub.s32 0, %v123
    %v125 = vrot.slane %v80, %v124
    %v127 = vmul.f32 %v84, %v125
    %v128 = vmul.f32 %v89, %v125
    %v129 = vmul.f32 %v94, %v125
    %v130 = vmul.f32 %v99, %v125
    %v131 = vmul.f32 %v104, %v125
    %v132 = vmul.f32 %v109, %v125
    %v133 = vmul.f32 %v114, %v125
    %v134 = vmul.f32 %v119, %v125
    %v135 = vld [vmem:[%s2] sm:$0x1]
    %v137 = vlaneseq
    %v138 = vshrl.u32 %v137, 7
    %v139 = vsub.s32 0, %v138
    %v140 = vrot.slane %v135, %v139
    %v142 = vadd.f32 %v127, %v140
    %v143 = vadd.f32 %v128, %v140
    %v144 = vadd.f32 %v129, %v140
    %v145 = vadd.f32 %v130, %v140
    %v146 = vadd.f32 %v131, %v140
    %v147 = vadd.f32 %v132, %v140
    %v148 = vadd.f32 %v133, %v140
    %v149 = vadd.f32 %v134, %v140
    %v154 = vunpack.c.l.b16 %v53
    %v155 = vunpack.c.l.b16 %v54
    %v156 = vunpack.c.l.b16 %v55
    %v157 = vunpack.c.l.b16 %v56
    %v158 = vpack.c.b16 %v155, %v154
    %v159 = vpack.c.b16 %v157, %v156
    %vm162 = vcmask 261120
    %v164 = vsel %vm162, 0, 0
    %166 = vmatprep.subr.bf16.mxu0 0
    %167 = vmatpush1.bf16.msra.mxu0 %v158
    %168 = vmatprep.subr.bf16.mxu0 0
    %169 = vmatpush1.bf16.msra.mxu0 %v159
    %170 = vmatprep.subr.bf16.mxu0 0
    %171 = vmatpush1.bf16.msra.mxu0 0
    %172 = vmatprep.subr.bf16.mxu0 0
    %173 = vmatpush1.bf16.msra.mxu0 0
    %174 = vmatprep.subr.bf16.mxu0 0
    %175 = vmatpush1.bf16.msra.mxu0 0
    %176 = vmatprep.subr.bf16.mxu0 0
    %177 = vmatpush1.bf16.msra.mxu0 0
    %178 = vmatprep.subr.bf16.mxu0 0
    %179 = vmatpush1.bf16.msra.mxu0 0
    %180 = vmatprep.subr.bf16.mxu0 0
    %181 = vmatpush1.bf16.msra.mxu0 0
    %182 = vmatprep.subr.bf16.mxu0 0
    %183 = vmatpush1.bf16.msra.mxu0 0
    %184 = vmatprep.subr.bf16.mxu0 0
    %185 = vmatpush1.bf16.msra.mxu0 0
    %186 = vmatprep.subr.bf16.mxu0 0
    %187 = vmatpush1.bf16.msra.mxu0 0
    %188 = vmatprep.subr.bf16.mxu0 0
    %189 = vmatpush1.bf16.msra.mxu0 0
    %190 = vmatprep.subr.bf16.mxu0 0
    %191 = vmatpush1.bf16.msra.mxu0 0
    %192 = vmatprep.subr.bf16.mxu0 0
    %193 = vmatpush1.bf16.msra.mxu0 0
    %194 = vmatprep.subr.bf16.mxu0 0
    %195 = vmatpush1.bf16.msra.mxu0 0
    %196 = vmatprep.subr.bf16.mxu0 0
    %197 = vmatpush1.bf16.msra.mxu0 0
    %198 = vmatprep.mubr.bf16.mxu0 0
    %199 = vmatmul.mubr.bf16.gmra.mrb[0].mxu0 %v164
    %v200 = vpop.f32.mrb[0].mxu0
    %v201 = vadd.f32 0.0, %v200
    %v202 = vpop.f32.mrb[0].mxu0
    %v203 = vpop.f32.mrb[0].mxu0
    %v204 = vpop.f32.mrb[0].mxu0
    %205 = vdwg.mxu0
    %v206 = vadd.f32 %v142, %v201
    %v207 = vxor.u32 %v206, 2147483648
    %v208 = vmul.f32 %v207, 1.442695
    %v209 = vpow.pop %v208
    %v210 = vadd.f32 %v209, 1.0
    %v211 = vrcp.pop %v210
    %v212 = vmul.f32 1.0, %v211
    %v213 = vtanh.pop %v206
    %v214 = vmul.f32 %v212, 0.0
    %216 = vrot.lane.b32.xlu0 %v213, 32
    %v217 = vpop.permute.xlu0 %216
    %v219 = vmul.f32 %v212, %v217
    %221 = vrot.lane.b32.xlu0 %v219, 32
    %v222 = vpop.permute.xlu0 %221
    %v224 = vadd.f32 %v214, %v222
    %v225 = vtanh.pop %v224
    %227 = vrot.lane.b32.xlu0 %v225, 32
    %v228 = vpop.permute.xlu0 %227
    %v230 = vmul.f32 %v212, %v228
    %v231 = vpack.c.bf16 %v230, %v230
    %v236 = vunpack.c.l.b16 %v61
    %v237 = vunpack.c.l.b16 %v62
    %v238 = vunpack.c.l.b16 %v63
    %v239 = vunpack.c.l.b16 %v64
    %v240 = vpack.c.b16 %v237, %v236
    %v241 = vpack.c.b16 %v239, %v238
    %244 = vmatprep.subr.bf16.mxu0 0
    %245 = vmatpush1.bf16.msra.mxu0 %v240
    %246 = vmatprep.subr.bf16.mxu0 0
    %247 = vmatpush1.bf16.msra.mxu0 %v241
    %248 = vmatprep.subr.bf16.mxu0 0
    %249 = vmatpush1.bf16.msra.mxu0 0
    %250 = vmatprep.subr.bf16.mxu0 0
    %251 = vmatpush1.bf16.msra.mxu0 0
    %252 = vmatprep.subr.bf16.mxu0 0
    %253 = vmatpush1.bf16.msra.mxu0 0
    %254 = vmatprep.subr.bf16.mxu0 0
    %255 = vmatpush1.bf16.msra.mxu0 0
    %256 = vmatprep.subr.bf16.mxu0 0
    %257 = vmatpush1.bf16.msra.mxu0 0
    %258 = vmatprep.subr.bf16.mxu0 0
    %259 = vmatpush1.bf16.msra.mxu0 0
    %260 = vmatprep.subr.bf16.mxu0 0
    %261 = vmatpush1.bf16.msra.mxu0 0
    %262 = vmatprep.subr.bf16.mxu0 0
    %263 = vmatpush1.bf16.msra.mxu0 0
    %264 = vmatprep.subr.bf16.mxu0 0
    %265 = vmatpush1.bf16.msra.mxu0 0
    %266 = vmatprep.subr.bf16.mxu0 0
    %267 = vmatpush1.bf16.msra.mxu0 0
    %268 = vmatprep.subr.bf16.mxu0 0
    %269 = vmatpush1.bf16.msra.mxu0 0
    %270 = vmatprep.subr.bf16.mxu0 0
    %271 = vmatpush1.bf16.msra.mxu0 0
    %272 = vmatprep.subr.bf16.mxu0 0
    %273 = vmatpush1.bf16.msra.mxu0 0
    %274 = vmatprep.subr.bf16.mxu0 0
    %275 = vmatpush1.bf16.msra.mxu0 0
    %276 = vmatprep.mubr.bf16.mxu0 0
    %277 = vmatmul.mubr.bf16.gmra.mrb[0].mxu0 %v164
    %v278 = vpop.f32.mrb[0].mxu0
    %v279 = vadd.f32 0.0, %v278
    %v280 = vpop.f32.mrb[0].mxu0
    %v281 = vpop.f32.mrb[0].mxu0
    %v282 = vpop.f32.mrb[0].mxu0
    %283 = vdwg.mxu0
    %285 = vrot.lane.b32.xlu0 %v231, 64
    %v286 = vpop.permute.xlu0 %285
    %v291 = vunpack.c.l.b16 %v57
    %v292 = vunpack.c.l.b16 %v58
    %v293 = vunpack.c.l.b16 %v59
    %v294 = vunpack.c.l.b16 %v60
    %v295 = vpack.c.b16 %v292, %v291
    %v296 = vpack.c.b16 %v294, %v293
    %v300 = vsel %vm162, %v286, 0
    %302 = vmatprep.subr.bf16.mxu0 0
    %303 = vmatpush1.bf16.msra.mxu0 %v295
    %304 = vmatprep.subr.bf16.mxu0 0
    %305 = vmatpush1.bf16.msra.mxu0 %v296
    %306 = vmatprep.subr.bf16.mxu0 0
    %307 = vmatpush1.bf16.msra.mxu0 0
    %308 = vmatprep.subr.bf16.mxu0 0
    %309 = vmatpush1.bf16.msra.mxu0 0
    %310 = vmatprep.subr.bf16.mxu0 0
    %311 = vmatpush1.bf16.msra.mxu0 0
    %312 = vmatprep.subr.bf16.mxu0 0
    %313 = vmatpush1.bf16.msra.mxu0 0
    %314 = vmatprep.subr.bf16.mxu0 0
    %315 = vmatpush1.bf16.msra.mxu0 0
    %316 = vmatprep.subr.bf16.mxu0 0
    %317 = vmatpush1.bf16.msra.mxu0 0
    %318 = vmatprep.subr.bf16.mxu0 0
    %319 = vmatpush1.bf16.msra.mxu0 0
    %320 = vmatprep.subr.bf16.mxu0 0
    %321 = vmatpush1.bf16.msra.mxu0 0
    %322 = vmatprep.subr.bf16.mxu0 0
    %323 = vmatpush1.bf16.msra.mxu0 0
    %324 = vmatprep.subr.bf16.mxu0 0
    %325 = vmatpush1.bf16.msra.mxu0 0
    %326 = vmatprep.subr.bf16.mxu0 0
    %327 = vmatpush1.bf16.msra.mxu0 0
    %328 = vmatprep.subr.bf16.mxu0 0
    %329 = vmatpush1.bf16.msra.mxu0 0
    %330 = vmatprep.subr.bf16.mxu0 0
    %331 = vmatpush1.bf16.msra.mxu0 0
    %332 = vmatprep.subr.bf16.mxu0 0
    %333 = vmatpush1.bf16.msra.mxu0 0
    %334 = vmatprep.mubr.bf16.mxu0 0
    %335 = vmatmul.mubr.bf16.gmra.mrb[0].mxu0 %v300
    %v336 = vpop.f32.mrb[0].mxu0
    %v337 = vadd.f32 %v279, %v336
    %v338 = vpop.f32.mrb[0].mxu0
    %v339 = vpop.f32.mrb[0].mxu0
    %v340 = vpop.f32.mrb[0].mxu0
    %341 = vdwg.mxu0
    %v342 = vadd.f32 %v337, %v70
    %v343 = vxor.u32 %v342, 2147483648
    %v344 = vmul.f32 %v343, 1.442695
    %v345 = vpow.pop %v344
    %v346 = vadd.f32 %v345, 1.0
    %v347 = vrcp.pop %v346
    %v348 = vmul.f32 1.0, %v347
    %v349 = vtanh.pop %v342
    %v350 = vmul.f32 %v348, 0.0
    %352 = vrot.lane.b32.xlu0 %v349, 32
    %v353 = vpop.permute.xlu0 %352
    %v355 = vmul.f32 %v348, %v353
    %357 = vrot.lane.b32.xlu0 %v355, 32
    %v358 = vpop.permute.xlu0 %357
    %v360 = vadd.f32 %v350, %v358
    %v361 = vtanh.pop %v360
    %363 = vrot.lane.b32.xlu0 %v361, 32
    %v364 = vpop.permute.xlu0 %363
    %v366 = vmul.f32 %v348, %v364
    %367 = vmatprep.subr.bf16.mxu0 0
    %368 = vmatpush1.bf16.msra.mxu0 %v158
    %369 = vmatprep.subr.bf16.mxu0 0
    %370 = vmatpush1.bf16.msra.mxu0 %v159
    %371 = vmatprep.subr.bf16.mxu0 0
    %372 = vmatpush1.bf16.msra.mxu0 0
    %373 = vmatprep.subr.bf16.mxu0 0
    %374 = vmatpush1.bf16.msra.mxu0 0
    %375 = vmatprep.subr.bf16.mxu0 0
    %376 = vmatpush1.bf16.msra.mxu0 0
    %377 = vmatprep.subr.bf16.mxu0 0
    %378 = vmatpush1.bf16.msra.mxu0 0
    %379 = vmatprep.subr.bf16.mxu0 0
    %380 = vmatpush1.bf16.msra.mxu0 0
    %381 = vmatprep.subr.bf16.mxu0 0
    %382 = vmatpush1.bf16.msra.mxu0 0
    %383 = vmatprep.subr.bf16.mxu0 0
    %384 = vmatpush1.bf16.msra.mxu0 0
    %385 = vmatprep.subr.bf16.mxu0 0
    %386 = vmatpush1.bf16.msra.mxu0 0
    %387 = vmatprep.subr.bf16.mxu0 0
    %388 = vmatpush1.bf16.msra.mxu0 0
    %389 = vmatprep.subr.bf16.mxu0 0
    %390 = vmatpush1.bf16.msra.mxu0 0
    %391 = vmatprep.subr.bf16.mxu0 0
    %392 = vmatpush1.bf16.msra.mxu0 0
    %393 = vmatprep.subr.bf16.mxu0 0
    %394 = vmatpush1.bf16.msra.mxu0 0
    %395 = vmatprep.subr.bf16.mxu0 0
    %396 = vmatpush1.bf16.msra.mxu0 0
    %397 = vmatprep.subr.bf16.mxu0 0
    %398 = vmatpush1.bf16.msra.mxu0 0
    %399 = vmatprep.mubr.bf16.mxu0 0
    %400 = vmatmul.mubr.bf16.gmra.mrb[0].mxu0 %v300
    %v401 = vpop.f32.mrb[0].mxu0
    %v402 = vadd.f32 0.0, %v401
    %v403 = vpop.f32.mrb[0].mxu0
    %v404 = vpop.f32.mrb[0].mxu0
    %v405 = vpop.f32.mrb[0].mxu0
    %406 = vdwg.mxu0
    %v407 = vadd.f32 %v143, %v402
    %v408 = vxor.u32 %v407, 2147483648
    %v409 = vmul.f32 %v408, 1.442695
    %v410 = vpow.pop %v409
    %v411 = vadd.f32 %v410, 1.0
    %v412 = vrcp.pop %v411
    %v413 = vmul.f32 1.0, %v412
    %v414 = vtanh.pop %v407
    %v415 = vmul.f32 %v413, %v224
    %417 = vrot.lane.b32.xlu0 %v414, 32
    %v418 = vpop.permute.xlu0 %417
    %v420 = vmul.f32 %v413, %v418
    %422 = vrot.lane.b32.xlu0 %v420, 32
    %v423 = vpop.permute.xlu0 %422
    %v425 = vadd.f32 %v415, %v423
    %v426 = vtanh.pop %v425
    %428 = vrot.lane.b32.xlu0 %v426, 32
    %v429 = vpop.permute.xlu0 %428
    %v431 = vmul.f32 %v413, %v429
    %v432 = vpack.c.bf16 %v431, %v431
    %v433 = vpack.c.bf16 %v366, %v366
    %435 = vrot.lane.b32.xlu0 %v433, 64
    %v436 = vpop.permute.xlu0 %435
    %v438 = vsel %vm162, %v436, 0
    %440 = vmatprep.subr.bf16.mxu0 0
    %441 = vmatpush1.bf16.msra.mxu0 %v240
    %442 = vmatprep.subr.bf16.mxu0 0
    %443 = vmatpush1.bf16.msra.mxu0 %v241
    %444 = vmatprep.subr.bf16.mxu0 0
    %445 = vmatpush1.bf16.msra.mxu0 0
    %446 = vmatprep.subr.bf16.mxu0 0
    %447 = vmatpush1.bf16.msra.mxu0 0
    %448 = vmatprep.subr.bf16.mxu0 0
    %449 = vmatpush1.bf16.msra.mxu0 0
    %450 = vmatprep.subr.bf16.mxu0 0
    %451 = vmatpush1.bf16.msra.mxu0 0
    %452 = vmatprep.subr.bf16.mxu0 0
    %453 = vmatpush1.bf16.msra.mxu0 0
    %454 = vmatprep.subr.bf16.mxu0 0
    %455 = vmatpush1.bf16.msra.mxu0 0
    %456 = vmatprep.subr.bf16.mxu0 0
    %457 = vmatpush1.bf16.msra.mxu0 0
    %458 = vmatprep.subr.bf16.mxu0 0
    %459 = vmatpush1.bf16.msra.mxu0 0
    %460 = vmatprep.subr.bf16.mxu0 0
    %461 = vmatpush1.bf16.msra.mxu0 0
    %462 = vmatprep.subr.bf16.mxu0 0
    %463 = vmatpush1.bf16.msra.mxu0 0
    %464 = vmatprep.subr.bf16.mxu0 0
    %465 = vmatpush1.bf16.msra.mxu0 0
    %466 = vmatprep.subr.bf16.mxu0 0
    %467 = vmatpush1.bf16.msra.mxu0 0
    %468 = vmatprep.subr.bf16.mxu0 0
    %469 = vmatpush1.bf16.msra.mxu0 0
    %470 = vmatprep.subr.bf16.mxu0 0
    %471 = vmatpush1.bf16.msra.mxu0 0
    %472 = vmatprep.mubr.bf16.mxu0 0
    %473 = vmatmul.mubr.bf16.gmra.mrb[0].mxu0 %v438
    %v474 = vpop.f32.mrb[0].mxu0
    %v475 = vadd.f32 0.0, %v474
    %v476 = vpop.f32.mrb[0].mxu0
    %v477 = vpop.f32.mrb[0].mxu0
    %v478 = vpop.f32.mrb[0].mxu0
    %479 = vdwg.mxu0
    %481 = vrot.lane.b32.xlu0 %v432, 64
    %v482 = vpop.permute.xlu0 %481
    %v484 = vsel %vm162, %v482, 0
    %486 = vmatprep.subr.bf16.mxu0 0
    %487 = vmatpush1.bf16.msra.mxu0 %v295
    %488 = vmatprep.subr.bf16.mxu0 0
    %489 = vmatpush1.bf16.msra.mxu0 %v296
    %490 = vmatprep.subr.bf16.mxu0 0
    %491 = vmatpush1.bf16.msra.mxu0 0
    %492 = vmatprep.subr.bf16.mxu0 0
    %493 = vmatpush1.bf16.msra.mxu0 0
    %494 = vmatprep.subr.bf16.mxu0 0
    %495 = vmatpush1.bf16.msra.mxu0 0
    %496 = vmatprep.subr.bf16.mxu0 0
    %497 = vmatpush1.bf16.msra.mxu0 0
    %498 = vmatprep.subr.bf16.mxu0 0
    %499 = vmatpush1.bf16.msra.mxu0 0
    %500 = vmatprep.subr.bf16.mxu0 0
    %501 = vmatpush1.bf16.msra.mxu0 0
    %502 = vmatprep.subr.bf16.mxu0 0
    %503 = vmatpush1.bf16.msra.mxu0 0
    %504 = vmatprep.subr.bf16.mxu0 0
    %505 = vmatpush1.bf16.msra.mxu0 0
    %506 = vmatprep.subr.bf16.mxu0 0
    %507 = vmatpush1.bf16.msra.mxu0 0
    %508 = vmatprep.subr.bf16.mxu0 0
    %509 = vmatpush1.bf16.msra.mxu0 0
    %510 = vmatprep.subr.bf16.mxu0 0
    %511 = vmatpush1.bf16.msra.mxu0 0
    %512 = vmatprep.subr.bf16.mxu0 0
    %513 = vmatpush1.bf16.msra.mxu0 0
    %514 = vmatprep.subr.bf16.mxu0 0
    %515 = vmatpush1.bf16.msra.mxu0 0
    %516 = vmatprep.subr.bf16.mxu0 0
    %517 = vmatpush1.bf16.msra.mxu0 0
    %518 = vmatprep.mubr.bf16.mxu0 0
    %519 = vmatmul.mubr.bf16.gmra.mrb[0].mxu0 %v484
    %v520 = vpop.f32.mrb[0].mxu0
    %v521 = vadd.f32 %v475, %v520
    %v522 = vpop.f32.mrb[0].mxu0
    %v523 = vpop.f32.mrb[0].mxu0
    %v524 = vpop.f32.mrb[0].mxu0
    %525 = vdwg.mxu0
    %v526 = vadd.f32 %v521, %v70
    %v527 = vxor.u32 %v526, 2147483648
    %v528 = vmul.f32 %v527, 1.442695
    %v529 = vpow.pop %v528
    %v530 = vadd.f32 %v529, 1.0
    %v531 = vrcp.pop %v530
    %v532 = vmul.f32 1.0, %v531
    %v533 = vtanh.pop %v526
    %v534 = vmul.f32 %v532, %v360
    %536 = vrot.lane.b32.xlu0 %v533, 32
    %v537 = vpop.permute.xlu0 %536
    %v539 = vmul.f32 %v532, %v537
    %541 = vrot.lane.b32.xlu0 %v539, 32
    %v542 = vpop.permute.xlu0 %541
    %v544 = vadd.f32 %v534, %v542
    %v545 = vtanh.pop %v544
    %547 = vrot.lane.b32.xlu0 %v545, 32
    %v548 = vpop.permute.xlu0 %547
    %v550 = vmul.f32 %v532, %v548
    %551 = vmatprep.subr.bf16.mxu0 0
    %552 = vmatpush1.bf16.msra.mxu0 %v158
    %553 = vmatprep.subr.bf16.mxu0 0
    %554 = vmatpush1.bf16.msra.mxu0 %v159
    %555 = vmatprep.subr.bf16.mxu0 0
    %556 = vmatpush1.bf16.msra.mxu0 0
    %557 = vmatprep.subr.bf16.mxu0 0
    %558 = vmatpush1.bf16.msra.mxu0 0
    %559 = vmatprep.subr.bf16.mxu0 0
    %560 = vmatpush1.bf16.msra.mxu0 0
    %561 = vmatprep.subr.bf16.mxu0 0
    %562 = vmatpush1.bf16.msra.mxu0 0
    %563 = vmatprep.subr.bf16.mxu0 0
    %564 = vmatpush1.bf16.msra.mxu0 0
    %565 = vmatprep.subr.bf16.mxu0 0
    %566 = vmatpush1.bf16.msra.mxu0 0
    %567 = vmatprep.subr.bf16.mxu0 0
    %568 = vmatpush1.bf16.msra.mxu0 0
    %569 = vmatprep.subr.bf16.mxu0 0
    %570 = vmatpush1.bf16.msra.mxu0 0
    %571 = vmatprep.subr.bf16.mxu0 0
    %572 = vmatpush1.bf16.msra.mxu0 0
    %573 = vmatprep.subr.bf16.mxu0 0
    %574 = vmatpush1.bf16.msra.mxu0 0
    %575 = vmatprep.subr.bf16.mxu0 0
    %576 = vmatpush1.bf16.msra.mxu0 0
    %577 = vmatprep.subr.bf16.mxu0 0
    %578 = vmatpush1.bf16.msra.mxu0 0
    %579 = vmatprep.subr.bf16.mxu0 0
    %580 = vmatpush1.bf16.msra.mxu0 0
    %581 = vmatprep.subr.bf16.mxu0 0
    %582 = vmatpush1.bf16.msra.mxu0 0
    %583 = vmatprep.mubr.bf16.mxu0 0
    %584 = vmatmul.mubr.bf16.gmra.mrb[0].mxu0 %v484
    %v585 = vpop.f32.mrb[0].mxu0
    %v586 = vadd.f32 0.0, %v585
    %v587 = vpop.f32.mrb[0].mxu0
    %v588 = vpop.f32.mrb[0].mxu0
    %v589 = vpop.f32.mrb[0].mxu0
    %590 = vdwg.mxu0
    %v591 = vadd.f32 %v144, %v586
    %v592 = vxor.u32 %v591, 2147483648
    %v593 = vmul.f32 %v592, 1.442695
    %v594 = vpow.pop %v593
    %v595 = vadd.f32 %v594, 1.0
    %v596 = vrcp.pop %v595
    %v597 = vmul.f32 1.0, %v596
    %v598 = vtanh.pop %v591
    %v599 = vmul.f32 %v597, %v425
    %601 = vrot.lane.b32.xlu0 %v598, 32
    %v602 = vpop.permute.xlu0 %601
    %v604 = vmul.f32 %v597, %v602
    %606 = vrot.lane.b32.xlu0 %v604, 32
    %v607 = vpop.permute.xlu0 %606
    %v609 = vadd.f32 %v599, %v607
    %v610 = vtanh.pop %v609
    %612 = vrot.lane.b32.xlu0 %v610, 32
    %v613 = vpop.permute.xlu0 %612
    %v615 = vmul.f32 %v597, %v613
    %v616 = vpack.c.bf16 %v615, %v615
    %v617 = vpack.c.bf16 %v550, %v550
    %619 = vrot.lane.b32.xlu0 %v617, 64
    %v620 = vpop.permute.xlu0 %619
    %v622 = vsel %vm162, %v620, 0
    %624 = vmatprep.subr.bf16.mxu0 0
    %625 = vmatpush1.bf16.msra.mxu0 %v240
    %626 = vmatprep.subr.bf16.mxu0 0
    %627 = vmatpush1.bf16.msra.mxu0 %v241
    %628 = vmatprep.subr.bf16.mxu0 0
    %629 = vmatpush1.bf16.msra.mxu0 0
    %630 = vmatprep.subr.bf16.mxu0 0
    %631 = vmatpush1.bf16.msra.mxu0 0
    %632 = vmatprep.subr.bf16.mxu0 0
    %633 = vmatpush1.bf16.msra.mxu0 0
    %634 = vmatprep.subr.bf16.mxu0 0
    %635 = vmatpush1.bf16.msra.mxu0 0
    %636 = vmatprep.subr.bf16.mxu0 0
    %637 = vmatpush1.bf16.msra.mxu0 0
    %638 = vmatprep.subr.bf16.mxu0 0
    %639 = vmatpush1.bf16.msra.mxu0 0
    %640 = vmatprep.subr.bf16.mxu0 0
    %641 = vmatpush1.bf16.msra.mxu0 0
    %642 = vmatprep.subr.bf16.mxu0 0
    %643 = vmatpush1.bf16.msra.mxu0 0
    %644 = vmatprep.subr.bf16.mxu0 0
    %645 = vmatpush1.bf16.msra.mxu0 0
    %646 = vmatprep.subr.bf16.mxu0 0
    %647 = vmatpush1.bf16.msra.mxu0 0
    %648 = vmatprep.subr.bf16.mxu0 0
    %649 = vmatpush1.bf16.msra.mxu0 0
    %650 = vmatprep.subr.bf16.mxu0 0
    %651 = vmatpush1.bf16.msra.mxu0 0
    %652 = vmatprep.subr.bf16.mxu0 0
    %653 = vmatpush1.bf16.msra.mxu0 0
    %654 = vmatprep.subr.bf16.mxu0 0
    %655 = vmatpush1.bf16.msra.mxu0 0
    %656 = vmatprep.mubr.bf16.mxu0 0
    %657 = vmatmul.mubr.bf16.gmra.mrb[0].mxu0 %v622
    %v658 = vpop.f32.mrb[0].mxu0
    %v659 = vadd.f32 0.0, %v658
    %v660 = vpop.f32.mrb[0].mxu0
    %v661 = vpop.f32.mrb[0].mxu0
    %v662 = vpop.f32.mrb[0].mxu0
    %663 = vdwg.mxu0
    %665 = vrot.lane.b32.xlu0 %v616, 64
    %v666 = vpop.permute.xlu0 %665
    %v668 = vsel %vm162, %v666, 0
    %670 = vmatprep.subr.bf16.mxu0 0
    %671 = vmatpush1.bf16.msra.mxu0 %v295
    %672 = vmatprep.subr.bf16.mxu0 0
    %673 = vmatpush1.bf16.msra.mxu0 %v296
    %674 = vmatprep.subr.bf16.mxu0 0
    %675 = vmatpush1.bf16.msra.mxu0 0
    %676 = vmatprep.subr.bf16.mxu0 0
    %677 = vmatpush1.bf16.msra.mxu0 0
    %678 = vmatprep.subr.bf16.mxu0 0
    %679 = vmatpush1.bf16.msra.mxu0 0
    %680 = vmatprep.subr.bf16.mxu0 0
    %681 = vmatpush1.bf16.msra.mxu0 0
    %682 = vmatprep.subr.bf16.mxu0 0
    %683 = vmatpush1.bf16.msra.mxu0 0
    %684 = vmatprep.subr.bf16.mxu0 0
    %685 = vmatpush1.bf16.msra.mxu0 0
    %686 = vmatprep.subr.bf16.mxu0 0
    %687 = vmatpush1.bf16.msra.mxu0 0
    %688 = vmatprep.subr.bf16.mxu0 0
    %689 = vmatpush1.bf16.msra.mxu0 0
    %690 = vmatprep.subr.bf16.mxu0 0
    %691 = vmatpush1.bf16.msra.mxu0 0
    %692 = vmatprep.subr.bf16.mxu0 0
    %693 = vmatpush1.bf16.msra.mxu0 0
    %694 = vmatprep.subr.bf16.mxu0 0
    %695 = vmatpush1.bf16.msra.mxu0 0
    %696 = vmatprep.subr.bf16.mxu0 0
    %697 = vmatpush1.bf16.msra.mxu0 0
    %698 = vmatprep.subr.bf16.mxu0 0
    %699 = vmatpush1.bf16.msra.mxu0 0
    %700 = vmatprep.subr.bf16.mxu0 0
    %701 = vmatpush1.bf16.msra.mxu0 0
    %702 = vmatprep.mubr.bf16.mxu0 0
    %703 = vmatmul.mubr.bf16.gmra.mrb[0].mxu0 %v668
    %v704 = vpop.f32.mrb[0].mxu0
    %v705 = vadd.f32 %v659, %v704
    %v706 = vpop.f32.mrb[0].mxu0
    %v707 = vpop.f32.mrb[0].mxu0
    %v708 = vpop.f32.mrb[0].mxu0
    %709 = vdwg.mxu0
    %v710 = vadd.f32 %v705, %v70
    %v711 = vxor.u32 %v710, 2147483648
    %v712 = vmul.f32 %v711, 1.442695
    %v713 = vpow.pop %v712
    %v714 = vadd.f32 %v713, 1.0
    %v715 = vrcp.pop %v714
    %v716 = vmul.f32 1.0, %v715
    %v717 = vtanh.pop %v710
    %v718 = vmul.f32 %v716, %v544
    %720 = vrot.lane.b32.xlu0 %v717, 32
    %v721 = vpop.permute.xlu0 %720
    %v723 = vmul.f32 %v716, %v721
    %725 = vrot.lane.b32.xlu0 %v723, 32
    %v726 = vpop.permute.xlu0 %725
    %v728 = vadd.f32 %v718, %v726
    %v729 = vtanh.pop %v728
    %731 = vrot.lane.b32.xlu0 %v729, 32
    %v732 = vpop.permute.xlu0 %731
    %v734 = vmul.f32 %v716, %v732
    %735 = vmatprep.subr.bf16.mxu0 0
    %736 = vmatpush1.bf16.msra.mxu0 %v158
    %737 = vmatprep.subr.bf16.mxu0 0
    %738 = vmatpush1.bf16.msra.mxu0 %v159
    %739 = vmatprep.subr.bf16.mxu0 0
    %740 = vmatpush1.bf16.msra.mxu0 0
    %741 = vmatprep.subr.bf16.mxu0 0
    %742 = vmatpush1.bf16.msra.mxu0 0
    %743 = vmatprep.subr.bf16.mxu0 0
    %744 = vmatpush1.bf16.msra.mxu0 0
    %745 = vmatprep.subr.bf16.mxu0 0
    %746 = vmatpush1.bf16.msra.mxu0 0
    %747 = vmatprep.subr.bf16.mxu0 0
    %748 = vmatpush1.bf16.msra.mxu0 0
    %749 = vmatprep.subr.bf16.mxu0 0
    %750 = vmatpush1.bf16.msra.mxu0 0
    %751 = vmatprep.subr.bf16.mxu0 0
    %752 = vmatpush1.bf16.msra.mxu0 0
    %753 = vmatprep.subr.bf16.mxu0 0
    %754 = vmatpush1.bf16.msra.mxu0 0
    %755 = vmatprep.subr.bf16.mxu0 0
    %756 = vmatpush1.bf16.msra.mxu0 0
    %757 = vmatprep.subr.bf16.mxu0 0
    %758 = vmatpush1.bf16.msra.mxu0 0
    %759 = vmatprep.subr.bf16.mxu0 0
    %760 = vmatpush1.bf16.msra.mxu0 0
    %761 = vmatprep.subr.bf16.mxu0 0
    %762 = vmatpush1.bf16.msra.mxu0 0
    %763 = vmatprep.subr.bf16.mxu0 0
    %764 = vmatpush1.bf16.msra.mxu0 0
    %765 = vmatprep.subr.bf16.mxu0 0
    %766 = vmatpush1.bf16.msra.mxu0 0
    %767 = vmatprep.mubr.bf16.mxu0 0
    %768 = vmatmul.mubr.bf16.gmra.mrb[0].mxu0 %v668
    %v769 = vpop.f32.mrb[0].mxu0
    %v770 = vadd.f32 0.0, %v769
    %v771 = vpop.f32.mrb[0].mxu0
    %v772 = vpop.f32.mrb[0].mxu0
    %v773 = vpop.f32.mrb[0].mxu0
    %774 = vdwg.mxu0
    %v775 = vadd.f32 %v145, %v770
    %v776 = vxor.u32 %v775, 2147483648
    %v777 = vmul.f32 %v776, 1.442695
    %v778 = vpow.pop %v777
    %v779 = vadd.f32 %v778, 1.0
    %v780 = vrcp.pop %v779
    %v781 = vmul.f32 1.0, %v780
    %v782 = vtanh.pop %v775
    %v783 = vmul.f32 %v781, %v609
    %785 = vrot.lane.b32.xlu0 %v782, 32
    %v786 = vpop.permute.xlu0 %785
    %v788 = vmul.f32 %v781, %v786
    %790 = vrot.lane.b32.xlu0 %v788, 32
    %v791 = vpop.permute.xlu0 %790
    %v793 = vadd.f32 %v783, %v791
    %v794 = vtanh.pop %v793
    %796 = vrot.lane.b32.xlu0 %v794, 32
    %v797 = vpop.permute.xlu0 %796
    %v799 = vmul.f32 %v781, %v797
    %v800 = vpack.c.bf16 %v799, %v799
    %v801 = vpack.c.bf16 %v734, %v734
    %803 = vrot.lane.b32.xlu0 %v801, 64
    %v804 = vpop.permute.xlu0 %803
    %v806 = vsel %vm162, %v804, 0
    %808 = vmatprep.subr.bf16.mxu0 0
    %809 = vmatpush1.bf16.msra.mxu0 %v240
    %810 = vmatprep.subr.bf16.mxu0 0
    %811 = vmatpush1.bf16.msra.mxu0 %v241
    %812 = vmatprep.subr.bf16.mxu0 0
    %813 = vmatpush1.bf16.msra.mxu0 0
    %814 = vmatprep.subr.bf16.mxu0 0
    %815 = vmatpush1.bf16.msra.mxu0 0
    %816 = vmatprep.subr.bf16.mxu0 0
    %817 = vmatpush1.bf16.msra.mxu0 0
    %818 = vmatprep.subr.bf16.mxu0 0
    %819 = vmatpush1.bf16.msra.mxu0 0
    %820 = vmatprep.subr.bf16.mxu0 0
    %821 = vmatpush1.bf16.msra.mxu0 0
    %822 = vmatprep.subr.bf16.mxu0 0
    %823 = vmatpush1.bf16.msra.mxu0 0
    %824 = vmatprep.subr.bf16.mxu0 0
    %825 = vmatpush1.bf16.msra.mxu0 0
    %826 = vmatprep.subr.bf16.mxu0 0
    %827 = vmatpush1.bf16.msra.mxu0 0
    %828 = vmatprep.subr.bf16.mxu0 0
    %829 = vmatpush1.bf16.msra.mxu0 0
    %830 = vmatprep.subr.bf16.mxu0 0
    %831 = vmatpush1.bf16.msra.mxu0 0
    %832 = vmatprep.subr.bf16.mxu0 0
    %833 = vmatpush1.bf16.msra.mxu0 0
    %834 = vmatprep.subr.bf16.mxu0 0
    %835 = vmatpush1.bf16.msra.mxu0 0
    %836 = vmatprep.subr.bf16.mxu0 0
    %837 = vmatpush1.bf16.msra.mxu0 0
    %838 = vmatprep.subr.bf16.mxu0 0
    %839 = vmatpush1.bf16.msra.mxu0 0
    %840 = vmatprep.mubr.bf16.mxu0 0
    %841 = vmatmul.mubr.bf16.gmra.mrb[0].mxu0 %v806
    %v842 = vpop.f32.mrb[0].mxu0
    %v843 = vadd.f32 0.0, %v842
    %v844 = vpop.f32.mrb[0].mxu0
    %v845 = vpop.f32.mrb[0].mxu0
    %v846 = vpop.f32.mrb[0].mxu0
    %847 = vdwg.mxu0
    %849 = vrot.lane.b32.xlu0 %v800, 64
    %v850 = vpop.permute.xlu0 %849
    %v852 = vsel %vm162, %v850, 0
    %854 = vmatprep.subr.bf16.mxu0 0
    %855 = vmatpush1.bf16.msra.mxu0 %v295
    %856 = vmatprep.subr.bf16.mxu0 0
    %857 = vmatpush1.bf16.msra.mxu0 %v296
    %858 = vmatprep.subr.bf16.mxu0 0
    %859 = vmatpush1.bf16.msra.mxu0 0
    %860 = vmatprep.subr.bf16.mxu0 0
    %861 = vmatpush1.bf16.msra.mxu0 0
    %862 = vmatprep.subr.bf16.mxu0 0
    %863 = vmatpush1.bf16.msra.mxu0 0
    %864 = vmatprep.subr.bf16.mxu0 0
    %865 = vmatpush1.bf16.msra.mxu0 0
    %866 = vmatprep.subr.bf16.mxu0 0
    %867 = vmatpush1.bf16.msra.mxu0 0
    %868 = vmatprep.subr.bf16.mxu0 0
    %869 = vmatpush1.bf16.msra.mxu0 0
    %870 = vmatprep.subr.bf16.mxu0 0
    %871 = vmatpush1.bf16.msra.mxu0 0
    %872 = vmatprep.subr.bf16.mxu0 0
    %873 = vmatpush1.bf16.msra.mxu0 0
    %874 = vmatprep.subr.bf16.mxu0 0
    %875 = vmatpush1.bf16.msra.mxu0 0
    %876 = vmatprep.subr.bf16.mxu0 0
    %877 = vmatpush1.bf16.msra.mxu0 0
    %878 = vmatprep.subr.bf16.mxu0 0
    %879 = vmatpush1.bf16.msra.mxu0 0
    %880 = vmatprep.subr.bf16.mxu0 0
    %881 = vmatpush1.bf16.msra.mxu0 0
    %882 = vmatprep.subr.bf16.mxu0 0
    %883 = vmatpush1.bf16.msra.mxu0 0
    %884 = vmatprep.subr.bf16.mxu0 0
    %885 = vmatpush1.bf16.msra.mxu0 0
    %886 = vmatprep.mubr.bf16.mxu0 0
    %887 = vmatmul.mubr.bf16.gmra.mrb[0].mxu0 %v852
    %v888 = vpop.f32.mrb[0].mxu0
    %v889 = vadd.f32 %v843, %v888
    %v890 = vpop.f32.mrb[0].mxu0
    %v891 = vpop.f32.mrb[0].mxu0
    %v892 = vpop.f32.mrb[0].mxu0
    %893 = vdwg.mxu0
    %v894 = vadd.f32 %v889, %v70
    %v895 = vxor.u32 %v894, 2147483648
    %v896 = vmul.f32 %v895, 1.442695
    %v897 = vpow.pop %v896
    %v898 = vadd.f32 %v897, 1.0
    %v899 = vrcp.pop %v898
    %v900 = vmul.f32 1.0, %v899
    %v901 = vtanh.pop %v894
    %v902 = vmul.f32 %v900, %v728
    %904 = vrot.lane.b32.xlu0 %v901, 32
    %v905 = vpop.permute.xlu0 %904
    %v907 = vmul.f32 %v900, %v905
    %909 = vrot.lane.b32.xlu0 %v907, 32
    %v910 = vpop.permute.xlu0 %909
    %v912 = vadd.f32 %v902, %v910
    %v913 = vtanh.pop %v912
    %915 = vrot.lane.b32.xlu0 %v913, 32
    %v916 = vpop.permute.xlu0 %915
    %v918 = vmul.f32 %v900, %v916
    %919 = vmatprep.subr.bf16.mxu0 0
    %920 = vmatpush1.bf16.msra.mxu0 %v158
    %921 = vmatprep.subr.bf16.mxu0 0
    %922 = vmatpush1.bf16.msra.mxu0 %v159
    %923 = vmatprep.subr.bf16.mxu0 0
    %924 = vmatpush1.bf16.msra.mxu0 0
    %925 = vmatprep.subr.bf16.mxu0 0
    %926 = vmatpush1.bf16.msra.mxu0 0
    %927 = vmatprep.subr.bf16.mxu0 0
    %928 = vmatpush1.bf16.msra.mxu0 0
    %929 = vmatprep.subr.bf16.mxu0 0
    %930 = vmatpush1.bf16.msra.mxu0 0
    %931 = vmatprep.subr.bf16.mxu0 0
    %932 = vmatpush1.bf16.msra.mxu0 0
    %933 = vmatprep.subr.bf16.mxu0 0
    %934 = vmatpush1.bf16.msra.mxu0 0
    %935 = vmatprep.subr.bf16.mxu0 0
    %936 = vmatpush1.bf16.msra.mxu0 0
    %937 = vmatprep.subr.bf16.mxu0 0
    %938 = vmatpush1.bf16.msra.mxu0 0
    %939 = vmatprep.subr.bf16.mxu0 0
    %940 = vmatpush1.bf16.msra.mxu0 0
    %941 = vmatprep.subr.bf16.mxu0 0
    %942 = vmatpush1.bf16.msra.mxu0 0
    %943 = vmatprep.subr.bf16.mxu0 0
    %944 = vmatpush1.bf16.msra.mxu0 0
    %945 = vmatprep.subr.bf16.mxu0 0
    %946 = vmatpush1.bf16.msra.mxu0 0
    %947 = vmatprep.subr.bf16.mxu0 0
    %948 = vmatpush1.bf16.msra.mxu0 0
    %949 = vmatprep.subr.bf16.mxu0 0
    %950 = vmatpush1.bf16.msra.mxu0 0
    %951 = vmatprep.mubr.bf16.mxu0 0
    %952 = vmatmul.mubr.bf16.gmra.mrb[0].mxu0 %v852
    %v953 = vpop.f32.mrb[0].mxu0
    %v954 = vadd.f32 0.0, %v953
    %v955 = vpop.f32.mrb[0].mxu0
    %v956 = vpop.f32.mrb[0].mxu0
    %v957 = vpop.f32.mrb[0].mxu0
    %958 = vdwg.mxu0
    %v959 = vadd.f32 %v146, %v954
    %v960 = vxor.u32 %v959, 2147483648
    %v961 = vmul.f32 %v960, 1.442695
    %v962 = vpow.pop %v961
    %v963 = vadd.f32 %v962, 1.0
    %v964 = vrcp.pop %v963
    %v965 = vmul.f32 1.0, %v964
    %v966 = vtanh.pop %v959
    %v967 = vmul.f32 %v965, %v793
    %969 = vrot.lane.b32.xlu0 %v966, 32
    %v970 = vpop.permute.xlu0 %969
    %v972 = vmul.f32 %v965, %v970
    %974 = vrot.lane.b32.xlu0 %v972, 32
    %v975 = vpop.permute.xlu0 %974
    %v977 = vadd.f32 %v967, %v975
    %v978 = vtanh.pop %v977
    %980 = vrot.lane.b32.xlu0 %v978, 32
    %v981 = vpop.permute.xlu0 %980
    %v983 = vmul.f32 %v965, %v981
    %v984 = vpack.c.bf16 %v983, %v983
    %v985 = vpack.c.bf16 %v918, %v918
    %987 = vrot.lane.b32.xlu0 %v985, 64
    %v988 = vpop.permute.xlu0 %987
    %v990 = vsel %vm162, %v988, 0
    %992 = vmatprep.subr.bf16.mxu0 0
    %993 = vmatpush1.bf16.msra.mxu0 %v240
    %994 = vmatprep.subr.bf16.mxu0 0
    %995 = vmatpush1.bf16.msra.mxu0 %v241
    %996 = vmatprep.subr.bf16.mxu0 0
    %997 = vmatpush1.bf16.msra.mxu0 0
    %998 = vmatprep.subr.bf16.mxu0 0
    %999 = vmatpush1.bf16.msra.mxu0 0
    %1000 = vmatprep.subr.bf16.mxu0 0
    %1001 = vmatpush1.bf16.msra.mxu0 0
    %1002 = vmatprep.subr.bf16.mxu0 0
    %1003 = vmatpush1.bf16.msra.mxu0 0
    %1004 = vmatprep.subr.bf16.mxu0 0
    %1005 = vmatpush1.bf16.msra.mxu0 0
    %1006 = vmatprep.subr.bf16.mxu0 0
    %1007 = vmatpush1.bf16.msra.mxu0 0
    %1008 = vmatprep.subr.bf16.mxu0 0
    %1009 = vmatpush1.bf16.msra.mxu0 0
    %1010 = vmatprep.subr.bf16.mxu0 0
    %1011 = vmatpush1.bf16.msra.mxu0 0
    %1012 = vmatprep.subr.bf16.mxu0 0
    %1013 = vmatpush1.bf16.msra.mxu0 0
    %1014 = vmatprep.subr.bf16.mxu0 0
    %1015 = vmatpush1.bf16.msra.mxu0 0
    %1016 = vmatprep.subr.bf16.mxu0 0
    %1017 = vmatpush1.bf16.msra.mxu0 0
    %1018 = vmatprep.subr.bf16.mxu0 0
    %1019 = vmatpush1.bf16.msra.mxu0 0
    %1020 = vmatprep.subr.bf16.mxu0 0
    %1021 = vmatpush1.bf16.msra.mxu0 0
    %1022 = vmatprep.subr.bf16.mxu0 0
    %1023 = vmatpush1.bf16.msra.mxu0 0
    %1024 = vmatprep.mubr.bf16.mxu0 0
    %1025 = vmatmul.mubr.bf16.gmra.mrb[0].mxu0 %v990
    %v1026 = vpop.f32.mrb[0].mxu0
    %v1027 = vadd.f32 0.0, %v1026
    %v1028 = vpop.f32.mrb[0].mxu0
    %v1029 = vpop.f32.mrb[0].mxu0
    %v1030 = vpop.f32.mrb[0].mxu0
    %1031 = vdwg.mxu0
    %1033 = vrot.lane.b32.xlu0 %v984, 64
    %v1034 = vpop.permute.xlu0 %1033
    %v1036 = vsel %vm162, %v1034, 0
    %1038 = vmatprep.subr.bf16.mxu0 0
    %1039 = vmatpush1.bf16.msra.mxu0 %v295
    %1040 = vmatprep.subr.bf16.mxu0 0
    %1041 = vmatpush1.bf16.msra.mxu0 %v296
    %1042 = vmatprep.subr.bf16.mxu0 0
    %1043 = vmatpush1.bf16.msra.mxu0 0
    %1044 = vmatprep.subr.bf16.mxu0 0
    %1045 = vmatpush1.bf16.msra.mxu0 0
    %1046 = vmatprep.subr.bf16.mxu0 0
    %1047 = vmatpush1.bf16.msra.mxu0 0
    %1048 = vmatprep.subr.bf16.mxu0 0
    %1049 = vmatpush1.bf16.msra.mxu0 0
    %1050 = vmatprep.subr.bf16.mxu0 0
    %1051 = vmatpush1.bf16.msra.mxu0 0
    %1052 = vmatprep.subr.bf16.mxu0 0
    %1053 = vmatpush1.bf16.msra.mxu0 0
    %1054 = vmatprep.subr.bf16.mxu0 0
    %1055 = vmatpush1.bf16.msra.mxu0 0
    %1056 = vmatprep.subr.bf16.mxu0 0
    %1057 = vmatpush1.bf16.msra.mxu0 0
    %1058 = vmatprep.subr.bf16.mxu0 0
    %1059 = vmatpush1.bf16.msra.mxu0 0
    %1060 = vmatprep.subr.bf16.mxu0 0
    %1061 = vmatpush1.bf16.msra.mxu0 0
    %1062 = vmatprep.subr.bf16.mxu0 0
    %1063 = vmatpush1.bf16.msra.mxu0 0
    %1064 = vmatprep.subr.bf16.mxu0 0
    %1065 = vmatpush1.bf16.msra.mxu0 0
    %1066 = vmatprep.subr.bf16.mxu0 0
    %1067 = vmatpush1.bf16.msra.mxu0 0
    %1068 = vmatprep.subr.bf16.mxu0 0
    %1069 = vmatpush1.bf16.msra.mxu0 0
    %1070 = vmatprep.mubr.bf16.mxu0 0
    %1071 = vmatmul.mubr.bf16.gmra.mrb[0].mxu0 %v1036
    %v1072 = vpop.f32.mrb[0].mxu0
    %v1073 = vadd.f32 %v1027, %v1072
    %v1074 = vpop.f32.mrb[0].mxu0
    %v1075 = vpop.f32.mrb[0].mxu0
    %v1076 = vpop.f32.mrb[0].mxu0
    %1077 = vdwg.mxu0
    %v1078 = vadd.f32 %v1073, %v70
    %v1079 = vxor.u32 %v1078, 2147483648
    %v1080 = vmul.f32 %v1079, 1.442695
    %v1081 = vpow.pop %v1080
    %v1082 = vadd.f32 %v1081, 1.0
    %v1083 = vrcp.pop %v1082
    %v1084 = vmul.f32 1.0, %v1083
    %v1085 = vtanh.pop %v1078
    %v1086 = vmul.f32 %v1084, %v912
    %1088 = vrot.lane.b32.xlu0 %v1085, 32
    %v1089 = vpop.permute.xlu0 %1088
    %v1091 = vmul.f32 %v1084, %v1089
    %1093 = vrot.lane.b32.xlu0 %v1091, 32
    %v1094 = vpop.permute.xlu0 %1093
    %v1096 = vadd.f32 %v1086, %v1094
    %v1097 = vtanh.pop %v1096
    %1099 = vrot.lane.b32.xlu0 %v1097, 32
    %v1100 = vpop.permute.xlu0 %1099
    %v1102 = vmul.f32 %v1084, %v1100
    %1103 = vmatprep.subr.bf16.mxu0 0
    %1104 = vmatpush1.bf16.msra.mxu0 %v158
    %1105 = vmatprep.subr.bf16.mxu0 0
    %1106 = vmatpush1.bf16.msra.mxu0 %v159
    %1107 = vmatprep.subr.bf16.mxu0 0
    %1108 = vmatpush1.bf16.msra.mxu0 0
    %1109 = vmatprep.subr.bf16.mxu0 0
    %1110 = vmatpush1.bf16.msra.mxu0 0
    %1111 = vmatprep.subr.bf16.mxu0 0
    %1112 = vmatpush1.bf16.msra.mxu0 0
    %1113 = vmatprep.subr.bf16.mxu0 0
    %1114 = vmatpush1.bf16.msra.mxu0 0
    %1115 = vmatprep.subr.bf16.mxu0 0
    %1116 = vmatpush1.bf16.msra.mxu0 0
    %1117 = vmatprep.subr.bf16.mxu0 0
    %1118 = vmatpush1.bf16.msra.mxu0 0
    %1119 = vmatprep.subr.bf16.mxu0 0
    %1120 = vmatpush1.bf16.msra.mxu0 0
    %1121 = vmatprep.subr.bf16.mxu0 0
    %1122 = vmatpush1.bf16.msra.mxu0 0
    %1123 = vmatprep.subr.bf16.mxu0 0
    %1124 = vmatpush1.bf16.msra.mxu0 0
    %1125 = vmatprep.subr.bf16.mxu0 0
    %1126 = vmatpush1.bf16.msra.mxu0 0
    %1127 = vmatprep.subr.bf16.mxu0 0
    %1128 = vmatpush1.bf16.msra.mxu0 0
    %1129 = vmatprep.subr.bf16.mxu0 0
    %1130 = vmatpush1.bf16.msra.mxu0 0
    %1131 = vmatprep.subr.bf16.mxu0 0
    %1132 = vmatpush1.bf16.msra.mxu0 0
    %1133 = vmatprep.subr.bf16.mxu0 0
    %1134 = vmatpush1.bf16.msra.mxu0 0
    %1135 = vmatprep.mubr.bf16.mxu0 0
    %1136 = vmatmul.mubr.bf16.gmra.mrb[0].mxu0 %v1036
    %v1137 = vpop.f32.mrb[0].mxu0
    %v1138 = vadd.f32 0.0, %v1137
    %v1139 = vpop.f32.mrb[0].mxu0
    %v1140 = vpop.f32.mrb[0].mxu0
    %v1141 = vpop.f32.mrb[0].mxu0
    %1142 = vdwg.mxu0
    %v1143 = vadd.f32 %v147, %v1138
    %v1144 = vxor.u32 %v1143, 2147483648
    %v1145 = vmul.f32 %v1144, 1.442695
    %v1146 = vpow.pop %v1145
    %v1147 = vadd.f32 %v1146, 1.0
    %v1148 = vrcp.pop %v1147
    %v1149 = vmul.f32 1.0, %v1148
    %v1150 = vtanh.pop %v1143
    %v1151 = vmul.f32 %v1149, %v977
    %1153 = vrot.lane.b32.xlu0 %v1150, 32
    %v1154 = vpop.permute.xlu0 %1153
    %v1156 = vmul.f32 %v1149, %v1154
    %1158 = vrot.lane.b32.xlu0 %v1156, 32
    %v1159 = vpop.permute.xlu0 %1158
    %v1161 = vadd.f32 %v1151, %v1159
    %v1162 = vtanh.pop %v1161
    %1164 = vrot.lane.b32.xlu0 %v1162, 32
    %v1165 = vpop.permute.xlu0 %1164
    %v1167 = vmul.f32 %v1149, %v1165
    %v1168 = vpack.c.bf16 %v1167, %v1167
    %v1169 = vpack.c.bf16 %v1102, %v1102
    %1171 = vrot.lane.b32.xlu0 %v1169, 64
    %v1172 = vpop.permute.xlu0 %1171
    %v1174 = vsel %vm162, %v1172, 0
    %1176 = vmatprep.subr.bf16.mxu0 0
    %1177 = vmatpush1.bf16.msra.mxu0 %v240
    %1178 = vmatprep.subr.bf16.mxu0 0
    %1179 = vmatpush1.bf16.msra.mxu0 %v241
    %1180 = vmatprep.subr.bf16.mxu0 0
    %1181 = vmatpush1.bf16.msra.mxu0 0
    %1182 = vmatprep.subr.bf16.mxu0 0
    %1183 = vmatpush1.bf16.msra.mxu0 0
    %1184 = vmatprep.subr.bf16.mxu0 0
    %1185 = vmatpush1.bf16.msra.mxu0 0
    %1186 = vmatprep.subr.bf16.mxu0 0
    %1187 = vmatpush1.bf16.msra.mxu0 0
    %1188 = vmatprep.subr.bf16.mxu0 0
    %1189 = vmatpush1.bf16.msra.mxu0 0
    %1190 = vmatprep.subr.bf16.mxu0 0
    %1191 = vmatpush1.bf16.msra.mxu0 0
    %1192 = vmatprep.subr.bf16.mxu0 0
    %1193 = vmatpush1.bf16.msra.mxu0 0
    %1194 = vmatprep.subr.bf16.mxu0 0
    %1195 = vmatpush1.bf16.msra.mxu0 0
    %1196 = vmatprep.subr.bf16.mxu0 0
    %1197 = vmatpush1.bf16.msra.mxu0 0
    %1198 = vmatprep.subr.bf16.mxu0 0
    %1199 = vmatpush1.bf16.msra.mxu0 0
    %1200 = vmatprep.subr.bf16.mxu0 0
    %1201 = vmatpush1.bf16.msra.mxu0 0
    %1202 = vmatprep.subr.bf16.mxu0 0
    %1203 = vmatpush1.bf16.msra.mxu0 0
    %1204 = vmatprep.subr.bf16.mxu0 0
    %1205 = vmatpush1.bf16.msra.mxu0 0
    %1206 = vmatprep.subr.bf16.mxu0 0
    %1207 = vmatpush1.bf16.msra.mxu0 0
    %1208 = vmatprep.mubr.bf16.mxu0 0
    %1209 = vmatmul.mubr.bf16.gmra.mrb[0].mxu0 %v1174
    %v1210 = vpop.f32.mrb[0].mxu0
    %v1211 = vadd.f32 0.0, %v1210
    %v1212 = vpop.f32.mrb[0].mxu0
    %v1213 = vpop.f32.mrb[0].mxu0
    %v1214 = vpop.f32.mrb[0].mxu0
    %1215 = vdwg.mxu0
    %1217 = vrot.lane.b32.xlu0 %v1168, 64
    %v1218 = vpop.permute.xlu0 %1217
    %v1220 = vsel %vm162, %v1218, 0
    %1222 = vmatprep.subr.bf16.mxu0 0
    %1223 = vmatpush1.bf16.msra.mxu0 %v295
    %1224 = vmatprep.subr.bf16.mxu0 0
    %1225 = vmatpush1.bf16.msra.mxu0 %v296
    %1226 = vmatprep.subr.bf16.mxu0 0
    %1227 = vmatpush1.bf16.msra.mxu0 0
    %1228 = vmatprep.subr.bf16.mxu0 0
    %1229 = vmatpush1.bf16.msra.mxu0 0
    %1230 = vmatprep.subr.bf16.mxu0 0
    %1231 = vmatpush1.bf16.msra.mxu0 0
    %1232 = vmatprep.subr.bf16.mxu0 0
    %1233 = vmatpush1.bf16.msra.mxu0 0
    %1234 = vmatprep.subr.bf16.mxu0 0
    %1235 = vmatpush1.bf16.msra.mxu0 0
    %1236 = vmatprep.subr.bf16.mxu0 0
    %1237 = vmatpush1.bf16.msra.mxu0 0
    %1238 = vmatprep.subr.bf16.mxu0 0
    %1239 = vmatpush1.bf16.msra.mxu0 0
    %1240 = vmatprep.subr.bf16.mxu0 0
    %1241 = vmatpush1.bf16.msra.mxu0 0
    %1242 = vmatprep.subr.bf16.mxu0 0
    %1243 = vmatpush1.bf16.msra.mxu0 0
    %1244 = vmatprep.subr.bf16.mxu0 0
    %1245 = vmatpush1.bf16.msra.mxu0 0
    %1246 = vmatprep.subr.bf16.mxu0 0
    %1247 = vmatpush1.bf16.msra.mxu0 0
    %1248 = vmatprep.subr.bf16.mxu0 0
    %1249 = vmatpush1.bf16.msra.mxu0 0
    %1250 = vmatprep.subr.bf16.mxu0 0
    %1251 = vmatpush1.bf16.msra.mxu0 0
    %1252 = vmatprep.subr.bf16.mxu0 0
    %1253 = vmatpush1.bf16.msra.mxu0 0
    %1254 = vmatprep.mubr.bf16.mxu0 0
    %1255 = vmatmul.mubr.bf16.gmra.mrb[0].mxu0 %v1220
    %v1256 = vpop.f32.mrb[0].mxu0
    %v1257 = vadd.f32 %v1211, %v1256
    %v1258 = vpop.f32.mrb[0].mxu0
    %v1259 = vpop.f32.mrb[0].mxu0
    %v1260 = vpop.f32.mrb[0].mxu0
    %1261 = vdwg.mxu0
    %v1262 = vadd.f32 %v1257, %v70
    %v1263 = vxor.u32 %v1262, 2147483648
    %v1264 = vmul.f32 %v1263, 1.442695
    %v1265 = vpow.pop %v1264
    %v1266 = vadd.f32 %v1265, 1.0
    %v1267 = vrcp.pop %v1266
    %v1268 = vmul.f32 1.0, %v1267
    %v1269 = vtanh.pop %v1262
    %v1270 = vmul.f32 %v1268, %v1096
    %1272 = vrot.lane.b32.xlu0 %v1269, 32
    %v1273 = vpop.permute.xlu0 %1272
    %v1275 = vmul.f32 %v1268, %v1273
    %1277 = vrot.lane.b32.xlu0 %v1275, 32
    %v1278 = vpop.permute.xlu0 %1277
    %v1280 = vadd.f32 %v1270, %v1278
    %v1281 = vtanh.pop %v1280
    %1283 = vrot.lane.b32.xlu0 %v1281, 32
    %v1284 = vpop.permute.xlu0 %1283
    %v1286 = vmul.f32 %v1268, %v1284
    %1287 = vmatprep.subr.bf16.mxu0 0
    %1288 = vmatpush1.bf16.msra.mxu0 %v158
    %1289 = vmatprep.subr.bf16.mxu0 0
    %1290 = vmatpush1.bf16.msra.mxu0 %v159
    %1291 = vmatprep.subr.bf16.mxu0 0
    %1292 = vmatpush1.bf16.msra.mxu0 0
    %1293 = vmatprep.subr.bf16.mxu0 0
    %1294 = vmatpush1.bf16.msra.mxu0 0
    %1295 = vmatprep.subr.bf16.mxu0 0
    %1296 = vmatpush1.bf16.msra.mxu0 0
    %1297 = vmatprep.subr.bf16.mxu0 0
    %1298 = vmatpush1.bf16.msra.mxu0 0
    %1299 = vmatprep.subr.bf16.mxu0 0
    %1300 = vmatpush1.bf16.msra.mxu0 0
    %1301 = vmatprep.subr.bf16.mxu0 0
    %1302 = vmatpush1.bf16.msra.mxu0 0
    %1303 = vmatprep.subr.bf16.mxu0 0
    %1304 = vmatpush1.bf16.msra.mxu0 0
    %1305 = vmatprep.subr.bf16.mxu0 0
    %1306 = vmatpush1.bf16.msra.mxu0 0
    %1307 = vmatprep.subr.bf16.mxu0 0
    %1308 = vmatpush1.bf16.msra.mxu0 0
    %1309 = vmatprep.subr.bf16.mxu0 0
    %1310 = vmatpush1.bf16.msra.mxu0 0
    %1311 = vmatprep.subr.bf16.mxu0 0
    %1312 = vmatpush1.bf16.msra.mxu0 0
    %1313 = vmatprep.subr.bf16.mxu0 0
    %1314 = vmatpush1.bf16.msra.mxu0 0
    %1315 = vmatprep.subr.bf16.mxu0 0
    %1316 = vmatpush1.bf16.msra.mxu0 0
    %1317 = vmatprep.subr.bf16.mxu0 0
    %1318 = vmatpush1.bf16.msra.mxu0 0
    %1319 = vmatprep.mubr.bf16.mxu0 0
    %1320 = vmatmul.mubr.bf16.gmra.mrb[0].mxu0 %v1220
    %v1321 = vpop.f32.mrb[0].mxu0
    %v1322 = vadd.f32 0.0, %v1321
    %v1323 = vpop.f32.mrb[0].mxu0
    %v1324 = vpop.f32.mrb[0].mxu0
    %v1325 = vpop.f32.mrb[0].mxu0
    %1326 = vdwg.mxu0
    %v1327 = vadd.f32 %v148, %v1322
    %v1328 = vxor.u32 %v1327, 2147483648
    %v1329 = vmul.f32 %v1328, 1.442695
    %v1330 = vpow.pop %v1329
    %v1331 = vadd.f32 %v1330, 1.0
    %v1332 = vrcp.pop %v1331
    %v1333 = vmul.f32 1.0, %v1332
    %v1334 = vtanh.pop %v1327
    %v1335 = vmul.f32 %v1333, %v1161
    %1337 = vrot.lane.b32.xlu0 %v1334, 32
    %v1338 = vpop.permute.xlu0 %1337
    %v1340 = vmul.f32 %v1333, %v1338
    %1342 = vrot.lane.b32.xlu0 %v1340, 32
    %v1343 = vpop.permute.xlu0 %1342
    %v1345 = vadd.f32 %v1335, %v1343
    %v1346 = vtanh.pop %v1345
    %1348 = vrot.lane.b32.xlu0 %v1346, 32
    %v1349 = vpop.permute.xlu0 %1348
    %v1351 = vmul.f32 %v1333, %v1349
    %v1352 = vpack.c.bf16 %v1351, %v1351
    %v1353 = vpack.c.bf16 %v1286, %v1286
    %1355 = vrot.lane.b32.xlu0 %v1353, 64
    %v1356 = vpop.permute.xlu0 %1355
    %v1358 = vsel %vm162, %v1356, 0
    %1360 = vmatprep.subr.bf16.mxu0 0
    %1361 = vmatpush1.bf16.msra.mxu0 %v240
    %1362 = vmatprep.subr.bf16.mxu0 0
    %1363 = vmatpush1.bf16.msra.mxu0 %v241
    %1364 = vmatprep.subr.bf16.mxu0 0
    %1365 = vmatpush1.bf16.msra.mxu0 0
    %1366 = vmatprep.subr.bf16.mxu0 0
    %1367 = vmatpush1.bf16.msra.mxu0 0
    %1368 = vmatprep.subr.bf16.mxu0 0
    %1369 = vmatpush1.bf16.msra.mxu0 0
    %1370 = vmatprep.subr.bf16.mxu0 0
    %1371 = vmatpush1.bf16.msra.mxu0 0
    %1372 = vmatprep.subr.bf16.mxu0 0
    %1373 = vmatpush1.bf16.msra.mxu0 0
    %1374 = vmatprep.subr.bf16.mxu0 0
    %1375 = vmatpush1.bf16.msra.mxu0 0
    %1376 = vmatprep.subr.bf16.mxu0 0
    %1377 = vmatpush1.bf16.msra.mxu0 0
    %1378 = vmatprep.subr.bf16.mxu0 0
    %1379 = vmatpush1.bf16.msra.mxu0 0
    %1380 = vmatprep.subr.bf16.mxu0 0
    %1381 = vmatpush1.bf16.msra.mxu0 0
    %1382 = vmatprep.subr.bf16.mxu0 0
    %1383 = vmatpush1.bf16.msra.mxu0 0
    %1384 = vmatprep.subr.bf16.mxu0 0
    %1385 = vmatpush1.bf16.msra.mxu0 0
    %1386 = vmatprep.subr.bf16.mxu0 0
    %1387 = vmatpush1.bf16.msra.mxu0 0
    %1388 = vmatprep.subr.bf16.mxu0 0
    %1389 = vmatpush1.bf16.msra.mxu0 0
    %1390 = vmatprep.subr.bf16.mxu0 0
    %1391 = vmatpush1.bf16.msra.mxu0 0
    %1392 = vmatprep.mubr.bf16.mxu0 0
    %1393 = vmatmul.mubr.bf16.gmra.mrb[0].mxu0 %v1358
    %v1394 = vpop.f32.mrb[0].mxu0
    %v1395 = vadd.f32 0.0, %v1394
    %v1396 = vpop.f32.mrb[0].mxu0
    %v1397 = vpop.f32.mrb[0].mxu0
    %v1398 = vpop.f32.mrb[0].mxu0
    %1399 = vdwg.mxu0
    %1401 = vrot.lane.b32.xlu0 %v1352, 64
    %v1402 = vpop.permute.xlu0 %1401
    %v1404 = vsel %vm162, %v1402, 0
    %1406 = vmatprep.subr.bf16.mxu0 0
    %1407 = vmatpush1.bf16.msra.mxu0 %v295
    %1408 = vmatprep.subr.bf16.mxu0 0
    %1409 = vmatpush1.bf16.msra.mxu0 %v296
    %1410 = vmatprep.subr.bf16.mxu0 0
    %1411 = vmatpush1.bf16.msra.mxu0 0
    %1412 = vmatprep.subr.bf16.mxu0 0
    %1413 = vmatpush1.bf16.msra.mxu0 0
    %1414 = vmatprep.subr.bf16.mxu0 0
    %1415 = vmatpush1.bf16.msra.mxu0 0
    %1416 = vmatprep.subr.bf16.mxu0 0
    %1417 = vmatpush1.bf16.msra.mxu0 0
    %1418 = vmatprep.subr.bf16.mxu0 0
    %1419 = vmatpush1.bf16.msra.mxu0 0
    %1420 = vmatprep.subr.bf16.mxu0 0
    %1421 = vmatpush1.bf16.msra.mxu0 0
    %1422 = vmatprep.subr.bf16.mxu0 0
    %1423 = vmatpush1.bf16.msra.mxu0 0
    %1424 = vmatprep.subr.bf16.mxu0 0
    %1425 = vmatpush1.bf16.msra.mxu0 0
    %1426 = vmatprep.subr.bf16.mxu0 0
    %1427 = vmatpush1.bf16.msra.mxu0 0
    %1428 = vmatprep.subr.bf16.mxu0 0
    %1429 = vmatpush1.bf16.msra.mxu0 0
    %1430 = vmatprep.subr.bf16.mxu0 0
    %1431 = vmatpush1.bf16.msra.mxu0 0
    %1432 = vmatprep.subr.bf16.mxu0 0
    %1433 = vmatpush1.bf16.msra.mxu0 0
    %1434 = vmatprep.subr.bf16.mxu0 0
    %1435 = vmatpush1.bf16.msra.mxu0 0
    %1436 = vmatprep.subr.bf16.mxu0 0
    %1437 = vmatpush1.bf16.msra.mxu0 0
    %1438 = vmatprep.mubr.bf16.mxu0 0
    %1439 = vmatmul.mubr.bf16.gmra.mrb[0].mxu0 %v1404
    %v1440 = vpop.f32.mrb[0].mxu0
    %v1441 = vadd.f32 %v1395, %v1440
    %v1442 = vpop.f32.mrb[0].mxu0
    %v1443 = vpop.f32.mrb[0].mxu0
    %v1444 = vpop.f32.mrb[0].mxu0
    %1445 = vdwg.mxu0
    %v1446 = vadd.f32 %v1441, %v70
    %v1447 = vxor.u32 %v1446, 2147483648
    %v1448 = vmul.f32 %v1447, 1.442695
    %v1449 = vpow.pop %v1448
    %v1450 = vadd.f32 %v1449, 1.0
    %v1451 = vrcp.pop %v1450
    %v1452 = vmul.f32 1.0, %v1451
    %v1453 = vtanh.pop %v1446
    %v1454 = vmul.f32 %v1452, %v1280
    %1456 = vrot.lane.b32.xlu0 %v1453, 32
    %v1457 = vpop.permute.xlu0 %1456
    %v1459 = vmul.f32 %v1452, %v1457
    %1461 = vrot.lane.b32.xlu0 %v1459, 32
    %v1462 = vpop.permute.xlu0 %1461
    %v1464 = vadd.f32 %v1454, %v1462
    %v1465 = vtanh.pop %v1464
    %1467 = vrot.lane.b32.xlu0 %v1465, 32
    %v1468 = vpop.permute.xlu0 %1467
    %v1470 = vmul.f32 %v1452, %v1468
    %1471 = vmatprep.subr.bf16.mxu0 0
    %1472 = vmatpush1.bf16.msra.mxu0 %v158
    %1473 = vmatprep.subr.bf16.mxu0 0
    %1474 = vmatpush1.bf16.msra.mxu0 %v159
    %1475 = vmatprep.subr.bf16.mxu0 0
    %1476 = vmatpush1.bf16.msra.mxu0 0
    %1477 = vmatprep.subr.bf16.mxu0 0
    %1478 = vmatpush1.bf16.msra.mxu0 0
    %1479 = vmatprep.subr.bf16.mxu0 0
    %1480 = vmatpush1.bf16.msra.mxu0 0
    %1481 = vmatprep.subr.bf16.mxu0 0
    %1482 = vmatpush1.bf16.msra.mxu0 0
    %1483 = vmatprep.subr.bf16.mxu0 0
    %1484 = vmatpush1.bf16.msra.mxu0 0
    %1485 = vmatprep.subr.bf16.mxu0 0
    %1486 = vmatpush1.bf16.msra.mxu0 0
    %1487 = vmatprep.subr.bf16.mxu0 0
    %1488 = vmatpush1.bf16.msra.mxu0 0
    %1489 = vmatprep.subr.bf16.mxu0 0
    %1490 = vmatpush1.bf16.msra.mxu0 0
    %1491 = vmatprep.subr.bf16.mxu0 0
    %1492 = vmatpush1.bf16.msra.mxu0 0
    %1493 = vmatprep.subr.bf16.mxu0 0
    %1494 = vmatpush1.bf16.msra.mxu0 0
    %1495 = vmatprep.subr.bf16.mxu0 0
    %1496 = vmatpush1.bf16.msra.mxu0 0
    %1497 = vmatprep.subr.bf16.mxu0 0
    %1498 = vmatpush1.bf16.msra.mxu0 0
    %1499 = vmatprep.subr.bf16.mxu0 0
    %1500 = vmatpush1.bf16.msra.mxu0 0
    %1501 = vmatprep.subr.bf16.mxu0 0
    %1502 = vmatpush1.bf16.msra.mxu0 0
    %1503 = vmatprep.mubr.bf16.mxu0 0
    %1504 = vmatmul.mubr.bf16.gmra.mrb[0].mxu0 %v1404
    %v1505 = vpop.f32.mrb[0].mxu0
    %v1506 = vadd.f32 0.0, %v1505
    %v1507 = vpop.f32.mrb[0].mxu0
    %v1508 = vpop.f32.mrb[0].mxu0
    %v1509 = vpop.f32.mrb[0].mxu0
    %1510 = vdwg.mxu0
    %v1511 = vadd.f32 %v149, %v1506
    %v1512 = vxor.u32 %v1511, 2147483648
    %v1513 = vmul.f32 %v1512, 1.442695
    %v1514 = vpow.pop %v1513
    %v1515 = vadd.f32 %v1514, 1.0
    %v1516 = vrcp.pop %v1515
    %v1517 = vmul.f32 1.0, %v1516
    %v1518 = vtanh.pop %v1511
    %v1519 = vmul.f32 %v1517, %v1345
    %1521 = vrot.lane.b32.xlu0 %v1518, 32
    %v1522 = vpop.permute.xlu0 %1521
    %v1524 = vmul.f32 %v1517, %v1522
    %1526 = vrot.lane.b32.xlu0 %v1524, 32
    %v1527 = vpop.permute.xlu0 %1526
    %v1529 = vadd.f32 %v1519, %v1527
    %v1530 = vtanh.pop %v1529
    %1532 = vrot.lane.b32.xlu0 %v1530, 32
    %v1533 = vpop.permute.xlu0 %1532
    %v1535 = vmul.f32 %v1517, %v1533
    %v1536 = vpack.c.bf16 %v1535, %v1535
    %v1537 = vpack.c.bf16 %v1470, %v1470
    %1539 = vrot.lane.b32.xlu0 %v1537, 64
    %v1540 = vpop.permute.xlu0 %1539
    %v1542 = vsel %vm162, %v1540, 0
    %1544 = vmatprep.subr.bf16.mxu0 0
    %1545 = vmatpush1.bf16.msra.mxu0 %v240
    %1546 = vmatprep.subr.bf16.mxu0 0
    %1547 = vmatpush1.bf16.msra.mxu0 %v241
    %1548 = vmatprep.subr.bf16.mxu0 0
    %1549 = vmatpush1.bf16.msra.mxu0 0
    %1550 = vmatprep.subr.bf16.mxu0 0
    %1551 = vmatpush1.bf16.msra.mxu0 0
    %1552 = vmatprep.subr.bf16.mxu0 0
    %1553 = vmatpush1.bf16.msra.mxu0 0
    %1554 = vmatprep.subr.bf16.mxu0 0
    %1555 = vmatpush1.bf16.msra.mxu0 0
    %1556 = vmatprep.subr.bf16.mxu0 0
    %1557 = vmatpush1.bf16.msra.mxu0 0
    %1558 = vmatprep.subr.bf16.mxu0 0
    %1559 = vmatpush1.bf16.msra.mxu0 0
    %1560 = vmatprep.subr.bf16.mxu0 0
    %1561 = vmatpush1.bf16.msra.mxu0 0
    %1562 = vmatprep.subr.bf16.mxu0 0
    %1563 = vmatpush1.bf16.msra.mxu0 0
    %1564 = vmatprep.subr.bf16.mxu0 0
    %1565 = vmatpush1.bf16.msra.mxu0 0
    %1566 = vmatprep.subr.bf16.mxu0 0
    %1567 = vmatpush1.bf16.msra.mxu0 0
    %1568 = vmatprep.subr.bf16.mxu0 0
    %1569 = vmatpush1.bf16.msra.mxu0 0
    %1570 = vmatprep.subr.bf16.mxu0 0
    %1571 = vmatpush1.bf16.msra.mxu0 0
    %1572 = vmatprep.subr.bf16.mxu0 0
    %1573 = vmatpush1.bf16.msra.mxu0 0
    %1574 = vmatprep.subr.bf16.mxu0 0
    %1575 = vmatpush1.bf16.msra.mxu0 0
    %1576 = vmatprep.mubr.bf16.mxu0 0
    %1577 = vmatmul.mubr.bf16.gmra.mrb[0].mxu0 %v1542
    %v1578 = vpop.f32.mrb[0].mxu0
    %v1579 = vadd.f32 0.0, %v1578
    %v1580 = vpop.f32.mrb[0].mxu0
    %v1581 = vpop.f32.mrb[0].mxu0
    %v1582 = vpop.f32.mrb[0].mxu0
    %1583 = vdwg.mxu0
    %1585 = vrot.lane.b32.xlu0 %v1536, 64
    %v1586 = vpop.permute.xlu0 %1585
    %v1588 = vsel %vm162, %v1586, 0
    %1590 = vmatprep.subr.bf16.mxu0 0
    %1591 = vmatpush1.bf16.msra.mxu0 %v295
    %1592 = vmatprep.subr.bf16.mxu0 0
    %1593 = vmatpush1.bf16.msra.mxu0 %v296
    %1594 = vmatprep.subr.bf16.mxu0 0
    %1595 = vmatpush1.bf16.msra.mxu0 0
    %1596 = vmatprep.subr.bf16.mxu0 0
    %1597 = vmatpush1.bf16.msra.mxu0 0
    %1598 = vmatprep.subr.bf16.mxu0 0
    %1599 = vmatpush1.bf16.msra.mxu0 0
    %1600 = vmatprep.subr.bf16.mxu0 0
    %1601 = vmatpush1.bf16.msra.mxu0 0
    %1602 = vmatprep.subr.bf16.mxu0 0
    %1603 = vmatpush1.bf16.msra.mxu0 0
    %1604 = vmatprep.subr.bf16.mxu0 0
    %1605 = vmatpush1.bf16.msra.mxu0 0
    %1606 = vmatprep.subr.bf16.mxu0 0
    %1607 = vmatpush1.bf16.msra.mxu0 0
    %1608 = vmatprep.subr.bf16.mxu0 0
    %1609 = vmatpush1.bf16.msra.mxu0 0
    %1610 = vmatprep.subr.bf16.mxu0 0
    %1611 = vmatpush1.bf16.msra.mxu0 0
    %1612 = vmatprep.subr.bf16.mxu0 0
    %1613 = vmatpush1.bf16.msra.mxu0 0
    %1614 = vmatprep.subr.bf16.mxu0 0
    %1615 = vmatpush1.bf16.msra.mxu0 0
    %1616 = vmatprep.subr.bf16.mxu0 0
    %1617 = vmatpush1.bf16.msra.mxu0 0
    %1618 = vmatprep.subr.bf16.mxu0 0
    %1619 = vmatpush1.bf16.msra.mxu0 0
    %1620 = vmatprep.subr.bf16.mxu0 0
    %1621 = vmatpush1.bf16.msra.mxu0 0
    %1622 = vmatprep.mubr.bf16.mxu0 0
    %1623 = vmatmul.mubr.bf16.gmra.mrb[0].mxu0 %v1588
    %v1624 = vpop.f32.mrb[0].mxu0
    %v1625 = vadd.f32 %v1579, %v1624
    %v1626 = vpop.f32.mrb[0].mxu0
    %v1627 = vpop.f32.mrb[0].mxu0
    %v1628 = vpop.f32.mrb[0].mxu0
    %1629 = vdwg.mxu0
    %v1630 = vadd.f32 %v1625, %v70
    %v1631 = vxor.u32 %v1630, 2147483648
    %v1632 = vmul.f32 %v1631, 1.442695
    %v1633 = vpow.pop %v1632
    %v1634 = vadd.f32 %v1633, 1.0
    %v1635 = vrcp.pop %v1634
    %v1636 = vmul.f32 1.0, %v1635
    %v1637 = vtanh.pop %v1630
    %v1638 = vmul.f32 %v1636, %v1464
    %1640 = vrot.lane.b32.xlu0 %v1637, 32
    %v1641 = vpop.permute.xlu0 %1640
    %v1643 = vmul.f32 %v1636, %v1641
    %1645 = vrot.lane.b32.xlu0 %v1643, 32
    %v1646 = vpop.permute.xlu0 %1645
    %v1648 = vadd.f32 %v1638, %v1646
    %v1649 = vtanh.pop %v1648
    %1651 = vrot.lane.b32.xlu0 %v1649, 32
    %v1652 = vpop.permute.xlu0 %1651
    %v1654 = vmul.f32 %v1636, %v1652
    %v1655 = vld [vmem:[%s7] sm:$0xff]
    %v1656 = vld [vmem:[%s7 + $0x8] sm:$0xff]
    %v1657 = vld [vmem:[%s7 + $0x10] sm:$0xff]
    %v1658 = vld [vmem:[%s7 + $0x18] sm:$0xff]
    %v1659 = vld [vmem:[%s8] sm:$0xff]
    %v1660 = vld [vmem:[%s8 + $0x8] sm:$0xff]
    %v1661 = vld [vmem:[%s8 + $0x10] sm:$0xff]
    %v1662 = vld [vmem:[%s8 + $0x18] sm:$0xff]
    %v1663 = vld [vmem:[%s8 + $0x20] sm:$0xff]
    %v1664 = vld [vmem:[%s8 + $0x28] sm:$0xff]
    %v1665 = vld [vmem:[%s8 + $0x30] sm:$0xff]
    %v1666 = vld [vmem:[%s8 + $0x38] sm:$0xff]
    %v1667 = vld [vmem:[%s8 + $0x40] sm:$0xff]
    %v1668 = vld [vmem:[%s8 + $0x48] sm:$0xff]
    %v1669 = vld [vmem:[%s8 + $0x50] sm:$0xff]
    %v1670 = vld [vmem:[%s8 + $0x58] sm:$0xff]
    %v1671 = vld [vmem:[%s8 + $0x60] sm:$0xff]
    %v1672 = vld [vmem:[%s8 + $0x68] sm:$0xff]
    %v1673 = vld [vmem:[%s8 + $0x70] sm:$0xff]
    %v1674 = vld [vmem:[%s8 + $0x78] sm:$0xff]
    %v1675 = vld [vmem:[%s8 + $0x80] sm:$0xff]
    %v1676 = vld [vmem:[%s8 + $0x88] sm:$0xff]
    %v1677 = vld [vmem:[%s8 + $0x90] sm:$0xff]
    %v1678 = vld [vmem:[%s8 + $0x98] sm:$0xff]
    %v1679 = vld [vmem:[%s8 + $0xa0] sm:$0xff]
    %v1680 = vld [vmem:[%s8 + $0xa8] sm:$0xff]
    %v1681 = vld [vmem:[%s8 + $0xb0] sm:$0xff]
    %v1682 = vld [vmem:[%s8 + $0xb8] sm:$0xff]
    %v1683 = vld [vmem:[%s8 + $0xc0] sm:$0xff]
    %v1684 = vld [vmem:[%s8 + $0xc8] sm:$0xff]
    %v1685 = vld [vmem:[%s8 + $0xd0] sm:$0xff]
    %v1686 = vld [vmem:[%s8 + $0xd8] sm:$0xff]
    %v1687 = vld [vmem:[%s8 + $0xe0] sm:$0xff]
    %v1688 = vld [vmem:[%s8 + $0xe8] sm:$0xff]
    %v1689 = vld [vmem:[%s8 + $0xf0] sm:$0xff]
    %v1690 = vld [vmem:[%s8 + $0xf8] sm:$0xff]
    %v1691 = vxor.u32 %v1654, 2147483648
    %v1692 = vmul.f32 %v1691, 1.442695
    %v1693 = vpow.pop %v1692
    %v1694 = vadd.f32 %v1693, 1.0
    %v1695 = vrcp.pop %v1694
    %v1696 = vmul.f32 1.0, %v1695
    %v1697 = vmul.f32 %v1654, %v1696
    %vm1698 = vcmp.ge.f32.partialorder %v1654, -2.2
    %vm1699 = vcmp.lt.f32.partialorder %v1654, -1.8
    %vm1700 = vmand %vm1698, %vm1699
    %v1701 = vsel %vm1700, 1, 0
    %v1702 = vcvt.s32.f32 %v1701
    %vm1703 = vcmp.ge.f32.partialorder %v1654, -1.8
    %vm1704 = vcmp.lt.f32.partialorder %v1654, -1.4
    %vm1705 = vmand %vm1703, %vm1704
    %v1706 = vsel %vm1705, 1, 0
    %v1707 = vcvt.s32.f32 %v1706
    %vm1708 = vcmp.ge.f32.partialorder %v1654, -1.4
    %vm1709 = vcmp.lt.f32.partialorder %v1654, -1.0
    %vm1710 = vmand %vm1708, %vm1709
    %v1711 = vsel %vm1710, 1, 0
    %v1712 = vcvt.s32.f32 %v1711
    %vm1713 = vcmp.ge.f32.partialorder %v1654, -1.0
    %vm1714 = vcmp.lt.f32.partialorder %v1654, -0.6
    %vm1715 = vmand %vm1713, %vm1714
    %v1716 = vsel %vm1715, 1, 0
    %v1717 = vcvt.s32.f32 %v1716
    %vm1718 = vcmp.ge.f32.partialorder %v1654, -0.6
    %vm1719 = vcmp.lt.f32.partialorder %v1654, -0.2
    %vm1720 = vmand %vm1718, %vm1719
    %v1721 = vsel %vm1720, 1, 0
    %v1722 = vcvt.s32.f32 %v1721
    %vm1723 = vcmp.ge.f32.partialorder %v1654, -0.2
    %vm1724 = vcmp.lt.f32.partialorder %v1654, 0.2
    %vm1725 = vmand %vm1723, %vm1724
    %v1726 = vsel %vm1725, 1, 0
    %v1727 = vcvt.s32.f32 %v1726
    %vm1728 = vcmp.ge.f32.partialorder %v1654, 0.2
    %vm1729 = vcmp.lt.f32.partialorder %v1654, 0.6
    %vm1730 = vmand %vm1728, %vm1729
    %v1731 = vsel %vm1730, 1, 0
    %v1732 = vcvt.s32.f32 %v1731
    %vm1733 = vcmp.ge.f32.partialorder %v1654, 0.6
    %vm1734 = vcmp.lt.f32.partialorder %v1654, 1.0
    %vm1735 = vmand %vm1733, %vm1734
    %v1736 = vsel %vm1735, 1, 0
    %v1737 = vcvt.s32.f32 %v1736
    %vm1738 = vcmp.ge.f32.partialorder %v1654, 1.0
    %vm1739 = vcmp.lt.f32.partialorder %v1654, 1.4
    %vm1740 = vmand %vm1738, %vm1739
    %v1741 = vsel %vm1740, 1, 0
    %v1742 = vcvt.s32.f32 %v1741
    %vm1743 = vcmp.ge.f32.partialorder %v1654, 1.4
    %vm1744 = vcmp.lt.f32.partialorder %v1654, 1.8
    %vm1745 = vmand %vm1743, %vm1744
    %v1746 = vsel %vm1745, 1, 0
    %v1747 = vcvt.s32.f32 %v1746
    %vm1748 = vcmp.ge.f32.partialorder %v1654, 1.8
    %vm1749 = vcmp.lt.f32.partialorder %v1654, 2.2
    %vm1750 = vmand %vm1748, %vm1749
    %v1751 = vsel %vm1750, 1, 0
    %v1752 = vcvt.s32.f32 %v1751
    %v1753 = vsub.f32 %v1654, -2.2
    %v1754 = vmul.f32 %v1753, 2.5
    %v1755 = vmul.f32 %v1754, %v1702
    %v1756 = vsub.f32 -1.4, %v1654
    %v1757 = vmul.f32 %v1756, 2.5
    %v1758 = vmul.f32 %v1757, %v1707
    %v1759 = vadd.f32 %v1755, %v1758
    %v1760 = vsub.f32 %v1654, -1.8
    %v1761 = vmul.f32 %v1760, 2.5
    %v1762 = vmul.f32 %v1761, %v1707
    %v1763 = vsub.f32 -1.0, %v1654
    %v1764 = vmul.f32 %v1763, 2.5
    %v1765 = vmul.f32 %v1764, %v1712
    %v1766 = vadd.f32 %v1762, %v1765
    %v1767 = vsub.f32 %v1654, -1.4
    %v1768 = vmul.f32 %v1767, 2.5
    %v1769 = vmul.f32 %v1768, %v1712
    %v1770 = vsub.f32 -0.6, %v1654
    %v1771 = vmul.f32 %v1770, 2.5
    %v1772 = vmul.f32 %v1771, %v1717
    %v1773 = vadd.f32 %v1769, %v1772
    %v1774 = vsub.f32 %v1654, -1.0
    %v1775 = vmul.f32 %v1774, 2.5
    %v1776 = vmul.f32 %v1775, %v1717
    %v1777 = vsub.f32 -0.2, %v1654
    %v1778 = vmul.f32 %v1777, 2.5
    %v1779 = vmul.f32 %v1778, %v1722
    %v1780 = vadd.f32 %v1776, %v1779
    %v1781 = vsub.f32 %v1654, -0.6
    %v1782 = vmul.f32 %v1781, 2.5
    %v1783 = vmul.f32 %v1782, %v1722
    %v1784 = vsub.f32 0.2, %v1654
    %v1785 = vmul.f32 %v1784, 2.5
    %v1786 = vmul.f32 %v1785, %v1727
    %v1787 = vadd.f32 %v1783, %v1786
    %v1788 = vsub.f32 %v1654, -0.2
    %v1789 = vmul.f32 %v1788, 2.5
    %v1790 = vmul.f32 %v1789, %v1727
    %v1791 = vsub.f32 0.6, %v1654
    %v1792 = vmul.f32 %v1791, 2.5
    %v1793 = vmul.f32 %v1792, %v1732
    %v1794 = vadd.f32 %v1790, %v1793
    %v1795 = vsub.f32 %v1654, 0.2
    %v1796 = vmul.f32 %v1795, 2.5
    %v1797 = vmul.f32 %v1796, %v1732
    %v1798 = vsub.f32 1.0, %v1654
    %v1799 = vmul.f32 %v1798, 2.5
    %v1800 = vmul.f32 %v1799, %v1737
    %v1801 = vadd.f32 %v1797, %v1800
    %v1802 = vsub.f32 %v1654, 0.6
    %v1803 = vmul.f32 %v1802, 2.5
    %v1804 = vmul.f32 %v1803, %v1737
    %v1805 = vsub.f32 1.4, %v1654
    %v1806 = vmul.f32 %v1805, 2.5
    %v1807 = vmul.f32 %v1806, %v1742
    %v1808 = vadd.f32 %v1804, %v1807
    %v1809 = vsub.f32 %v1654, 1.0
    %v1810 = vmul.f32 %v1809, 2.5
    %v1811 = vmul.f32 %v1810, %v1742
    %v1812 = vsub.f32 1.8, %v1654
    %v1813 = vmul.f32 %v1812, 2.5
    %v1814 = vmul.f32 %v1813, %v1747
    %v1815 = vadd.f32 %v1811, %v1814
    %v1816 = vsub.f32 %v1654, 1.4
    %v1817 = vmul.f32 %v1816, 2.5
    %v1818 = vmul.f32 %v1817, %v1747
    %v1819 = vsub.f32 2.2, %v1654
    %v1820 = vmul.f32 %v1819, 2.5
    %v1821 = vmul.f32 %v1820, %v1752
    %v1822 = vadd.f32 %v1818, %v1821
    %v1823 = vmul.f32 %v1753, 1.25
    %v1824 = vmul.f32 %v1823, %v1759
    %v1825 = vmul.f32 %v1763, 1.25
    %v1826 = vmul.f32 %v1825, %v1766
    %v1827 = vadd.f32 %v1824, %v1826
    %v1828 = vmul.f32 %v1760, 1.25
    %v1829 = vmul.f32 %v1828, %v1766
    %v1830 = vmul.f32 %v1770, 1.25
    %v1831 = vmul.f32 %v1830, %v1773
    %v1832 = vadd.f32 %v1829, %v1831
    %v1833 = vmul.f32 %v1767, 1.25
    %v1834 = vmul.f32 %v1833, %v1773
    %v1835 = vmul.f32 %v1777, 1.25
    %v1836 = vmul.f32 %v1835, %v1780
    %v1837 = vadd.f32 %v1834, %v1836
    %v1838 = vmul.f32 %v1774, 1.25
    %v1839 = vmul.f32 %v1838, %v1780
    %v1840 = vmul.f32 %v1784, 1.25
    %v1841 = vmul.f32 %v1840, %v1787
    %v1842 = vadd.f32 %v1839, %v1841
    %v1843 = vmul.f32 %v1781, 1.25
    %v1844 = vmul.f32 %v1843, %v1787
    %v1845 = vmul.f32 %v1791, 1.25
    %v1846 = vmul.f32 %v1845, %v1794
    %v1847 = vadd.f32 %v1844, %v1846
    %v1848 = vmul.f32 %v1788, 1.25
    %v1849 = vmul.f32 %v1848, %v1794
    %v1850 = vmul.f32 %v1798, 1.25
    %v1851 = vmul.f32 %v1850, %v1801
    %v1852 = vadd.f32 %v1849, %v1851
    %v1853 = vmul.f32 %v1795, 1.25
    %v1854 = vmul.f32 %v1853, %v1801
    %v1855 = vmul.f32 %v1805, 1.25
    %v1856 = vmul.f32 %v1855, %v1808
    %v1857 = vadd.f32 %v1854, %v1856
    %v1858 = vmul.f32 %v1802, 1.25
    %v1859 = vmul.f32 %v1858, %v1808
    %v1860 = vmul.f32 %v1812, 1.25
    %v1861 = vmul.f32 %v1860, %v1815
    %v1862 = vadd.f32 %v1859, %v1861
    %v1863 = vmul.f32 %v1809, 1.25
    %v1864 = vmul.f32 %v1863, %v1815
    %v1865 = vmul.f32 %v1819, 1.25
    %v1866 = vmul.f32 %v1865, %v1822
    %v1867 = vadd.f32 %v1864, %v1866
    %v1868 = vmul.f32 %v1753, 0.8333333
    %v1869 = vmul.f32 %v1868, %v1827
    %v1870 = vmul.f32 %v1770, 0.8333333
    %v1871 = vmul.f32 %v1870, %v1832
    %v1872 = vadd.f32 %v1869, %v1871
    %v1873 = vmul.f32 %v1760, 0.8333333
    %v1874 = vmul.f32 %v1873, %v1832
    %v1875 = vmul.f32 %v1777, 0.8333333
    %v1876 = vmul.f32 %v1875, %v1837
    %v1877 = vadd.f32 %v1874, %v1876
    %v1878 = vmul.f32 %v1767, 0.8333333
    %v1879 = vmul.f32 %v1878, %v1837
    %v1880 = vmul.f32 %v1784, 0.8333333
    %v1881 = vmul.f32 %v1880, %v1842
    %v1882 = vadd.f32 %v1879, %v1881
    %v1883 = vmul.f32 %v1774, 0.8333333
    %v1884 = vmul.f32 %v1883, %v1842
    %v1885 = vmul.f32 %v1791, 0.8333333
    %v1886 = vmul.f32 %v1885, %v1847
    %v1887 = vadd.f32 %v1884, %v1886
    %v1888 = vmul.f32 %v1781, 0.8333333
    %v1889 = vmul.f32 %v1888, %v1847
    %v1890 = vmul.f32 %v1798, 0.8333333
    %v1891 = vmul.f32 %v1890, %v1852
    %v1892 = vadd.f32 %v1889, %v1891
    %v1893 = vmul.f32 %v1788, 0.8333333
    %v1894 = vmul.f32 %v1893, %v1852
    %v1895 = vmul.f32 %v1805, 0.8333333
    %v1896 = vmul.f32 %v1895, %v1857
    %v1897 = vadd.f32 %v1894, %v1896
    %v1898 = vmul.f32 %v1795, 0.8333333
    %v1899 = vmul.f32 %v1898, %v1857
    %v1900 = vmul.f32 %v1812, 0.8333333
    %v1901 = vmul.f32 %v1900, %v1862
    %v1902 = vadd.f32 %v1899, %v1901
    %v1903 = vmul.f32 %v1802, 0.8333333
    %v1904 = vmul.f32 %v1903, %v1862
    %v1905 = vmul.f32 %v1819, 0.8333333
    %v1906 = vmul.f32 %v1905, %v1867
    %v1907 = vadd.f32 %v1904, %v1906
    %1909 = vrot.lane.b32.xlu0 %v1872, 64
    %v1910 = vpop.permute.xlu0 %1909
    %1913 = vrot.lane.b32.xlu0 %v1877, 96
    %v1914 = vpop.permute.xlu0 %1913
    %1917 = vrot.lane.b32.xlu0 %v1887, 32
    %v1918 = vpop.permute.xlu0 %1917
    %1921 = vrot.lane.b32.xlu0 %v1892, 64
    %v1922 = vpop.permute.xlu0 %1921
    %1925 = vrot.lane.b32.xlu0 %v1897, 96
    %v1926 = vpop.permute.xlu0 %1925
    %1929 = vrot.lane.b32.xlu0 %v1907, 32
    %v1930 = vpop.permute.xlu0 %1929
    %v1932 = vsel %vm162, %v1910, %v1914
    %vm1933 = vcmask 523264
    %v1934 = vsel %vm1933, %v1932, %v1882
    %vm1935 = vcmask 785408
    %v1936 = vsel %vm1935, %v1934, %v1918
    %v1937 = vsel %vm162, %v1922, %v1926
    %v1938 = vsel %vm1933, %v1937, %v1902
    %v1939 = vsel %vm1935, %v1938, %v1930
    %1940 = vmatprep.subr.mxu0 0.0
    %1941 = vmatpush1.msra.mxu0 %v1659
    %1942 = vmatprep.subr.mxu0 0.0
    %1943 = vmatpush1.msra.mxu0 %v1660
    %1944 = vmatprep.subr.mxu0 0.0
    %1945 = vmatpush1.msra.mxu0 %v1661
    %1946 = vmatprep.subr.mxu0 0.0
    %1947 = vmatpush1.msra.mxu0 %v1662
    %1948 = vmatprep.subr.mxu0 0.0
    %1949 = vmatpush1.msra.mxu0 %v1663
    %1950 = vmatprep.subr.mxu0 0.0
    %1951 = vmatpush1.msra.mxu0 %v1664
    %1952 = vmatprep.subr.mxu0 0.0
    %1953 = vmatpush1.msra.mxu0 %v1665
    %1954 = vmatprep.subr.mxu0 0.0
    %1955 = vmatpush1.msra.mxu0 %v1666
    %1956 = vmatprep.subr.mxu0 0.0
    %1957 = vmatpush1.msra.mxu0 %v1667
    %1958 = vmatprep.subr.mxu0 0.0
    %1959 = vmatpush1.msra.mxu0 %v1668
    %1960 = vmatprep.subr.mxu0 0.0
    %1961 = vmatpush1.msra.mxu0 %v1669
    %1962 = vmatprep.subr.mxu0 0.0
    %1963 = vmatpush1.msra.mxu0 %v1670
    %1964 = vmatprep.subr.mxu0 0.0
    %1965 = vmatpush1.msra.mxu0 %v1671
    %1966 = vmatprep.subr.mxu0 0.0
    %1967 = vmatpush1.msra.mxu0 %v1672
    %1968 = vmatprep.subr.mxu0 0.0
    %1969 = vmatpush1.msra.mxu0 %v1673
    %1970 = vmatprep.subr.mxu0 0.0
    %1971 = vmatpush1.msra.mxu0 %v1674
    %1972 = vmatprep.subr.mxu0 0.0
    %1973 = vmatpush1.msra.mxu0 %v1675
    %1974 = vmatprep.subr.mxu0 0.0
    %1975 = vmatpush1.msra.mxu0 %v1676
    %1976 = vmatprep.subr.mxu0 0.0
    %1977 = vmatpush1.msra.mxu0 %v1677
    %1978 = vmatprep.subr.mxu0 0.0
    %1979 = vmatpush1.msra.mxu0 %v1678
    %1980 = vmatprep.subr.mxu0 0.0
    %1981 = vmatpush1.msra.mxu0 %v1679
    %1982 = vmatprep.subr.mxu0 0.0
    %1983 = vmatpush1.msra.mxu0 %v1680
    %1984 = vmatprep.subr.mxu0 0.0
    %1985 = vmatpush1.msra.mxu0 %v1681
    %1986 = vmatprep.subr.mxu0 0.0
    %1987 = vmatpush1.msra.mxu0 %v1682
    %1988 = vmatprep.subr.mxu0 0.0
    %1989 = vmatpush1.msra.mxu0 %v1683
    %1990 = vmatprep.subr.mxu0 0.0
    %1991 = vmatpush1.msra.mxu0 %v1684
    %1992 = vmatprep.subr.mxu0 0.0
    %1993 = vmatpush1.msra.mxu0 %v1685
    %1994 = vmatprep.subr.mxu0 0.0
    %1995 = vmatpush1.msra.mxu0 %v1686
    %1996 = vmatprep.subr.mxu0 0.0
    %1997 = vmatpush1.msra.mxu0 %v1687
    %1998 = vmatprep.subr.mxu0 0.0
    %1999 = vmatpush1.msra.mxu0 %v1688
    %2000 = vmatprep.subr.mxu0 0.0
    %2001 = vmatpush1.msra.mxu0 %v1689
    %2002 = vmatprep.subr.mxu0 0.0
    %2003 = vmatpush1.msra.mxu0 %v1690
    %2004 = vmatprep.mubr.f32.mxu0 %v1939
    %2005 = vmatmul.mubr.f32.gmra.mrb[0].mxu0 %v1936
    %v2006 = vpop.f32.mrb[0].mxu0
    %v2007 = vadd.f32 0.0, %v2006
    %v2008 = vpop.f32.mrb[0].mxu0
    %2009 = vdwg.mxu0
    %2011 = vrot.lane.b32.xlu0 %v1697, 64
    %v2012 = vpop.permute.xlu0 %2011
    %v2013 = vsel %vm162, %v2012, 0
    %2015 = vmatprep.subr.mxu0 0.0
    %2016 = vmatpush1.msra.mxu0 %v1655
    %2017 = vmatprep.subr.mxu0 0.0
    %2018 = vmatpush1.msra.mxu0 %v1656
    %2019 = vmatprep.subr.mxu0 0.0
    %2020 = vmatpush1.msra.mxu0 %v1657
    %2021 = vmatprep.subr.mxu0 0.0
    %2022 = vmatpush1.msra.mxu0 %v1658
    %2023 = vmatprep.subr.mxu0 0.0
    %2024 = vmatpush1.msra.mxu0 0.0
    %2025 = vmatprep.subr.mxu0 0.0
    %2026 = vmatpush1.msra.mxu0 0.0
    %2027 = vmatprep.subr.mxu0 0.0
    %2028 = vmatpush1.msra.mxu0 0.0
    %2029 = vmatprep.subr.mxu0 0.0
    %2030 = vmatpush1.msra.mxu0 0.0
    %2031 = vmatprep.subr.mxu0 0.0
    %2032 = vmatpush1.msra.mxu0 0.0
    %2033 = vmatprep.subr.mxu0 0.0
    %2034 = vmatpush1.msra.mxu0 0.0
    %2035 = vmatprep.subr.mxu0 0.0
    %2036 = vmatpush1.msra.mxu0 0.0
    %2037 = vmatprep.subr.mxu0 0.0
    %2038 = vmatpush1.msra.mxu0 0.0
    %2039 = vmatprep.subr.mxu0 0.0
    %2040 = vmatpush1.msra.mxu0 0.0
    %2041 = vmatprep.subr.mxu0 0.0
    %2042 = vmatpush1.msra.mxu0 0.0
    %2043 = vmatprep.subr.mxu0 0.0
    %2044 = vmatpush1.msra.mxu0 0.0
    %2045 = vmatprep.subr.mxu0 0.0
    %2046 = vmatpush1.msra.mxu0 0.0
    %2047 = vmatprep.subr.mxu0 0.0
    %2048 = vmatpush1.msra.mxu0 0.0
    %2049 = vmatprep.subr.mxu0 0.0
    %2050 = vmatpush1.msra.mxu0 0.0
    %2051 = vmatprep.subr.mxu0 0.0
    %2052 = vmatpush1.msra.mxu0 0.0
    %2053 = vmatprep.subr.mxu0 0.0
    %2054 = vmatpush1.msra.mxu0 0.0
    %2055 = vmatprep.subr.mxu0 0.0
    %2056 = vmatpush1.msra.mxu0 0.0
    %2057 = vmatprep.subr.mxu0 0.0
    %2058 = vmatpush1.msra.mxu0 0.0
    %2059 = vmatprep.subr.mxu0 0.0
    %2060 = vmatpush1.msra.mxu0 0.0
    %2061 = vmatprep.subr.mxu0 0.0
    %2062 = vmatpush1.msra.mxu0 0.0
    %2063 = vmatprep.subr.mxu0 0.0
    %2064 = vmatpush1.msra.mxu0 0.0
    %2065 = vmatprep.subr.mxu0 0.0
    %2066 = vmatpush1.msra.mxu0 0.0
    %2067 = vmatprep.subr.mxu0 0.0
    %2068 = vmatpush1.msra.mxu0 0.0
    %2069 = vmatprep.subr.mxu0 0.0
    %2070 = vmatpush1.msra.mxu0 0.0
    %2071 = vmatprep.subr.mxu0 0.0
    %2072 = vmatpush1.msra.mxu0 0.0
    %2073 = vmatprep.subr.mxu0 0.0
    %2074 = vmatpush1.msra.mxu0 0.0
    %2075 = vmatprep.subr.mxu0 0.0
    %2076 = vmatpush1.msra.mxu0 0.0
    %2077 = vmatprep.subr.mxu0 0.0
    %2078 = vmatpush1.msra.mxu0 0.0
    %2079 = vmatprep.mubr.f32.mxu0 0.0
    %2080 = vmatmul.mubr.f32.gmra.mrb[0].mxu0 %v2013
    %v2081 = vpop.f32.mrb[0].mxu0
    %v2082 = vadd.f32 %v2007, %v2081
    %v2083 = vpop.f32.mrb[0].mxu0
    %2084 = vdwg.mxu0
    %v2085 = vld [vmem:[%s9] sm:$0xff]
    %v2086 = vld [vmem:[%s9 + $0x8] sm:$0xff]
    %v2087 = vld [vmem:[%s9 + $0x10] sm:$0xff]
    %v2088 = vld [vmem:[%s9 + $0x18] sm:$0xff]
    %v2089 = vld [vmem:[%s9 + $0x20] sm:$0xff]
    %v2090 = vld [vmem:[%s9 + $0x28] sm:$0xff]
    %v2091 = vld [vmem:[%s9 + $0x30] sm:$0xff]
    %v2092 = vld [vmem:[%s9 + $0x38] sm:$0xff]
    %v2093 = vld [vmem:[#allocation2] sm:$0xff]
    %v2094 = vld [vmem:[#allocation2 + $0x8] sm:$0xff]
    %v2095 = vld [vmem:[#allocation2 + $0x10] sm:$0xff]
    %v2096 = vld [vmem:[#allocation2 + $0x18] sm:$0xff]
    %v2097 = vld [vmem:[#allocation2 + $0x20] sm:$0xff]
    %v2098 = vld [vmem:[#allocation2 + $0x28] sm:$0xff]
    %v2099 = vld [vmem:[#allocation2 + $0x30] sm:$0xff]
    %v2100 = vld [vmem:[#allocation2 + $0x38] sm:$0xff]
    %v2101 = vld [vmem:[#allocation2 + $0x40] sm:$0xff]
    %v2102 = vld [vmem:[#allocation2 + $0x48] sm:$0xff]
    %v2103 = vld [vmem:[#allocation2 + $0x50] sm:$0xff]
    %v2104 = vld [vmem:[#allocation2 + $0x58] sm:$0xff]
    %v2105 = vld [vmem:[#allocation2 + $0x60] sm:$0xff]
    %v2106 = vld [vmem:[#allocation2 + $0x68] sm:$0xff]
    %v2107 = vld [vmem:[#allocation2 + $0x70] sm:$0xff]
    %v2108 = vld [vmem:[#allocation2 + $0x78] sm:$0xff]
    %v2109 = vld [vmem:[#allocation2 + $0x80] sm:$0xff]
    %v2110 = vld [vmem:[#allocation2 + $0x88] sm:$0xff]
    %v2111 = vld [vmem:[#allocation2 + $0x90] sm:$0xff]
    %v2112 = vld [vmem:[#allocation2 + $0x98] sm:$0xff]
    %v2113 = vld [vmem:[#allocation2 + $0xa0] sm:$0xff]
    %v2114 = vld [vmem:[#allocation2 + $0xa8] sm:$0xff]
    %v2115 = vld [vmem:[#allocation2 + $0xb0] sm:$0xff]
    %v2116 = vld [vmem:[#allocation2 + $0xb8] sm:$0xff]
    %v2117 = vld [vmem:[#allocation2 + $0xc0] sm:$0xff]
    %v2118 = vld [vmem:[#allocation2 + $0xc8] sm:$0xff]
    %v2119 = vld [vmem:[#allocation2 + $0xd0] sm:$0xff]
    %v2120 = vld [vmem:[#allocation2 + $0xd8] sm:$0xff]
    %v2121 = vld [vmem:[#allocation2 + $0xe0] sm:$0xff]
    %v2122 = vld [vmem:[#allocation2 + $0xe8] sm:$0xff]
    %v2123 = vld [vmem:[#allocation2 + $0xf0] sm:$0xff]
    %v2124 = vld [vmem:[#allocation2 + $0xf8] sm:$0xff]
    %v2125 = vld [vmem:[#allocation2 + $0x100] sm:$0xff]
    %v2126 = vld [vmem:[#allocation2 + $0x108] sm:$0xff]
    %v2127 = vld [vmem:[#allocation2 + $0x110] sm:$0xff]
    %v2128 = vld [vmem:[#allocation2 + $0x118] sm:$0xff]
    %v2129 = vld [vmem:[#allocation2 + $0x120] sm:$0xff]
    %v2130 = vld [vmem:[#allocation2 + $0x128] sm:$0xff]
    %v2131 = vld [vmem:[#allocation2 + $0x130] sm:$0xff]
    %v2132 = vld [vmem:[#allocation2 + $0x138] sm:$0xff]
    %v2133 = vld [vmem:[#allocation2 + $0x140] sm:$0xff]
    %v2134 = vld [vmem:[#allocation2 + $0x148] sm:$0xff]
    %v2135 = vld [vmem:[#allocation2 + $0x150] sm:$0xff]
    %v2136 = vld [vmem:[#allocation2 + $0x158] sm:$0xff]
    %v2137 = vld [vmem:[#allocation2 + $0x160] sm:$0xff]
    %v2138 = vld [vmem:[#allocation2 + $0x168] sm:$0xff]
    %v2139 = vld [vmem:[#allocation2 + $0x170] sm:$0xff]
    %v2140 = vld [vmem:[#allocation2 + $0x178] sm:$0xff]
    %v2141 = vld [vmem:[#allocation2 + $0x180] sm:$0xff]
    %v2142 = vld [vmem:[#allocation2 + $0x188] sm:$0xff]
    %v2143 = vld [vmem:[#allocation2 + $0x190] sm:$0xff]
    %v2144 = vld [vmem:[#allocation2 + $0x198] sm:$0xff]
    %v2145 = vld [vmem:[#allocation2 + $0x1a0] sm:$0xff]
    %v2146 = vld [vmem:[#allocation2 + $0x1a8] sm:$0xff]
    %v2147 = vld [vmem:[#allocation2 + $0x1b0] sm:$0xff]
    %v2148 = vld [vmem:[#allocation2 + $0x1b8] sm:$0xff]
    %v2149 = vld [vmem:[#allocation2 + $0x1c0] sm:$0xff]
    %v2150 = vld [vmem:[#allocation2 + $0x1c8] sm:$0xff]
    %v2151 = vld [vmem:[#allocation2 + $0x1d0] sm:$0xff]
    %v2152 = vld [vmem:[#allocation2 + $0x1d8] sm:$0xff]
    %v2153 = vld [vmem:[#allocation2 + $0x1e0] sm:$0xff]
    %v2154 = vld [vmem:[#allocation2 + $0x1e8] sm:$0xff]
    %v2155 = vld [vmem:[#allocation2 + $0x1f0] sm:$0xff]
    %v2156 = vld [vmem:[#allocation2 + $0x1f8] sm:$0xff]
    %v2157 = vxor.u32 %v2082, 2147483648
    %v2158 = vmul.f32 %v2157, 1.442695
    %v2159 = vpow.pop %v2158
    %v2160 = vadd.f32 %v2159, 1.0
    %v2161 = vrcp.pop %v2160
    %v2162 = vmul.f32 1.0, %v2161
    %v2163 = vmul.f32 %v2082, %v2162
    %vm2164 = vcmp.ge.f32.partialorder %v2082, -2.2
    %vm2165 = vcmp.lt.f32.partialorder %v2082, -1.8
    %vm2166 = vmand %vm2164, %vm2165
    %v2167 = vsel %vm2166, 1, 0
    %v2168 = vcvt.s32.f32 %v2167
    %vm2169 = vcmp.ge.f32.partialorder %v2082, -1.8
    %vm2170 = vcmp.lt.f32.partialorder %v2082, -1.4
    %vm2171 = vmand %vm2169, %vm2170
    %v2172 = vsel %vm2171, 1, 0
    %v2173 = vcvt.s32.f32 %v2172
    %vm2174 = vcmp.ge.f32.partialorder %v2082, -1.4
    %vm2175 = vcmp.lt.f32.partialorder %v2082, -1.0
    %vm2176 = vmand %vm2174, %vm2175
    %v2177 = vsel %vm2176, 1, 0
    %v2178 = vcvt.s32.f32 %v2177
    %vm2179 = vcmp.ge.f32.partialorder %v2082, -1.0
    %vm2180 = vcmp.lt.f32.partialorder %v2082, -0.6
    %vm2181 = vmand %vm2179, %vm2180
    %v2182 = vsel %vm2181, 1, 0
    %v2183 = vcvt.s32.f32 %v2182
    %vm2184 = vcmp.ge.f32.partialorder %v2082, -0.6
    %vm2185 = vcmp.lt.f32.partialorder %v2082, -0.2
    %vm2186 = vmand %vm2184, %vm2185
    %v2187 = vsel %vm2186, 1, 0
    %v2188 = vcvt.s32.f32 %v2187
    %vm2189 = vcmp.ge.f32.partialorder %v2082, -0.2
    %vm2190 = vcmp.lt.f32.partialorder %v2082, 0.2
    %vm2191 = vmand %vm2189, %vm2190
    %v2192 = vsel %vm2191, 1, 0
    %v2193 = vcvt.s32.f32 %v2192
    %vm2194 = vcmp.ge.f32.partialorder %v2082, 0.2
    %vm2195 = vcmp.lt.f32.partialorder %v2082, 0.6
    %vm2196 = vmand %vm2194, %vm2195
    %v2197 = vsel %vm2196, 1, 0
    %v2198 = vcvt.s32.f32 %v2197
    %vm2199 = vcmp.ge.f32.partialorder %v2082, 0.6
    %vm2200 = vcmp.lt.f32.partialorder %v2082, 1.0
    %vm2201 = vmand %vm2199, %vm2200
    %v2202 = vsel %vm2201, 1, 0
    %v2203 = vcvt.s32.f32 %v2202
    %vm2204 = vcmp.ge.f32.partialorder %v2082, 1.0
    %vm2205 = vcmp.lt.f32.partialorder %v2082, 1.4
    %vm2206 = vmand %vm2204, %vm2205
    %v2207 = vsel %vm2206, 1, 0
    %v2208 = vcvt.s32.f32 %v2207
    %vm2209 = vcmp.ge.f32.partialorder %v2082, 1.4
    %vm2210 = vcmp.lt.f32.partialorder %v2082, 1.8
    %vm2211 = vmand %vm2209, %vm2210
    %v2212 = vsel %vm2211, 1, 0
    %v2213 = vcvt.s32.f32 %v2212
    %vm2214 = vcmp.ge.f32.partialorder %v2082, 1.8
    %vm2215 = vcmp.lt.f32.partialorder %v2082, 2.2
    %vm2216 = vmand %vm2214, %vm2215
    %v2217 = vsel %vm2216, 1, 0
    %v2218 = vcvt.s32.f32 %v2217
    %v2219 = vsub.f32 %v2082, -2.2
    %v2220 = vmul.f32 %v2219, 2.5
    %v2221 = vmul.f32 %v2220, %v2168
    %v2222 = vsub.f32 -1.4, %v2082
    %v2223 = vmul.f32 %v2222, 2.5
    %v2224 = vmul.f32 %v2223, %v2173
    %v2225 = vadd.f32 %v2221, %v2224
    %v2226 = vsub.f32 %v2082, -1.8
    %v2227 = vmul.f32 %v2226, 2.5
    %v2228 = vmul.f32 %v2227, %v2173
    %v2229 = vsub.f32 -1.0, %v2082
    %v2230 = vmul.f32 %v2229, 2.5
    %v2231 = vmul.f32 %v2230, %v2178
    %v2232 = vadd.f32 %v2228, %v2231
    %v2233 = vsub.f32 %v2082, -1.4
    %v2234 = vmul.f32 %v2233, 2.5
    %v2235 = vmul.f32 %v2234, %v2178
    %v2236 = vsub.f32 -0.6, %v2082
    %v2237 = vmul.f32 %v2236, 2.5
    %v2238 = vmul.f32 %v2237, %v2183
    %v2239 = vadd.f32 %v2235, %v2238
    %v2240 = vsub.f32 %v2082, -1.0
    %v2241 = vmul.f32 %v2240, 2.5
    %v2242 = vmul.f32 %v2241, %v2183
    %v2243 = vsub.f32 -0.2, %v2082
    %v2244 = vmul.f32 %v2243, 2.5
    %v2245 = vmul.f32 %v2244, %v2188
    %v2246 = vadd.f32 %v2242, %v2245
    %v2247 = vsub.f32 %v2082, -0.6
    %v2248 = vmul.f32 %v2247, 2.5
    %v2249 = vmul.f32 %v2248, %v2188
    %v2250 = vsub.f32 0.2, %v2082
    %v2251 = vmul.f32 %v2250, 2.5
    %v2252 = vmul.f32 %v2251, %v2193
    %v2253 = vadd.f32 %v2249, %v2252
    %v2254 = vsub.f32 %v2082, -0.2
    %v2255 = vmul.f32 %v2254, 2.5
    %v2256 = vmul.f32 %v2255, %v2193
    %v2257 = vsub.f32 0.6, %v2082
    %v2258 = vmul.f32 %v2257, 2.5
    %v2259 = vmul.f32 %v2258, %v2198
    %v2260 = vadd.f32 %v2256, %v2259
    %v2261 = vsub.f32 %v2082, 0.2
    %v2262 = vmul.f32 %v2261, 2.5
    %v2263 = vmul.f32 %v2262, %v2198
    %v2264 = vsub.f32 1.0, %v2082
    %v2265 = vmul.f32 %v2264, 2.5
    %v2266 = vmul.f32 %v2265, %v2203
    %v2267 = vadd.f32 %v2263, %v2266
    %v2268 = vsub.f32 %v2082, 0.6
    %v2269 = vmul.f32 %v2268, 2.5
    %v2270 = vmul.f32 %v2269, %v2203
    %v2271 = vsub.f32 1.4, %v2082
    %v2272 = vmul.f32 %v2271, 2.5
    %v2273 = vmul.f32 %v2272, %v2208
    %v2274 = vadd.f32 %v2270, %v2273
    %v2275 = vsub.f32 %v2082, 1.0
    %v2276 = vmul.f32 %v2275, 2.5
    %v2277 = vmul.f32 %v2276, %v2208
    %v2278 = vsub.f32 1.8, %v2082
    %v2279 = vmul.f32 %v2278, 2.5
    %v2280 = vmul.f32 %v2279, %v2213
    %v2281 = vadd.f32 %v2277, %v2280
    %v2282 = vsub.f32 %v2082, 1.4
    %v2283 = vmul.f32 %v2282, 2.5
    %v2284 = vmul.f32 %v2283, %v2213
    %v2285 = vsub.f32 2.2, %v2082
    %v2286 = vmul.f32 %v2285, 2.5
    %v2287 = vmul.f32 %v2286, %v2218
    %v2288 = vadd.f32 %v2284, %v2287
    %v2289 = vmul.f32 %v2219, 1.25
    %v2290 = vmul.f32 %v2289, %v2225
    %v2291 = vmul.f32 %v2229, 1.25
    %v2292 = vmul.f32 %v2291, %v2232
    %v2293 = vadd.f32 %v2290, %v2292
    %v2294 = vmul.f32 %v2226, 1.25
    %v2295 = vmul.f32 %v2294, %v2232
    %v2296 = vmul.f32 %v2236, 1.25
    %v2297 = vmul.f32 %v2296, %v2239
    %v2298 = vadd.f32 %v2295, %v2297
    %v2299 = vmul.f32 %v2233, 1.25
    %v2300 = vmul.f32 %v2299, %v2239
    %v2301 = vmul.f32 %v2243, 1.25
    %v2302 = vmul.f32 %v2301, %v2246
    %v2303 = vadd.f32 %v2300, %v2302
    %v2304 = vmul.f32 %v2240, 1.25
    %v2305 = vmul.f32 %v2304, %v2246
    %v2306 = vmul.f32 %v2250, 1.25
    %v2307 = vmul.f32 %v2306, %v2253
    %v2308 = vadd.f32 %v2305, %v2307
    %v2309 = vmul.f32 %v2247, 1.25
    %v2310 = vmul.f32 %v2309, %v2253
    %v2311 = vmul.f32 %v2257, 1.25
    %v2312 = vmul.f32 %v2311, %v2260
    %v2313 = vadd.f32 %v2310, %v2312
    %v2314 = vmul.f32 %v2254, 1.25
    %v2315 = vmul.f32 %v2314, %v2260
    %v2316 = vmul.f32 %v2264, 1.25
    %v2317 = vmul.f32 %v2316, %v2267
    %v2318 = vadd.f32 %v2315, %v2317
    %v2319 = vmul.f32 %v2261, 1.25
    %v2320 = vmul.f32 %v2319, %v2267
    %v2321 = vmul.f32 %v2271, 1.25
    %v2322 = vmul.f32 %v2321, %v2274
    %v2323 = vadd.f32 %v2320, %v2322
    %v2324 = vmul.f32 %v2268, 1.25
    %v2325 = vmul.f32 %v2324, %v2274
    %v2326 = vmul.f32 %v2278, 1.25
    %v2327 = vmul.f32 %v2326, %v2281
    %v2328 = vadd.f32 %v2325, %v2327
    %v2329 = vmul.f32 %v2275, 1.25
    %v2330 = vmul.f32 %v2329, %v2281
    %v2331 = vmul.f32 %v2285, 1.25
    %v2332 = vmul.f32 %v2331, %v2288
    %v2333 = vadd.f32 %v2330, %v2332
    %v2334 = vmul.f32 %v2219, 0.8333333
    %v2335 = vmul.f32 %v2334, %v2293
    %v2336 = vmul.f32 %v2236, 0.8333333
    %v2337 = vmul.f32 %v2336, %v2298
    %v2338 = vadd.f32 %v2335, %v2337
    %v2339 = vmul.f32 %v2226, 0.8333333
    %v2340 = vmul.f32 %v2339, %v2298
    %v2341 = vmul.f32 %v2243, 0.8333333
    %v2342 = vmul.f32 %v2341, %v2303
    %v2343 = vadd.f32 %v2340, %v2342
    %v2344 = vmul.f32 %v2233, 0.8333333
    %v2345 = vmul.f32 %v2344, %v2303
    %v2346 = vmul.f32 %v2250, 0.8333333
    %v2347 = vmul.f32 %v2346, %v2308
    %v2348 = vadd.f32 %v2345, %v2347
    %v2349 = vmul.f32 %v2240, 0.8333333
    %v2350 = vmul.f32 %v2349, %v2308
    %v2351 = vmul.f32 %v2257, 0.8333333
    %v2352 = vmul.f32 %v2351, %v2313
    %v2353 = vadd.f32 %v2350, %v2352
    %v2354 = vmul.f32 %v2247, 0.8333333
    %v2355 = vmul.f32 %v2354, %v2313
    %v2356 = vmul.f32 %v2264, 0.8333333
    %v2357 = vmul.f32 %v2356, %v2318
    %v2358 = vadd.f32 %v2355, %v2357
    %v2359 = vmul.f32 %v2254, 0.8333333
    %v2360 = vmul.f32 %v2359, %v2318
    %v2361 = vmul.f32 %v2271, 0.8333333
    %v2362 = vmul.f32 %v2361, %v2323
    %v2363 = vadd.f32 %v2360, %v2362
    %v2364 = vmul.f32 %v2261, 0.8333333
    %v2365 = vmul.f32 %v2364, %v2323
    %v2366 = vmul.f32 %v2278, 0.8333333
    %v2367 = vmul.f32 %v2366, %v2328
    %v2368 = vadd.f32 %v2365, %v2367
    %v2369 = vmul.f32 %v2268, 0.8333333
    %v2370 = vmul.f32 %v2369, %v2328
    %v2371 = vmul.f32 %v2285, 0.8333333
    %v2372 = vmul.f32 %v2371, %v2333
    %v2373 = vadd.f32 %v2370, %v2372
    %2375 = vrot.lane.b32.xlu0 %v2343, 64
    %v2376 = vpop.permute.xlu0 %2375
    %2379 = vrot.lane.b32.xlu0 %v2353, 64
    %v2380 = vpop.permute.xlu0 %2379
    %2383 = vrot.lane.b32.xlu0 %v2363, 64
    %v2384 = vpop.permute.xlu0 %2383
    %2387 = vrot.lane.b32.xlu0 %v2373, 64
    %v2388 = vpop.permute.xlu0 %2387
    %v2390 = vsel %vm1933, %v2338, %v2376
    %v2391 = vsel %vm1933, %v2348, %v2380
    %v2392 = vsel %vm1933, %v2358, %v2384
    %v2393 = vsel %vm1933, %v2368, %v2388
    %2394 = vmatprep.subr.mxu0 0.0
    %2395 = vmatpush1.msra.mxu0 %v2093
    %2396 = vmatprep.subr.mxu0 0.0
    %2397 = vmatpush1.msra.mxu0 %v2094
    %2398 = vmatprep.subr.mxu0 0.0
    %2399 = vmatpush1.msra.mxu0 %v2095
    %2400 = vmatprep.subr.mxu0 0.0
    %2401 = vmatpush1.msra.mxu0 %v2096
    %2402 = vmatprep.subr.mxu0 0.0
    %2403 = vmatpush1.msra.mxu0 %v2097
    %2404 = vmatprep.subr.mxu0 0.0
    %2405 = vmatpush1.msra.mxu0 %v2098
    %2406 = vmatprep.subr.mxu0 0.0
    %2407 = vmatpush1.msra.mxu0 %v2099
    %2408 = vmatprep.subr.mxu0 0.0
    %2409 = vmatpush1.msra.mxu0 %v2100
    %2410 = vmatprep.subr.mxu0 0.0
    %2411 = vmatpush1.msra.mxu0 %v2101
    %2412 = vmatprep.subr.mxu0 0.0
    %2413 = vmatpush1.msra.mxu0 %v2102
    %2414 = vmatprep.subr.mxu0 0.0
    %2415 = vmatpush1.msra.mxu0 %v2103
    %2416 = vmatprep.subr.mxu0 0.0
    %2417 = vmatpush1.msra.mxu0 %v2104
    %2418 = vmatprep.subr.mxu0 0.0
    %2419 = vmatpush1.msra.mxu0 %v2105
    %2420 = vmatprep.subr.mxu0 0.0
    %2421 = vmatpush1.msra.mxu0 %v2106
    %2422 = vmatprep.subr.mxu0 0.0
    %2423 = vmatpush1.msra.mxu0 %v2107
    %2424 = vmatprep.subr.mxu0 0.0
    %2425 = vmatpush1.msra.mxu0 %v2108
    %2426 = vmatprep.subr.mxu0 0.0
    %2427 = vmatpush1.msra.mxu0 %v2109
    %2428 = vmatprep.subr.mxu0 0.0
    %2429 = vmatpush1.msra.mxu0 %v2110
    %2430 = vmatprep.subr.mxu0 0.0
    %2431 = vmatpush1.msra.mxu0 %v2111
    %2432 = vmatprep.subr.mxu0 0.0
    %2433 = vmatpush1.msra.mxu0 %v2112
    %2434 = vmatprep.subr.mxu0 0.0
    %2435 = vmatpush1.msra.mxu0 %v2113
    %2436 = vmatprep.subr.mxu0 0.0
    %2437 = vmatpush1.msra.mxu0 %v2114
    %2438 = vmatprep.subr.mxu0 0.0
    %2439 = vmatpush1.msra.mxu0 %v2115
    %2440 = vmatprep.subr.mxu0 0.0
    %2441 = vmatpush1.msra.mxu0 %v2116
    %2442 = vmatprep.subr.mxu0 0.0
    %2443 = vmatpush1.msra.mxu0 %v2117
    %2444 = vmatprep.subr.mxu0 0.0
    %2445 = vmatpush1.msra.mxu0 %v2118
    %2446 = vmatprep.subr.mxu0 0.0
    %2447 = vmatpush1.msra.mxu0 %v2119
    %2448 = vmatprep.subr.mxu0 0.0
    %2449 = vmatpush1.msra.mxu0 %v2120
    %2450 = vmatprep.subr.mxu0 0.0
    %2451 = vmatpush1.msra.mxu0 %v2121
    %2452 = vmatprep.subr.mxu0 0.0
    %2453 = vmatpush1.msra.mxu0 %v2122
    %2454 = vmatprep.subr.mxu0 0.0
    %2455 = vmatpush1.msra.mxu0 %v2123
    %2456 = vmatprep.subr.mxu0 0.0
    %2457 = vmatpush1.msra.mxu0 %v2124
    %2458 = vmatprep.mubr.f32.mxu0 %v2391
    %2459 = vmatmul.mubr.f32.gmra.mrb[0].mxu0 %v2390
    %v2460 = vpop.f32.mrb[0].mxu0
    %v2461 = vadd.f32 0.0, %v2460
    %v2462 = vpop.f32.mrb[0].mxu0
    %2463 = vdwg.mxu0
    %2464 = vmatprep.subr.mxu0 0.0
    %2465 = vmatpush1.msra.mxu0 %v2125
    %2466 = vmatprep.subr.mxu0 0.0
    %2467 = vmatpush1.msra.mxu0 %v2126
    %2468 = vmatprep.subr.mxu0 0.0
    %2469 = vmatpush1.msra.mxu0 %v2127
    %2470 = vmatprep.subr.mxu0 0.0
    %2471 = vmatpush1.msra.mxu0 %v2128
    %2472 = vmatprep.subr.mxu0 0.0
    %2473 = vmatpush1.msra.mxu0 %v2129
    %2474 = vmatprep.subr.mxu0 0.0
    %2475 = vmatpush1.msra.mxu0 %v2130
    %2476 = vmatprep.subr.mxu0 0.0
    %2477 = vmatpush1.msra.mxu0 %v2131
    %2478 = vmatprep.subr.mxu0 0.0
    %2479 = vmatpush1.msra.mxu0 %v2132
    %2480 = vmatprep.subr.mxu0 0.0
    %2481 = vmatpush1.msra.mxu0 %v2133
    %2482 = vmatprep.subr.mxu0 0.0
    %2483 = vmatpush1.msra.mxu0 %v2134
    %2484 = vmatprep.subr.mxu0 0.0
    %2485 = vmatpush1.msra.mxu0 %v2135
    %2486 = vmatprep.subr.mxu0 0.0
    %2487 = vmatpush1.msra.mxu0 %v2136
    %2488 = vmatprep.subr.mxu0 0.0
    %2489 = vmatpush1.msra.mxu0 %v2137
    %2490 = vmatprep.subr.mxu0 0.0
    %2491 = vmatpush1.msra.mxu0 %v2138
    %2492 = vmatprep.subr.mxu0 0.0
    %2493 = vmatpush1.msra.mxu0 %v2139
    %2494 = vmatprep.subr.mxu0 0.0
    %2495 = vmatpush1.msra.mxu0 %v2140
    %2496 = vmatprep.subr.mxu0 0.0
    %2497 = vmatpush1.msra.mxu0 %v2141
    %2498 = vmatprep.subr.mxu0 0.0
    %2499 = vmatpush1.msra.mxu0 %v2142
    %2500 = vmatprep.subr.mxu0 0.0
    %2501 = vmatpush1.msra.mxu0 %v2143
    %2502 = vmatprep.subr.mxu0 0.0
    %2503 = vmatpush1.msra.mxu0 %v2144
    %2504 = vmatprep.subr.mxu0 0.0
    %2505 = vmatpush1.msra.mxu0 %v2145
    %2506 = vmatprep.subr.mxu0 0.0
    %2507 = vmatpush1.msra.mxu0 %v2146
    %2508 = vmatprep.subr.mxu0 0.0
    %2509 = vmatpush1.msra.mxu0 %v2147
    %2510 = vmatprep.subr.mxu0 0.0
    %2511 = vmatpush1.msra.mxu0 %v2148
    %2512 = vmatprep.subr.mxu0 0.0
    %2513 = vmatpush1.msra.mxu0 %v2149
    %2514 = vmatprep.subr.mxu0 0.0
    %2515 = vmatpush1.msra.mxu0 %v2150
    %2516 = vmatprep.subr.mxu0 0.0
    %2517 = vmatpush1.msra.mxu0 %v2151
    %2518 = vmatprep.subr.mxu0 0.0
    %2519 = vmatpush1.msra.mxu0 %v2152
    %2520 = vmatprep.subr.mxu0 0.0
    %2521 = vmatpush1.msra.mxu0 %v2153
    %2522 = vmatprep.subr.mxu0 0.0
    %2523 = vmatpush1.msra.mxu0 %v2154
    %2524 = vmatprep.subr.mxu0 0.0
    %2525 = vmatpush1.msra.mxu0 %v2155
    %2526 = vmatprep.subr.mxu0 0.0
    %2527 = vmatpush1.msra.mxu0 %v2156
    %2528 = vmatprep.mubr.f32.mxu0 %v2393
    %2529 = vmatmul.mubr.f32.gmra.mrb[0].mxu0 %v2392
    %v2530 = vpop.f32.mrb[0].mxu0
    %v2531 = vadd.f32 %v2461, %v2530
    %v2532 = vpop.f32.mrb[0].mxu0
    %2533 = vdwg.mxu0
    %v2535 = vsel %vm1933, %v2163, 0
    %2537 = vmatprep.subr.mxu0 0.0
    %2538 = vmatpush1.msra.mxu0 %v2085
    %2539 = vmatprep.subr.mxu0 0.0
    %2540 = vmatpush1.msra.mxu0 %v2086
    %2541 = vmatprep.subr.mxu0 0.0
    %2542 = vmatpush1.msra.mxu0 %v2087
    %2543 = vmatprep.subr.mxu0 0.0
    %2544 = vmatpush1.msra.mxu0 %v2088
    %2545 = vmatprep.subr.mxu0 0.0
    %2546 = vmatpush1.msra.mxu0 %v2089
    %2547 = vmatprep.subr.mxu0 0.0
    %2548 = vmatpush1.msra.mxu0 %v2090
    %2549 = vmatprep.subr.mxu0 0.0
    %2550 = vmatpush1.msra.mxu0 %v2091
    %2551 = vmatprep.subr.mxu0 0.0
    %2552 = vmatpush1.msra.mxu0 %v2092
    %2553 = vmatprep.subr.mxu0 0.0
    %2554 = vmatpush1.msra.mxu0 0.0
    %2555 = vmatprep.subr.mxu0 0.0
    %2556 = vmatpush1.msra.mxu0 0.0
    %2557 = vmatprep.subr.mxu0 0.0
    %2558 = vmatpush1.msra.mxu0 0.0
    %2559 = vmatprep.subr.mxu0 0.0
    %2560 = vmatpush1.msra.mxu0 0.0
    %2561 = vmatprep.subr.mxu0 0.0
    %2562 = vmatpush1.msra.mxu0 0.0
    %2563 = vmatprep.subr.mxu0 0.0
    %2564 = vmatpush1.msra.mxu0 0.0
    %2565 = vmatprep.subr.mxu0 0.0
    %2566 = vmatpush1.msra.mxu0 0.0
    %2567 = vmatprep.subr.mxu0 0.0
    %2568 = vmatpush1.msra.mxu0 0.0
    %2569 = vmatprep.subr.mxu0 0.0
    %2570 = vmatpush1.msra.mxu0 0.0
    %2571 = vmatprep.subr.mxu0 0.0
    %2572 = vmatpush1.msra.mxu0 0.0
    %2573 = vmatprep.subr.mxu0 0.0
    %2574 = vmatpush1.msra.mxu0 0.0
    %2575 = vmatprep.subr.mxu0 0.0
    %2576 = vmatpush1.msra.mxu0 0.0
    %2577 = vmatprep.subr.mxu0 0.0
    %2578 = vmatpush1.msra.mxu0 0.0
    %2579 = vmatprep.subr.mxu0 0.0
    %2580 = vmatpush1.msra.mxu0 0.0
    %2581 = vmatprep.subr.mxu0 0.0
    %2582 = vmatpush1.msra.mxu0 0.0
    %2583 = vmatprep.subr.mxu0 0.0
    %2584 = vmatpush1.msra.mxu0 0.0
    %2585 = vmatprep.subr.mxu0 0.0
    %2586 = vmatpush1.msra.mxu0 0.0
    %2587 = vmatprep.subr.mxu0 0.0
    %2588 = vmatpush1.msra.mxu0 0.0
    %2589 = vmatprep.subr.mxu0 0.0
    %2590 = vmatpush1.msra.mxu0 0.0
    %2591 = vmatprep.subr.mxu0 0.0
    %2592 = vmatpush1.msra.mxu0 0.0
    %2593 = vmatprep.subr.mxu0 0.0
    %2594 = vmatpush1.msra.mxu0 0.0
    %2595 = vmatprep.subr.mxu0 0.0
    %2596 = vmatpush1.msra.mxu0 0.0
    %2597 = vmatprep.subr.mxu0 0.0
    %2598 = vmatpush1.msra.mxu0 0.0
    %2599 = vmatprep.subr.mxu0 0.0
    %2600 = vmatpush1.msra.mxu0 0.0
    %2601 = vmatprep.mubr.f32.mxu0 0.0
    %2602 = vmatmul.mubr.f32.gmra.mrb[0].mxu0 %v2535
    %v2603 = vpop.f32.mrb[0].mxu0
    %v2604 = vadd.f32 %v2531, %v2603
    %v2605 = vpop.f32.mrb[0].mxu0
    %2606 = vdwg.mxu0
    %2607 = vst [vmem:[%s11] sm:$0xff] %v2604
    // Predicated region
    $region50: #{lstm_kan_forward.1} parent=1 // pred_check
      _
    $region51: #{lstm_kan_forward.1} parent=1 // pred_check_branch
      %2609 = sbr.rel (0) target = $region53
    $region52: #{lstm_kan_forward.1} parent=1 // pred_region
      _
    $region53: #{lstm_kan_forward.1} parent=1 // pred_fallthru
      _
    // Predicated region
    $region54: #{lstm_kan_forward.1} parent=1 // pred_check
      _
    $region55: #{lstm_kan_forward.1} parent=1 // pred_check_branch
      %2611 = sbr.rel (0) target = $region57
    $region56: #{lstm_kan_forward.1} parent=1 // pred_region
      _
    $region57: #{lstm_kan_forward.1} parent=1 // pred_fallthru
      _
    %2612 = vsyncpa [#allocation3], 1

</llo_original>
